<compile_context>
chip_gen: v6e
topology: v6e:2x2x1
jax: 0.10.0
libtpu: 0.0.40
codegen_flags: <defaults>
</compile_context>

<pallas_src>
import functools
import math

import jax
import jax.numpy as jnp
from jax.experimental import pallas as pl
from jax.experimental.pallas import tpu as pltpu

EPS = 1e-6


# ----------------------------- layernorm helpers -----------------------------
def _layernorm_kernel(x, alpha, bias):
    """torch-style Norm inside the kernel (unbiased std, eps added to std)."""
    d = x.shape[-1]
    mean = jnp.mean(x, axis=-1, keepdims=True)
    diff = x - mean
    var = jnp.sum(diff * diff, axis=-1, keepdims=True) * (1.0 / (d - 1))
    return alpha * diff / (jnp.sqrt(var) + EPS) + bias


def _layernorm_ref(x, alpha, bias):
    d = x.shape[-1]
    mean = jnp.mean(x, axis=-1, keepdims=True)
    var = jnp.sum((x - mean) ** 2, axis=-1, keepdims=True) / (d - 1)
    return alpha * (x - mean) / (jnp.sqrt(var) + EPS) + bias


# --------------------------------- kernel ------------------------------------
def _encoder_layer_kernel(x_ref, mask_ref,
                          n1a_ref, n1b_ref,
                          wq_ref, bq_ref, wk_ref, bk_ref, wv_ref, bv_ref,
                          wo_ref, bo_ref,
                          n2a_ref, n2b_ref,
                          w1_ref, b1_ref, w2_ref, b2_ref,
                          out_ref, *, heads):
    xb = x_ref[...]                       # (Bt, S, D) f32
    Bt, S, D = xb.shape
    d_k = D // heads
    bf16 = jnp.bfloat16

    # Merge batch rows for all row-wise work -> taller, denser MXU matmuls.
    x = xb.reshape(Bt * S, D)             # leading-dim merge only (cheap)
    # Additive mask bias, computed once (assumes 0/1 mask values).
    mask_bias = (mask_ref[...] - 1.0) * 1e9        # (Bt, 1, S)

    # ---------------- attention block (pre-norm + residual) ----------------
    x2 = _layernorm_kernel(x, n1a_ref[...], n1b_ref[...])
    x2b = x2.astype(bf16)                 # cast at the MXU boundary only

    # wq/bq already carry the 1/sqrt(d_k) factor (folded on the host).
    q = jnp.dot(x2b, wq_ref[...], preferred_element_type=jnp.float32) + bq_ref[...]
    k = jnp.dot(x2b, wk_ref[...], preferred_element_type=jnp.float32) + bk_ref[...]
    v = jnp.dot(x2b, wv_ref[...], preferred_element_type=jnp.float32) + bv_ref[...]

    # Cast ONCE to bf16, then view per-batch; head split below is static lane slices
    # of these bf16 tensors (half the relayout bytes vs slicing f32).
    qb = q.astype(bf16).reshape(Bt, S, D)
    kb = k.astype(bf16).reshape(Bt, S, D)
    vb = v.astype(bf16).reshape(Bt, S, D)

    ctx_parts = []
    for h in range(heads):                         # static loop over heads
        lo = h * d_k
        qh = qb[:, :, lo:lo + d_k]                 # (Bt, S, dk) bf16
        kh = kb[:, :, lo:lo + d_k]
        vh = vb[:, :, lo:lo + d_k]
        s = jnp.einsum('bqd,bkd->bqk', qh, kh,
                       preferred_element_type=jnp.float32)     # (Bt, S, S) f32
        s = s + mask_bias
        s = s - jnp.max(s, axis=-1, keepdims=True)
        p = jnp.exp(s)
        p = p * pl.reciprocal(jnp.sum(p, axis=-1, keepdims=True), approx=True)
        ctx_parts.append(jnp.einsum('bqk,bkd->bqd', p.astype(bf16), vh,
                                    preferred_element_type=jnp.float32).astype(bf16))

    # Undo the head split (lane concat) and do ONE fused (rows, D) @ (D, D) out-proj.
    ctx = jnp.concatenate(ctx_parts, axis=-1)      # (Bt, S, D) bf16
    attn = jnp.dot(ctx.reshape(Bt * S, D), wo_ref[...],
                   preferred_element_type=jnp.float32) + bo_ref[...]
    x = x + attn                                   # dropout == identity (eval)

    # ---------------- feed-forward block (pre-norm + residual) --------------
    x2 = _layernorm_kernel(x, n2a_ref[...], n2b_ref[...])
    h1 = jnp.maximum(
        jnp.dot(x2.astype(bf16), w1_ref[...],
                preferred_element_type=jnp.float32) + b1_ref[...], 0.0)
    ff = jnp.dot(h1.astype(bf16), w2_ref[...],
                 preferred_element_type=jnp.float32) + b2_ref[...]
    out_ref[...] = (x + ff).reshape(Bt, S, D)


_PARAM_ORDER = ("n1a", "n1b", "wq", "bq", "wk", "bk", "wv", "bv",
                "wo", "bo", "n2a", "n2b", "w1", "b1", "w2", "b2")


# --------------------------------- wrapper ------------------------------------
def pallas_encoder_layer(x, mask, params, heads, bt=None):
    B, S, D = x.shape
    d_k = D // heads
    bf16 = jnp.bfloat16

    # Fold the whole batch into one grid step at small shapes (per-step overhead
    # ~0.35us would otherwise dominate); pass bt=B//2 on v7x-sized batches to let
    # the two TensorCores split the work.
    if bt is None:
        bt = B
    assert B % bt == 0

    scale = 1.0 / math.sqrt(d_k)
    d_ff = params["w1"].shape[1]
    d_ff_p = -(-d_ff // 128) * 128                  # pad FFN width to lane-dense >=128
    w1p = jnp.zeros((D, d_ff_p), jnp.float32).at[:, :d_ff].set(params["w1"])
    b1p = jnp.zeros((1, d_ff_p), jnp.float32).at[:, :d_ff].set(params["b1"])
    w2p = jnp.zeros((d_ff_p, D), jnp.float32).at[:d_ff, :].set(params["w2"])

    prepared = {
        "n1a": params["n1a"], "n1b": params["n1b"],
        # 1/sqrt(d_k) folded into the q projection (constant under jit).
        "wq": (params["wq"] * scale).astype(bf16), "bq": params["bq"] * scale,
        "wk": params["wk"].astype(bf16), "bk": params["bk"],
        "wv": params["wv"].astype(bf16), "bv": params["bv"],
        "wo": params["wo"].astype(bf16), "bo": params["bo"],   # full (D, D), not split
        "n2a": params["n2a"], "n2b": params["n2b"],
        "w1": w1p.astype(bf16), "b1": b1p,
        "w2": w2p.astype(bf16), "b2": params["b2"],
    }
    plist = [prepared[k] for k in _PARAM_ORDER]

    flops = B * (8 * S * D * D + 4 * S * S * D + 4 * S * D * d_ff_p)
    bytes_accessed = (2 * B * S * D * 4 + B * S * 4
                      + sum(int(p.size) * p.dtype.itemsize for p in plist))
    cost = pl.CostEstimate(flops=int(flops),
                           transcendentals=int(B * heads * S * S),
                           bytes_accessed=int(bytes_accessed))

    # vmem limit per chip: ~96 MiB on v5e/v6e (128 MiB physical), ~48 MiB on v7x (64 MiB).
    try:
        vmem_cap = int(pltpu.get_tpu_info().vmem_capacity_bytes)
    except Exception:
        vmem_cap = 64 * 1024 * 1024
    vmem_limit = min(96 * 1024 * 1024, (vmem_cap * 3) // 4)

    kernel = functools.partial(_encoder_layer_kernel, heads=heads)

    def call(single_buffer_weights):
        # Weights/biases: full blocks, constant index_map (loaded once, VMEM-resident).
        # With constant blocks double-buffering is pure waste -> Buffered(1) halves
        # their VMEM footprint (matters on v7x's 64 MiB at production D / d_ff).
        def pspec(p):
            nd = p.ndim
            imap = lambda b, nd=nd: (0,) * nd
            if single_buffer_weights:
                return pl.BlockSpec(p.shape, imap, pipeline_mode=pl.Buffered(1))
            return pl.BlockSpec(p.shape, imap)

        param_specs = [pspec(p) for p in plist]
        return pl.pallas_call(
            kernel,
            out_shape=jax.ShapeDtypeStruct((B, S, D), x.dtype),
            grid=(B // bt,),
            in_specs=[pl.BlockSpec((bt, S, D), lambda b: (b, 0, 0)),
                      pl.BlockSpec((bt, 1, S), lambda b: (b, 0, 0))] + param_specs,
            out_specs=pl.BlockSpec((bt, S, D), lambda b: (b, 0, 0)),
            compiler_params=pltpu.CompilerParams(
                dimension_semantics=("parallel",),
                vmem_limit_bytes=int(vmem_limit)),
            cost_estimate=cost,
        )(x, mask, *plist)

    try:
        return call(True)
    except Exception:
        # pipeline_mode=pl.Buffered(1) not supported on this jax/Mosaic version;
        # default double-buffered weight specs are functionally identical.
        return call(False)


# --------------------------- params & pure-JAX reference ----------------------
def init_params(key, d_model, d_ff=4):
    # d_ff=4 matches the PyTorch FeedForward default (absolute, not 4*d_model).
    def w(k, shape, scale=0.1):
        return (scale * jax.random.normal(k, shape)).astype(jnp.float32)

    key, *ks = jax.random.split(key, 13)
    return {
        "n1a": jnp.ones((1, d_model), jnp.float32),
        "n1b": jnp.zeros((1, d_model), jnp.float32),
        "wq": w(ks[0], (d_model, d_model)), "bq": w(ks[1], (1, d_model), 0.02),
        "wk": w(ks[2], (d_model, d_model)), "bk": w(ks[3], (1, d_model), 0.02),
        "wv": w(ks[4], (d_model, d_model)), "bv": w(ks[5], (1, d_model), 0.02),
        "wo": w(ks[6], (d_model, d_model)), "bo": w(ks[7], (1, d_model), 0.02),
        "n2a": jnp.ones((1, d_model), jnp.float32),
        "n2b": jnp.zeros((1, d_model), jnp.float32),
        "w1": w(ks[8], (d_model, d_ff)), "b1": w(ks[9], (1, d_ff), 0.02),
        "w2": w(ks[10], (d_ff, d_model)), "b2": w(ks[11], (1, d_model), 0.02),
    }


def _ref_forward(x, mask, p, heads):
    B, S, D = x.shape
    dk = D // heads
    x2 = _layernorm_ref(x, p["n1a"], p["n1b"])
    q = (x2 @ p["wq"] + p["bq"]).reshape(B, S, heads, dk).transpose(0, 2, 1, 3)
    k = (x2 @ p["wk"] + p["bk"]).reshape(B, S, heads, dk).transpose(0, 2, 1, 3)
    v = (x2 @ p["wv"] + p["bv"]).reshape(B, S, heads, dk).transpose(0, 2, 1, 3)
    scores = jnp.einsum("bhqd,bhkd->bhqk", q, k) / math.sqrt(dk)
    scores = jnp.where(mask[:, None, :, :] == 0.0, -1e9, scores)
    scores = jax.nn.softmax(scores, axis=-1)
    o = jnp.einsum("bhqk,bhkd->bhqd", scores, v).transpose(0, 2, 1, 3).reshape(B, S, D)
    x = x + (o @ p["wo"] + p["bo"])
    x2 = _layernorm_ref(x, p["n2a"], p["n2b"])
    ff = jnp.maximum(x2 @ p["w1"] + p["b1"], 0.0) @ p["w2"] + p["b2"]
    return x + ff


# ------------------------------------ main ------------------------------------
if __name__ == "__main__":
    d_model, heads, d_ff = 32, 4, 4
    B, S = 2, 8

    key = jax.random.PRNGKey(0)
    kx, kp = jax.random.split(key)
    x = jax.random.normal(kx, (B, S, d_model), dtype=jnp.float32)
    mask = jnp.ones((B, 1, S), jnp.float32)
    mask = mask.at[1, 0, 6:].set(0.0)          # mask out the last two keys of batch 1

    params = init_params(kp, d_model, d_ff)

    out = pallas_encoder_layer(x, mask, params, heads)
    out = jax.block_until_ready(out)

    with jax.default_matmul_precision("highest"):
        ref = _ref_forward(x, mask, params, heads)
    ref = jax.block_until_ready(ref)

    assert out.shape == (B, S, d_model)
    err = float(jnp.max(jnp.abs(out - ref)))
    # bf16 MXU inputs + approx softmax reciprocal vs a full-f32 reference.
    if err > 5e-2:
        raise AssertionError(f"mismatch vs reference: max abs err {err}")
    print("KERNEL_OK")
</pallas_src>

<mosaic_0001>
module attributes {stable_mosaic.version = 11 : i64} {
  func.func @_encoder_layer_kernel(%arg0: i32, %arg1: memref<2x8x32xf32, #tpu.memory_space<vmem>>, %arg2: memref<2x1x8xf32, #tpu.memory_space<vmem>>, %arg3: memref<1x32xf32, #tpu.memory_space<vmem>>, %arg4: memref<1x32xf32, #tpu.memory_space<vmem>>, %arg5: memref<32x32xbf16, #tpu.memory_space<vmem>>, %arg6: memref<1x32xf32, #tpu.memory_space<vmem>>, %arg7: memref<32x32xbf16, #tpu.memory_space<vmem>>, %arg8: memref<1x32xf32, #tpu.memory_space<vmem>>, %arg9: memref<32x32xbf16, #tpu.memory_space<vmem>>, %arg10: memref<1x32xf32, #tpu.memory_space<vmem>>, %arg11: memref<32x32xbf16, #tpu.memory_space<vmem>>, %arg12: memref<1x32xf32, #tpu.memory_space<vmem>>, %arg13: memref<1x32xf32, #tpu.memory_space<vmem>>, %arg14: memref<1x32xf32, #tpu.memory_space<vmem>>, %arg15: memref<32x128xbf16, #tpu.memory_space<vmem>>, %arg16: memref<1x128xf32, #tpu.memory_space<vmem>>, %arg17: memref<128x32xbf16, #tpu.memory_space<vmem>>, %arg18: memref<1x32xf32, #tpu.memory_space<vmem>>, %arg19: memref<2x8x32xf32, #tpu.memory_space<vmem>>) attributes {dimension_semantics = [#tpu.dimension_semantics<parallel>], iteration_bounds = array<i64: 1>, scalar_prefetch = 0 : i64, scratch_operands = 0 : i64, tpu.core_type = #tpu.core_type<tc>, window_params = [{transform_indices = @transform_0, window_bounds = array<i64: 2, 8, 32>}, {transform_indices = @transform_1, window_bounds = array<i64: 2, 1, 8>}, {pipeline_mode = #tpu.pipeline_mode<synchronous>, transform_indices = @transform_2, window_bounds = array<i64: 1, 32>}, {pipeline_mode = #tpu.pipeline_mode<synchronous>, transform_indices = @transform_3, window_bounds = array<i64: 1, 32>}, {pipeline_mode = #tpu.pipeline_mode<synchronous>, transform_indices = @transform_4, window_bounds = array<i64: 32, 32>}, {pipeline_mode = #tpu.pipeline_mode<synchronous>, transform_indices = @transform_5, window_bounds = array<i64: 1, 32>}, {pipeline_mode = #tpu.pipeline_mode<synchronous>, transform_indices = @transform_6, window_bounds = array<i64: 32, 32>}, {pipeline_mode = #tpu.pipeline_mode<synchronous>, transform_indices = @transform_7, window_bounds = array<i64: 1, 32>}, {pipeline_mode = #tpu.pipeline_mode<synchronous>, transform_indices = @transform_8, window_bounds = array<i64: 32, 32>}, {pipeline_mode = #tpu.pipeline_mode<synchronous>, transform_indices = @transform_9, window_bounds = array<i64: 1, 32>}, {pipeline_mode = #tpu.pipeline_mode<synchronous>, transform_indices = @transform_10, window_bounds = array<i64: 32, 32>}, {pipeline_mode = #tpu.pipeline_mode<synchronous>, transform_indices = @transform_11, window_bounds = array<i64: 1, 32>}, {pipeline_mode = #tpu.pipeline_mode<synchronous>, transform_indices = @transform_12, window_bounds = array<i64: 1, 32>}, {pipeline_mode = #tpu.pipeline_mode<synchronous>, transform_indices = @transform_13, window_bounds = array<i64: 1, 32>}, {pipeline_mode = #tpu.pipeline_mode<synchronous>, transform_indices = @transform_14, window_bounds = array<i64: 32, 128>}, {pipeline_mode = #tpu.pipeline_mode<synchronous>, transform_indices = @transform_15, window_bounds = array<i64: 1, 128>}, {pipeline_mode = #tpu.pipeline_mode<synchronous>, transform_indices = @transform_16, window_bounds = array<i64: 128, 32>}, {pipeline_mode = #tpu.pipeline_mode<synchronous>, transform_indices = @transform_17, window_bounds = array<i64: 1, 32>}, {transform_indices = @transform_18, window_bounds = array<i64: 2, 8, 32>}]} {
    %c0 = arith.constant 0 : index
    %c0_0 = arith.constant 0 : index
    %c0_1 = arith.constant 0 : index
    %0 = vector.load %arg1[%c0, %c0_0, %c0_1] : memref<2x8x32xf32, #tpu.memory_space<vmem>>, vector<2x8x32xf32>
    %1 = vector.shape_cast %0 : vector<2x8x32xf32> to vector<16x32xf32>
    %c0_2 = arith.constant 0 : index
    %c0_3 = arith.constant 0 : index
    %c0_4 = arith.constant 0 : index
    %2 = vector.load %arg2[%c0_2, %c0_3, %c0_4] : memref<2x1x8xf32, #tpu.memory_space<vmem>>, vector<2x1x8xf32>
    %cst = arith.constant 1.000000e+00 : f32
    %3 = vector.broadcast %cst : f32 to vector<2x1x8xf32>
    %4 = arith.subf %2, %3 : vector<2x1x8xf32>
    %cst_5 = arith.constant 1.000000e+09 : f32
    %5 = vector.broadcast %cst_5 : f32 to vector<2x1x8xf32>
    %6 = arith.mulf %4, %5 : vector<2x1x8xf32>
    %c0_6 = arith.constant 0 : index
    %c0_7 = arith.constant 0 : index
    %7 = vector.load %arg3[%c0_6, %c0_7] : memref<1x32xf32, #tpu.memory_space<vmem>>, vector<1x32xf32>
    %c0_8 = arith.constant 0 : index
    %c0_9 = arith.constant 0 : index
    %8 = vector.load %arg4[%c0_8, %c0_9] : memref<1x32xf32, #tpu.memory_space<vmem>>, vector<1x32xf32>
    %cst_10 = arith.constant dense<0.000000e+00> : vector<16xf32>
    %9 = vector.multi_reduction <add>, %1, %cst_10 [1] : vector<16x32xf32> to vector<16xf32>
    %10 = vector.shape_cast %9 : vector<16xf32> to vector<16x1xf32>
    %cst_11 = arith.constant 3.200000e+01 : f32
    %11 = vector.broadcast %cst_11 : f32 to vector<16x1xf32>
    %12 = arith.divf %10, %11 : vector<16x1xf32>
    %13 = vector.broadcast %12 : vector<16x1xf32> to vector<16x32xf32>
    %14 = arith.subf %1, %13 : vector<16x32xf32>
    %15 = arith.mulf %14, %14 : vector<16x32xf32>
    %cst_12 = arith.constant dense<0.000000e+00> : vector<16xf32>
    %16 = vector.multi_reduction <add>, %15, %cst_12 [1] : vector<16x32xf32> to vector<16xf32>
    %17 = vector.shape_cast %16 : vector<16xf32> to vector<16x1xf32>
    %cst_13 = arith.constant 0.0322580636 : f32
    %18 = vector.broadcast %cst_13 : f32 to vector<16x1xf32>
    %19 = arith.mulf %17, %18 : vector<16x1xf32>
    %20 = vector.broadcast %7 : vector<1x32xf32> to vector<16x32xf32>
    %21 = arith.mulf %20, %14 : vector<16x32xf32>
    %22 = math.sqrt %19 : vector<16x1xf32>
    %cst_14 = arith.constant 9.99999997E-7 : f32
    %23 = vector.broadcast %cst_14 : f32 to vector<16x1xf32>
    %24 = arith.addf %22, %23 : vector<16x1xf32>
    %25 = vector.broadcast %24 : vector<16x1xf32> to vector<16x32xf32>
    %26 = arith.divf %21, %25 : vector<16x32xf32>
    %27 = vector.broadcast %8 : vector<1x32xf32> to vector<16x32xf32>
    %28 = arith.addf %26, %27 : vector<16x32xf32>
    %29 = arith.truncf %28 : vector<16x32xf32> to vector<16x32xbf16>
    %c0_15 = arith.constant 0 : index
    %c0_16 = arith.constant 0 : index
    %30 = vector.load %arg5[%c0_15, %c0_16] : memref<32x32xbf16, #tpu.memory_space<vmem>>, vector<32x32xbf16>
    %cst_17 = arith.constant dense<0.000000e+00> : vector<16x32xf32>
    %31 = tpu.matmul %29, %30, %cst_17 {dimension_numbers = #tpu.dot_dimension_numbers<[1], [0], [0], [1], [0, 0, 1, 1], [], []>} : vector<16x32xbf16>, vector<32x32xbf16>, vector<16x32xf32> -> vector<16x32xf32>
    %c0_18 = arith.constant 0 : index
    %c0_19 = arith.constant 0 : index
    %32 = vector.load %arg6[%c0_18, %c0_19] : memref<1x32xf32, #tpu.memory_space<vmem>>, vector<1x32xf32>
    %33 = vector.broadcast %32 : vector<1x32xf32> to vector<16x32xf32>
    %34 = arith.addf %31, %33 : vector<16x32xf32>
    %c0_20 = arith.constant 0 : index
    %c0_21 = arith.constant 0 : index
    %35 = vector.load %arg7[%c0_20, %c0_21] : memref<32x32xbf16, #tpu.memory_space<vmem>>, vector<32x32xbf16>
    %cst_22 = arith.constant dense<0.000000e+00> : vector<16x32xf32>
    %36 = tpu.matmul %29, %35, %cst_22 {dimension_numbers = #tpu.dot_dimension_numbers<[1], [0], [0], [1], [0, 0, 1, 1], [], []>} : vector<16x32xbf16>, vector<32x32xbf16>, vector<16x32xf32> -> vector<16x32xf32>
    %c0_23 = arith.constant 0 : index
    %c0_24 = arith.constant 0 : index
    %37 = vector.load %arg8[%c0_23, %c0_24] : memref<1x32xf32, #tpu.memory_space<vmem>>, vector<1x32xf32>
    %38 = vector.broadcast %37 : vector<1x32xf32> to vector<16x32xf32>
    %39 = arith.addf %36, %38 : vector<16x32xf32>
    %c0_25 = arith.constant 0 : index
    %c0_26 = arith.constant 0 : index
    %40 = vector.load %arg9[%c0_25, %c0_26] : memref<32x32xbf16, #tpu.memory_space<vmem>>, vector<32x32xbf16>
    %cst_27 = arith.constant dense<0.000000e+00> : vector<16x32xf32>
    %41 = tpu.matmul %29, %40, %cst_27 {dimension_numbers = #tpu.dot_dimension_numbers<[1], [0], [0], [1], [0, 0, 1, 1], [], []>} : vector<16x32xbf16>, vector<32x32xbf16>, vector<16x32xf32> -> vector<16x32xf32>
    %c0_28 = arith.constant 0 : index
    %c0_29 = arith.constant 0 : index
    %42 = vector.load %arg10[%c0_28, %c0_29] : memref<1x32xf32, #tpu.memory_space<vmem>>, vector<1x32xf32>
    %43 = vector.broadcast %42 : vector<1x32xf32> to vector<16x32xf32>
    %44 = arith.addf %41, %43 : vector<16x32xf32>
    %45 = arith.truncf %34 : vector<16x32xf32> to vector<16x32xbf16>
    %46 = vector.shape_cast %45 : vector<16x32xbf16> to vector<2x8x32xbf16>
    %47 = arith.truncf %39 : vector<16x32xf32> to vector<16x32xbf16>
    %48 = vector.shape_cast %47 : vector<16x32xbf16> to vector<2x8x32xbf16>
    %49 = arith.truncf %44 : vector<16x32xf32> to vector<16x32xbf16>
    %50 = vector.shape_cast %49 : vector<16x32xbf16> to vector<2x8x32xbf16>
    %51 = vector.extract_strided_slice %46 {offsets = [0, 0, 0], sizes = [2, 8, 8], strides = [1, 1, 1]} : vector<2x8x32xbf16> to vector<2x8x8xbf16>
    %52 = vector.extract_strided_slice %48 {offsets = [0, 0, 0], sizes = [2, 8, 8], strides = [1, 1, 1]} : vector<2x8x32xbf16> to vector<2x8x8xbf16>
    %53 = vector.extract_strided_slice %50 {offsets = [0, 0, 0], sizes = [2, 8, 8], strides = [1, 1, 1]} : vector<2x8x32xbf16> to vector<2x8x8xbf16>
    "tpu.trace_start"() <{level = 10 : i32, message = "bqd,bkd->bqk"}> : () -> ()
    %cst_30 = arith.constant dense<0.000000e+00> : vector<2x8x8xf32>
    %54 = tpu.matmul %51, %52, %cst_30 {dimension_numbers = #tpu.dot_dimension_numbers<[2], [2], [1], [1], [0, 0, 0, 1, 1, 1], [0], [0]>} : vector<2x8x8xbf16>, vector<2x8x8xbf16>, vector<2x8x8xf32> -> vector<2x8x8xf32>
    "tpu.trace_stop"() : () -> ()
    %55 = vector.broadcast %6 : vector<2x1x8xf32> to vector<2x8x8xf32>
    %56 = arith.addf %54, %55 : vector<2x8x8xf32>
    %cst_31 = arith.constant dense<0xFF800000> : vector<2x8xf32>
    %57 = vector.multi_reduction <maximumf>, %56, %cst_31 [2] : vector<2x8x8xf32> to vector<2x8xf32>
    %58 = vector.shape_cast %57 : vector<2x8xf32> to vector<2x8x1xf32>
    %59 = vector.broadcast %58 : vector<2x8x1xf32> to vector<2x8x8xf32>
    %60 = arith.subf %56, %59 : vector<2x8x8xf32>
    %61 = math.exp %60 : vector<2x8x8xf32>
    %cst_32 = arith.constant dense<0.000000e+00> : vector<2x8xf32>
    %62 = vector.multi_reduction <add>, %61, %cst_32 [2] : vector<2x8x8xf32> to vector<2x8xf32>
    %63 = vector.shape_cast %62 : vector<2x8xf32> to vector<2x8x1xf32>
    %64 = tpu.reciprocal %63 {approx = true} : vector<2x8x1xf32> -> vector<2x8x1xf32>
    %65 = vector.broadcast %64 : vector<2x8x1xf32> to vector<2x8x8xf32>
    %66 = arith.mulf %61, %65 : vector<2x8x8xf32>
    %67 = arith.truncf %66 : vector<2x8x8xf32> to vector<2x8x8xbf16>
    "tpu.trace_start"() <{level = 10 : i32, message = "bqk,bkd->bqd"}> : () -> ()
    %cst_33 = arith.constant dense<0.000000e+00> : vector<2x8x8xf32>
    %68 = tpu.matmul %67, %53, %cst_33 {dimension_numbers = #tpu.dot_dimension_numbers<[2], [1], [1], [2], [0, 0, 0, 1, 1, 2], [0], [0]>} : vector<2x8x8xbf16>, vector<2x8x8xbf16>, vector<2x8x8xf32> -> vector<2x8x8xf32>
    "tpu.trace_stop"() : () -> ()
    %69 = arith.truncf %68 : vector<2x8x8xf32> to vector<2x8x8xbf16>
    %70 = vector.extract_strided_slice %46 {offsets = [0, 0, 8], sizes = [2, 8, 8], strides = [1, 1, 1]} : vector<2x8x32xbf16> to vector<2x8x8xbf16>
    %71 = vector.extract_strided_slice %48 {offsets = [0, 0, 8], sizes = [2, 8, 8], strides = [1, 1, 1]} : vector<2x8x32xbf16> to vector<2x8x8xbf16>
    %72 = vector.extract_strided_slice %50 {offsets = [0, 0, 8], sizes = [2, 8, 8], strides = [1, 1, 1]} : vector<2x8x32xbf16> to vector<2x8x8xbf16>
    "tpu.trace_start"() <{level = 10 : i32, message = "bqd,bkd->bqk"}> : () -> ()
    %cst_34 = arith.constant dense<0.000000e+00> : vector<2x8x8xf32>
    %73 = tpu.matmul %70, %71, %cst_34 {dimension_numbers = #tpu.dot_dimension_numbers<[2], [2], [1], [1], [0, 0, 0, 1, 1, 1], [0], [0]>} : vector<2x8x8xbf16>, vector<2x8x8xbf16>, vector<2x8x8xf32> -> vector<2x8x8xf32>
    "tpu.trace_stop"() : () -> ()
    %74 = vector.broadcast %6 : vector<2x1x8xf32> to vector<2x8x8xf32>
    %75 = arith.addf %73, %74 : vector<2x8x8xf32>
    %cst_35 = arith.constant dense<0xFF800000> : vector<2x8xf32>
    %76 = vector.multi_reduction <maximumf>, %75, %cst_35 [2] : vector<2x8x8xf32> to vector<2x8xf32>
    %77 = vector.shape_cast %76 : vector<2x8xf32> to vector<2x8x1xf32>
    %78 = vector.broadcast %77 : vector<2x8x1xf32> to vector<2x8x8xf32>
    %79 = arith.subf %75, %78 : vector<2x8x8xf32>
    %80 = math.exp %79 : vector<2x8x8xf32>
    %cst_36 = arith.constant dense<0.000000e+00> : vector<2x8xf32>
    %81 = vector.multi_reduction <add>, %80, %cst_36 [2] : vector<2x8x8xf32> to vector<2x8xf32>
    %82 = vector.shape_cast %81 : vector<2x8xf32> to vector<2x8x1xf32>
    %83 = tpu.reciprocal %82 {approx = true} : vector<2x8x1xf32> -> vector<2x8x1xf32>
    %84 = vector.broadcast %83 : vector<2x8x1xf32> to vector<2x8x8xf32>
    %85 = arith.mulf %80, %84 : vector<2x8x8xf32>
    %86 = arith.truncf %85 : vector<2x8x8xf32> to vector<2x8x8xbf16>
    "tpu.trace_start"() <{level = 10 : i32, message = "bqk,bkd->bqd"}> : () -> ()
    %cst_37 = arith.constant dense<0.000000e+00> : vector<2x8x8xf32>
    %87 = tpu.matmul %86, %72, %cst_37 {dimension_numbers = #tpu.dot_dimension_numbers<[2], [1], [1], [2], [0, 0, 0, 1, 1, 2], [0], [0]>} : vector<2x8x8xbf16>, vector<2x8x8xbf16>, vector<2x8x8xf32> -> vector<2x8x8xf32>
    "tpu.trace_stop"() : () -> ()
    %88 = arith.truncf %87 : vector<2x8x8xf32> to vector<2x8x8xbf16>
    %89 = vector.extract_strided_slice %46 {offsets = [0, 0, 16], sizes = [2, 8, 8], strides = [1, 1, 1]} : vector<2x8x32xbf16> to vector<2x8x8xbf16>
    %90 = vector.extract_strided_slice %48 {offsets = [0, 0, 16], sizes = [2, 8, 8], strides = [1, 1, 1]} : vector<2x8x32xbf16> to vector<2x8x8xbf16>
    %91 = vector.extract_strided_slice %50 {offsets = [0, 0, 16], sizes = [2, 8, 8], strides = [1, 1, 1]} : vector<2x8x32xbf16> to vector<2x8x8xbf16>
    "tpu.trace_start"() <{level = 10 : i32, message = "bqd,bkd->bqk"}> : () -> ()
    %cst_38 = arith.constant dense<0.000000e+00> : vector<2x8x8xf32>
    %92 = tpu.matmul %89, %90, %cst_38 {dimension_numbers = #tpu.dot_dimension_numbers<[2], [2], [1], [1], [0, 0, 0, 1, 1, 1], [0], [0]>} : vector<2x8x8xbf16>, vector<2x8x8xbf16>, vector<2x8x8xf32> -> vector<2x8x8xf32>
    "tpu.trace_stop"() : () -> ()
    %93 = vector.broadcast %6 : vector<2x1x8xf32> to vector<2x8x8xf32>
    %94 = arith.addf %92, %93 : vector<2x8x8xf32>
    %cst_39 = arith.constant dense<0xFF800000> : vector<2x8xf32>
    %95 = vector.multi_reduction <maximumf>, %94, %cst_39 [2] : vector<2x8x8xf32> to vector<2x8xf32>
    %96 = vector.shape_cast %95 : vector<2x8xf32> to vector<2x8x1xf32>
    %97 = vector.broadcast %96 : vector<2x8x1xf32> to vector<2x8x8xf32>
    %98 = arith.subf %94, %97 : vector<2x8x8xf32>
    %99 = math.exp %98 : vector<2x8x8xf32>
    %cst_40 = arith.constant dense<0.000000e+00> : vector<2x8xf32>
    %100 = vector.multi_reduction <add>, %99, %cst_40 [2] : vector<2x8x8xf32> to vector<2x8xf32>
    %101 = vector.shape_cast %100 : vector<2x8xf32> to vector<2x8x1xf32>
    %102 = tpu.reciprocal %101 {approx = true} : vector<2x8x1xf32> -> vector<2x8x1xf32>
    %103 = vector.broadcast %102 : vector<2x8x1xf32> to vector<2x8x8xf32>
    %104 = arith.mulf %99, %103 : vector<2x8x8xf32>
    %105 = arith.truncf %104 : vector<2x8x8xf32> to vector<2x8x8xbf16>
    "tpu.trace_start"() <{level = 10 : i32, message = "bqk,bkd->bqd"}> : () -> ()
    %cst_41 = arith.constant dense<0.000000e+00> : vector<2x8x8xf32>
    %106 = tpu.matmul %105, %91, %cst_41 {dimension_numbers = #tpu.dot_dimension_numbers<[2], [1], [1], [2], [0, 0, 0, 1, 1, 2], [0], [0]>} : vector<2x8x8xbf16>, vector<2x8x8xbf16>, vector<2x8x8xf32> -> vector<2x8x8xf32>
    "tpu.trace_stop"() : () -> ()
    %107 = arith.truncf %106 : vector<2x8x8xf32> to vector<2x8x8xbf16>
    %108 = vector.extract_strided_slice %46 {offsets = [0, 0, 24], sizes = [2, 8, 8], strides = [1, 1, 1]} : vector<2x8x32xbf16> to vector<2x8x8xbf16>
    %109 = vector.extract_strided_slice %48 {offsets = [0, 0, 24], sizes = [2, 8, 8], strides = [1, 1, 1]} : vector<2x8x32xbf16> to vector<2x8x8xbf16>
    %110 = vector.extract_strided_slice %50 {offsets = [0, 0, 24], sizes = [2, 8, 8], strides = [1, 1, 1]} : vector<2x8x32xbf16> to vector<2x8x8xbf16>
    "tpu.trace_start"() <{level = 10 : i32, message = "bqd,bkd->bqk"}> : () -> ()
    %cst_42 = arith.constant dense<0.000000e+00> : vector<2x8x8xf32>
    %111 = tpu.matmul %108, %109, %cst_42 {dimension_numbers = #tpu.dot_dimension_numbers<[2], [2], [1], [1], [0, 0, 0, 1, 1, 1], [0], [0]>} : vector<2x8x8xbf16>, vector<2x8x8xbf16>, vector<2x8x8xf32> -> vector<2x8x8xf32>
    "tpu.trace_stop"() : () -> ()
    %112 = vector.broadcast %6 : vector<2x1x8xf32> to vector<2x8x8xf32>
    %113 = arith.addf %111, %112 : vector<2x8x8xf32>
    %cst_43 = arith.constant dense<0xFF800000> : vector<2x8xf32>
    %114 = vector.multi_reduction <maximumf>, %113, %cst_43 [2] : vector<2x8x8xf32> to vector<2x8xf32>
    %115 = vector.shape_cast %114 : vector<2x8xf32> to vector<2x8x1xf32>
    %116 = vector.broadcast %115 : vector<2x8x1xf32> to vector<2x8x8xf32>
    %117 = arith.subf %113, %116 : vector<2x8x8xf32>
    %118 = math.exp %117 : vector<2x8x8xf32>
    %cst_44 = arith.constant dense<0.000000e+00> : vector<2x8xf32>
    %119 = vector.multi_reduction <add>, %118, %cst_44 [2] : vector<2x8x8xf32> to vector<2x8xf32>
    %120 = vector.shape_cast %119 : vector<2x8xf32> to vector<2x8x1xf32>
    %121 = tpu.reciprocal %120 {approx = true} : vector<2x8x1xf32> -> vector<2x8x1xf32>
    %122 = vector.broadcast %121 : vector<2x8x1xf32> to vector<2x8x8xf32>
    %123 = arith.mulf %118, %122 : vector<2x8x8xf32>
    %124 = arith.truncf %123 : vector<2x8x8xf32> to vector<2x8x8xbf16>
    "tpu.trace_start"() <{level = 10 : i32, message = "bqk,bkd->bqd"}> : () -> ()
    %cst_45 = arith.constant dense<0.000000e+00> : vector<2x8x8xf32>
    %125 = tpu.matmul %124, %110, %cst_45 {dimension_numbers = #tpu.dot_dimension_numbers<[2], [1], [1], [2], [0, 0, 0, 1, 1, 2], [0], [0]>} : vector<2x8x8xbf16>, vector<2x8x8xbf16>, vector<2x8x8xf32> -> vector<2x8x8xf32>
    "tpu.trace_stop"() : () -> ()
    %126 = arith.truncf %125 : vector<2x8x8xf32> to vector<2x8x8xbf16>
    %127 = tpu.concatenate %69, %88, %107, %126 in 2 : vector<2x8x8xbf16>, vector<2x8x8xbf16>, vector<2x8x8xbf16>, vector<2x8x8xbf16> -> vector<2x8x32xbf16>
    %128 = vector.shape_cast %127 : vector<2x8x32xbf16> to vector<16x32xbf16>
    %c0_46 = arith.constant 0 : index
    %c0_47 = arith.constant 0 : index
    %129 = vector.load %arg11[%c0_46, %c0_47] : memref<32x32xbf16, #tpu.memory_space<vmem>>, vector<32x32xbf16>
    %cst_48 = arith.constant dense<0.000000e+00> : vector<16x32xf32>
    %130 = tpu.matmul %128, %129, %cst_48 {dimension_numbers = #tpu.dot_dimension_numbers<[1], [0], [0], [1], [0, 0, 1, 1], [], []>} : vector<16x32xbf16>, vector<32x32xbf16>, vector<16x32xf32> -> vector<16x32xf32>
    %c0_49 = arith.constant 0 : index
    %c0_50 = arith.constant 0 : index
    %131 = vector.load %arg12[%c0_49, %c0_50] : memref<1x32xf32, #tpu.memory_space<vmem>>, vector<1x32xf32>
    %132 = vector.broadcast %131 : vector<1x32xf32> to vector<16x32xf32>
    %133 = arith.addf %130, %132 : vector<16x32xf32>
    %134 = arith.addf %1, %133 : vector<16x32xf32>
    %c0_51 = arith.constant 0 : index
    %c0_52 = arith.constant 0 : index
    %135 = vector.load %arg13[%c0_51, %c0_52] : memref<1x32xf32, #tpu.memory_space<vmem>>, vector<1x32xf32>
    %c0_53 = arith.constant 0 : index
    %c0_54 = arith.constant 0 : index
    %136 = vector.load %arg14[%c0_53, %c0_54] : memref<1x32xf32, #tpu.memory_space<vmem>>, vector<1x32xf32>
    %cst_55 = arith.constant dense<0.000000e+00> : vector<16xf32>
    %137 = vector.multi_reduction <add>, %134, %cst_55 [1] : vector<16x32xf32> to vector<16xf32>
    %138 = vector.shape_cast %137 : vector<16xf32> to vector<16x1xf32>
    %cst_56 = arith.constant 3.200000e+01 : f32
    %139 = vector.broadcast %cst_56 : f32 to vector<16x1xf32>
    %140 = arith.divf %138, %139 : vector<16x1xf32>
    %141 = vector.broadcast %140 : vector<16x1xf32> to vector<16x32xf32>
    %142 = arith.subf %134, %141 : vector<16x32xf32>
    %143 = arith.mulf %142, %142 : vector<16x32xf32>
    %cst_57 = arith.constant dense<0.000000e+00> : vector<16xf32>
    %144 = vector.multi_reduction <add>, %143, %cst_57 [1] : vector<16x32xf32> to vector<16xf32>
    %145 = vector.shape_cast %144 : vector<16xf32> to vector<16x1xf32>
    %cst_58 = arith.constant 0.0322580636 : f32
    %146 = vector.broadcast %cst_58 : f32 to vector<16x1xf32>
    %147 = arith.mulf %145, %146 : vector<16x1xf32>
    %148 = vector.broadcast %135 : vector<1x32xf32> to vector<16x32xf32>
    %149 = arith.mulf %148, %142 : vector<16x32xf32>
    %150 = math.sqrt %147 : vector<16x1xf32>
    %cst_59 = arith.constant 9.99999997E-7 : f32
    %151 = vector.broadcast %cst_59 : f32 to vector<16x1xf32>
    %152 = arith.addf %150, %151 : vector<16x1xf32>
    %153 = vector.broadcast %152 : vector<16x1xf32> to vector<16x32xf32>
    %154 = arith.divf %149, %153 : vector<16x32xf32>
    %155 = vector.broadcast %136 : vector<1x32xf32> to vector<16x32xf32>
    %156 = arith.addf %154, %155 : vector<16x32xf32>
    %157 = arith.truncf %156 : vector<16x32xf32> to vector<16x32xbf16>
    %c0_60 = arith.constant 0 : index
    %c0_61 = arith.constant 0 : index
    %158 = vector.load %arg15[%c0_60, %c0_61] : memref<32x128xbf16, #tpu.memory_space<vmem>>, vector<32x128xbf16>
    %cst_62 = arith.constant dense<0.000000e+00> : vector<16x128xf32>
    %159 = tpu.matmul %157, %158, %cst_62 {dimension_numbers = #tpu.dot_dimension_numbers<[1], [0], [0], [1], [0, 0, 1, 1], [], []>} : vector<16x32xbf16>, vector<32x128xbf16>, vector<16x128xf32> -> vector<16x128xf32>
    %c0_63 = arith.constant 0 : index
    %c0_64 = arith.constant 0 : index
    %160 = vector.load %arg16[%c0_63, %c0_64] : memref<1x128xf32, #tpu.memory_space<vmem>>, vector<1x128xf32>
    %161 = vector.broadcast %160 : vector<1x128xf32> to vector<16x128xf32>
    %162 = arith.addf %159, %161 : vector<16x128xf32>
    %cst_65 = arith.constant 0.000000e+00 : f32
    %163 = vector.broadcast %cst_65 : f32 to vector<16x128xf32>
    %164 = arith.maximumf %162, %163 : vector<16x128xf32>
    %165 = arith.truncf %164 : vector<16x128xf32> to vector<16x128xbf16>
    %c0_66 = arith.constant 0 : index
    %c0_67 = arith.constant 0 : index
    %166 = vector.load %arg17[%c0_66, %c0_67] : memref<128x32xbf16, #tpu.memory_space<vmem>>, vector<128x32xbf16>
    %cst_68 = arith.constant dense<0.000000e+00> : vector<16x32xf32>
    %167 = tpu.matmul %165, %166, %cst_68 {dimension_numbers = #tpu.dot_dimension_numbers<[1], [0], [0], [1], [0, 0, 1, 1], [], []>} : vector<16x128xbf16>, vector<128x32xbf16>, vector<16x32xf32> -> vector<16x32xf32>
    %c0_69 = arith.constant 0 : index
    %c0_70 = arith.constant 0 : index
    %168 = vector.load %arg18[%c0_69, %c0_70] : memref<1x32xf32, #tpu.memory_space<vmem>>, vector<1x32xf32>
    %169 = vector.broadcast %168 : vector<1x32xf32> to vector<16x32xf32>
    %170 = arith.addf %167, %169 : vector<16x32xf32>
    %171 = arith.addf %134, %170 : vector<16x32xf32>
    %172 = vector.shape_cast %171 : vector<16x32xf32> to vector<2x8x32xf32>
    %c0_71 = arith.constant 0 : index
    %c0_72 = arith.constant 0 : index
    %c0_73 = arith.constant 0 : index
    %173 = vector.load %arg19[%c0_71, %c0_72, %c0_73] : memref<2x8x32xf32, #tpu.memory_space<vmem>>, vector<2x8x32xf32>
    tpu.vector_store %arg19[%c0_71, %c0_72, %c0_73], %172 {strides = array<i32>} : memref<2x8x32xf32, #tpu.memory_space<vmem>>, vector<2x8x32xf32>,
    return
  }
  func.func @transform_0(%arg0: i32) -> (i32, i32, i32) {
    %c0_i32 = arith.constant 0 : i32
    %c0_i32_0 = arith.constant 0 : i32
    %c0_i32_1 = arith.constant 0 : i32
    return %arg0, %c0_i32, %c0_i32_0 : i32, i32, i32
  }
  func.func @transform_1(%arg0: i32) -> (i32, i32, i32) {
    %c0_i32 = arith.constant 0 : i32
    %c0_i32_0 = arith.constant 0 : i32
    %c0_i32_1 = arith.constant 0 : i32
    return %arg0, %c0_i32, %c0_i32_0 : i32, i32, i32
  }
  func.func @transform_2(%arg0: i32) -> (i32, i32) {
    %c0_i32 = arith.constant 0 : i32
    %c0_i32_0 = arith.constant 0 : i32
    %c0_i32_1 = arith.constant 0 : i32
    return %c0_i32, %c0_i32_0 : i32, i32
  }
  func.func @transform_3(%arg0: i32) -> (i32, i32) {
    %c0_i32 = arith.constant 0 : i32
    %c0_i32_0 = arith.constant 0 : i32
    %c0_i32_1 = arith.constant 0 : i32
    return %c0_i32, %c0_i32_0 : i32, i32
  }
  func.func @transform_4(%arg0: i32) -> (i32, i32) {
    %c0_i32 = arith.constant 0 : i32
    %c0_i32_0 = arith.constant 0 : i32
    %c0_i32_1 = arith.constant 0 : i32
    return %c0_i32, %c0_i32_0 : i32, i32
  }
  func.func @transform_5(%arg0: i32) -> (i32, i32) {
    %c0_i32 = arith.constant 0 : i32
    %c0_i32_0 = arith.constant 0 : i32
    %c0_i32_1 = arith.constant 0 : i32
    return %c0_i32, %c0_i32_0 : i32, i32
  }
  func.func @transform_6(%arg0: i32) -> (i32, i32) {
    %c0_i32 = arith.constant 0 : i32
    %c0_i32_0 = arith.constant 0 : i32
    %c0_i32_1 = arith.constant 0 : i32
    return %c0_i32, %c0_i32_0 : i32, i32
  }
  func.func @transform_7(%arg0: i32) -> (i32, i32) {
    %c0_i32 = arith.constant 0 : i32
    %c0_i32_0 = arith.constant 0 : i32
    %c0_i32_1 = arith.constant 0 : i32
    return %c0_i32, %c0_i32_0 : i32, i32
  }
  func.func @transform_8(%arg0: i32) -> (i32, i32) {
    %c0_i32 = arith.constant 0 : i32
    %c0_i32_0 = arith.constant 0 : i32
    %c0_i32_1 = arith.constant 0 : i32
    return %c0_i32, %c0_i32_0 : i32, i32
  }
  func.func @transform_9(%arg0: i32) -> (i32, i32) {
    %c0_i32 = arith.constant 0 : i32
    %c0_i32_0 = arith.constant 0 : i32
    %c0_i32_1 = arith.constant 0 : i32
    return %c0_i32, %c0_i32_0 : i32, i32
  }
  func.func @transform_10(%arg0: i32) -> (i32, i32) {
    %c0_i32 = arith.constant 0 : i32
    %c0_i32_0 = arith.constant 0 : i32
    %c0_i32_1 = arith.constant 0 : i32
    return %c0_i32, %c0_i32_0 : i32, i32
  }
  func.func @transform_11(%arg0: i32) -> (i32, i32) {
    %c0_i32 = arith.constant 0 : i32
    %c0_i32_0 = arith.constant 0 : i32
    %c0_i32_1 = arith.constant 0 : i32
    return %c0_i32, %c0_i32_0 : i32, i32
  }
  func.func @transform_12(%arg0: i32) -> (i32, i32) {
    %c0_i32 = arith.constant 0 : i32
    %c0_i32_0 = arith.constant 0 : i32
    %c0_i32_1 = arith.constant 0 : i32
    return %c0_i32, %c0_i32_0 : i32, i32
  }
  func.func @transform_13(%arg0: i32) -> (i32, i32) {
    %c0_i32 = arith.constant 0 : i32
    %c0_i32_0 = arith.constant 0 : i32
    %c0_i32_1 = arith.constant 0 : i32
    return %c0_i32, %c0_i32_0 : i32, i32
  }
  func.func @transform_14(%arg0: i32) -> (i32, i32) {
    %c0_i32 = arith.constant 0 : i32
    %c0_i32_0 = arith.constant 0 : i32
    %c0_i32_1 = arith.constant 0 : i32
    return %c0_i32, %c0_i32_0 : i32, i32
  }
  func.func @transform_15(%arg0: i32) -> (i32, i32) {
    %c0_i32 = arith.constant 0 : i32
    %c0_i32_0 = arith.constant 0 : i32
    %c0_i32_1 = arith.constant 0 : i32
    return %c0_i32, %c0_i32_0 : i32, i32
  }
  func.func @transform_16(%arg0: i32) -> (i32, i32) {
    %c0_i32 = arith.constant 0 : i32
    %c0_i32_0 = arith.constant 0 : i32
    %c0_i32_1 = arith.constant 0 : i32
    return %c0_i32, %c0_i32_0 : i32, i32
  }
  func.func @transform_17(%arg0: i32) -> (i32, i32) {
    %c0_i32 = arith.constant 0 : i32
    %c0_i32_0 = arith.constant 0 : i32
    %c0_i32_1 = arith.constant 0 : i32
    return %c0_i32, %c0_i32_0 : i32, i32
  }
  func.func @transform_18(%arg0: i32) -> (i32, i32, i32) {
    %c0_i32 = arith.constant 0 : i32
    %c0_i32_0 = arith.constant 0 : i32
    %c0_i32_1 = arith.constant 0 : i32
    return %arg0, %c0_i32, %c0_i32_0 : i32, i32, i32
  }
}

module attributes {stable_mosaic.version = 11 : i64} {
  func.func @_encoder_layer_kernel(%arg0: i32, %arg1: memref<2x8x32xf32, #tpu.memory_space<vmem>>, %arg2: memref<2x1x8xf32, #tpu.memory_space<vmem>>, %arg3: memref<1x32xf32, #tpu.memory_space<vmem>>, %arg4: memref<1x32xf32, #tpu.memory_space<vmem>>, %arg5: memref<32x32xbf16, #tpu.memory_space<vmem>>, %arg6: memref<1x32xf32, #tpu.memory_space<vmem>>, %arg7: memref<32x32xbf16, #tpu.memory_space<vmem>>, %arg8: memref<1x32xf32, #tpu.memory_space<vmem>>, %arg9: memref<32x32xbf16, #tpu.memory_space<vmem>>, %arg10: memref<1x32xf32, #tpu.memory_space<vmem>>, %arg11: memref<32x32xbf16, #tpu.memory_space<vmem>>, %arg12: memref<1x32xf32, #tpu.memory_space<vmem>>, %arg13: memref<1x32xf32, #tpu.memory_space<vmem>>, %arg14: memref<1x32xf32, #tpu.memory_space<vmem>>, %arg15: memref<32x128xbf16, #tpu.memory_space<vmem>>, %arg16: memref<1x128xf32, #tpu.memory_space<vmem>>, %arg17: memref<128x32xbf16, #tpu.memory_space<vmem>>, %arg18: memref<1x32xf32, #tpu.memory_space<vmem>>, %arg19: memref<2x8x32xf32, #tpu.memory_space<vmem>>) attributes {dimension_semantics = [#tpu.dimension_semantics<parallel>], iteration_bounds = array<i64: 1>, scalar_prefetch = 0 : i64, scratch_operands = 0 : i64, tpu.core_type = #tpu.core_type<tc>, window_params = [{transform_indices = @transform_0, window_bounds = array<i64: 2, 8, 32>}, {transform_indices = @transform_1, window_bounds = array<i64: 2, 1, 8>}, {pipeline_mode = #tpu.pipeline_mode<synchronous>, transform_indices = @transform_2, window_bounds = array<i64: 1, 32>}, {pipeline_mode = #tpu.pipeline_mode<synchronous>, transform_indices = @transform_3, window_bounds = array<i64: 1, 32>}, {pipeline_mode = #tpu.pipeline_mode<synchronous>, transform_indices = @transform_4, window_bounds = array<i64: 32, 32>}, {pipeline_mode = #tpu.pipeline_mode<synchronous>, transform_indices = @transform_5, window_bounds = array<i64: 1, 32>}, {pipeline_mode = #tpu.pipeline_mode<synchronous>, transform_indices = @transform_6, window_bounds = array<i64: 32, 32>}, {pipeline_mode = #tpu.pipeline_mode<synchronous>, transform_indices = @transform_7, window_bounds = array<i64: 1, 32>}, {pipeline_mode = #tpu.pipeline_mode<synchronous>, transform_indices = @transform_8, window_bounds = array<i64: 32, 32>}, {pipeline_mode = #tpu.pipeline_mode<synchronous>, transform_indices = @transform_9, window_bounds = array<i64: 1, 32>}, {pipeline_mode = #tpu.pipeline_mode<synchronous>, transform_indices = @transform_10, window_bounds = array<i64: 32, 32>}, {pipeline_mode = #tpu.pipeline_mode<synchronous>, transform_indices = @transform_11, window_bounds = array<i64: 1, 32>}, {pipeline_mode = #tpu.pipeline_mode<synchronous>, transform_indices = @transform_12, window_bounds = array<i64: 1, 32>}, {pipeline_mode = #tpu.pipeline_mode<synchronous>, transform_indices = @transform_13, window_bounds = array<i64: 1, 32>}, {pipeline_mode = #tpu.pipeline_mode<synchronous>, transform_indices = @transform_14, window_bounds = array<i64: 32, 128>}, {pipeline_mode = #tpu.pipeline_mode<synchronous>, transform_indices = @transform_15, window_bounds = array<i64: 1, 128>}, {pipeline_mode = #tpu.pipeline_mode<synchronous>, transform_indices = @transform_16, window_bounds = array<i64: 128, 32>}, {pipeline_mode = #tpu.pipeline_mode<synchronous>, transform_indices = @transform_17, window_bounds = array<i64: 1, 32>}, {transform_indices = @transform_18, window_bounds = array<i64: 2, 8, 32>}]} {
    %c0 = arith.constant 0 : index
    %c0_0 = arith.constant 0 : index
    %c0_1 = arith.constant 0 : index
    %0 = vector.load %arg1[%c0, %c0_0, %c0_1] : memref<2x8x32xf32, #tpu.memory_space<vmem>>, vector<2x8x32xf32>
    %1 = vector.shape_cast %0 : vector<2x8x32xf32> to vector<16x32xf32>
    %c0_2 = arith.constant 0 : index
    %c0_3 = arith.constant 0 : index
    %c0_4 = arith.constant 0 : index
    %2 = vector.load %arg2[%c0_2, %c0_3, %c0_4] : memref<2x1x8xf32, #tpu.memory_space<vmem>>, vector<2x1x8xf32>
    %cst = arith.constant 1.000000e+00 : f32
    %3 = vector.broadcast %cst : f32 to vector<2x1x8xf32>
    %4 = arith.subf %2, %3 : vector<2x1x8xf32>
    %cst_5 = arith.constant 1.000000e+09 : f32
    %5 = vector.broadcast %cst_5 : f32 to vector<2x1x8xf32>
    %6 = arith.mulf %4, %5 : vector<2x1x8xf32>
    %c0_6 = arith.constant 0 : index
    %c0_7 = arith.constant 0 : index
    %7 = vector.load %arg3[%c0_6, %c0_7] : memref<1x32xf32, #tpu.memory_space<vmem>>, vector<1x32xf32>
    %c0_8 = arith.constant 0 : index
    %c0_9 = arith.constant 0 : index
    %8 = vector.load %arg4[%c0_8, %c0_9] : memref<1x32xf32, #tpu.memory_space<vmem>>, vector<1x32xf32>
    %cst_10 = arith.constant dense<0.000000e+00> : vector<16xf32>
    %9 = vector.multi_reduction <add>, %1, %cst_10 [1] : vector<16x32xf32> to vector<16xf32>
    %10 = vector.shape_cast %9 : vector<16xf32> to vector<16x1xf32>
    %cst_11 = arith.constant 3.200000e+01 : f32
    %11 = vector.broadcast %cst_11 : f32 to vector<16x1xf32>
    %12 = arith.divf %10, %11 : vector<16x1xf32>
    %13 = vector.broadcast %12 : vector<16x1xf32> to vector<16x32xf32>
    %14 = arith.subf %1, %13 : vector<16x32xf32>
    %15 = arith.mulf %14, %14 : vector<16x32xf32>
    %cst_12 = arith.constant dense<0.000000e+00> : vector<16xf32>
    %16 = vector.multi_reduction <add>, %15, %cst_12 [1] : vector<16x32xf32> to vector<16xf32>
    %17 = vector.shape_cast %16 : vector<16xf32> to vector<16x1xf32>
    %cst_13 = arith.constant 0.0322580636 : f32
    %18 = vector.broadcast %cst_13 : f32 to vector<16x1xf32>
    %19 = arith.mulf %17, %18 : vector<16x1xf32>
    %20 = vector.broadcast %7 : vector<1x32xf32> to vector<16x32xf32>
    %21 = arith.mulf %20, %14 : vector<16x32xf32>
    %22 = math.sqrt %19 : vector<16x1xf32>
    %cst_14 = arith.constant 9.99999997E-7 : f32
    %23 = vector.broadcast %cst_14 : f32 to vector<16x1xf32>
    %24 = arith.addf %22, %23 : vector<16x1xf32>
    %25 = vector.broadcast %24 : vector<16x1xf32> to vector<16x32xf32>
    %26 = arith.divf %21, %25 : vector<16x32xf32>
    %27 = vector.broadcast %8 : vector<1x32xf32> to vector<16x32xf32>
    %28 = arith.addf %26, %27 : vector<16x32xf32>
    %29 = arith.truncf %28 : vector<16x32xf32> to vector<16x32xbf16>
    %c0_15 = arith.constant 0 : index
    %c0_16 = arith.constant 0 : index
    %30 = vector.load %arg5[%c0_15, %c0_16] : memref<32x32xbf16, #tpu.memory_space<vmem>>, vector<32x32xbf16>
    %cst_17 = arith.constant dense<0.000000e+00> : vector<16x32xf32>
    %31 = tpu.matmul %29, %30, %cst_17 {dimension_numbers = #tpu.dot_dimension_numbers<[1], [0], [0], [1], [0, 0, 1, 1], [], []>} : vector<16x32xbf16>, vector<32x32xbf16>, vector<16x32xf32> -> vector<16x32xf32>
    %c0_18 = arith.constant 0 : index
    %c0_19 = arith.constant 0 : index
    %32 = vector.load %arg6[%c0_18, %c0_19] : memref<1x32xf32, #tpu.memory_space<vmem>>, vector<1x32xf32>
    %33 = vector.broadcast %32 : vector<1x32xf32> to vector<16x32xf32>
    %34 = arith.addf %31, %33 : vector<16x32xf32>
    %c0_20 = arith.constant 0 : index
    %c0_21 = arith.constant 0 : index
    %35 = vector.load %arg7[%c0_20, %c0_21] : memref<32x32xbf16, #tpu.memory_space<vmem>>, vector<32x32xbf16>
    %cst_22 = arith.constant dense<0.000000e+00> : vector<16x32xf32>
    %36 = tpu.matmul %29, %35, %cst_22 {dimension_numbers = #tpu.dot_dimension_numbers<[1], [0], [0], [1], [0, 0, 1, 1], [], []>} : vector<16x32xbf16>, vector<32x32xbf16>, vector<16x32xf32> -> vector<16x32xf32>
    %c0_23 = arith.constant 0 : index
    %c0_24 = arith.constant 0 : index
    %37 = vector.load %arg8[%c0_23, %c0_24] : memref<1x32xf32, #tpu.memory_space<vmem>>, vector<1x32xf32>
    %38 = vector.broadcast %37 : vector<1x32xf32> to vector<16x32xf32>
    %39 = arith.addf %36, %38 : vector<16x32xf32>
    %c0_25 = arith.constant 0 : index
    %c0_26 = arith.constant 0 : index
    %40 = vector.load %arg9[%c0_25, %c0_26] : memref<32x32xbf16, #tpu.memory_space<vmem>>, vector<32x32xbf16>
    %cst_27 = arith.constant dense<0.000000e+00> : vector<16x32xf32>
    %41 = tpu.matmul %29, %40, %cst_27 {dimension_numbers = #tpu.dot_dimension_numbers<[1], [0], [0], [1], [0, 0, 1, 1], [], []>} : vector<16x32xbf16>, vector<32x32xbf16>, vector<16x32xf32> -> vector<16x32xf32>
    %c0_28 = arith.constant 0 : index
    %c0_29 = arith.constant 0 : index
    %42 = vector.load %arg10[%c0_28, %c0_29] : memref<1x32xf32, #tpu.memory_space<vmem>>, vector<1x32xf32>
    %43 = vector.broadcast %42 : vector<1x32xf32> to vector<16x32xf32>
    %44 = arith.addf %41, %43 : vector<16x32xf32>
    %45 = arith.truncf %34 : vector<16x32xf32> to vector<16x32xbf16>
    %46 = vector.shape_cast %45 : vector<16x32xbf16> to vector<2x8x32xbf16>
    %47 = arith.truncf %39 : vector<16x32xf32> to vector<16x32xbf16>
    %48 = vector.shape_cast %47 : vector<16x32xbf16> to vector<2x8x32xbf16>
    %49 = arith.truncf %44 : vector<16x32xf32> to vector<16x32xbf16>
    %50 = vector.shape_cast %49 : vector<16x32xbf16> to vector<2x8x32xbf16>
    %51 = vector.extract_strided_slice %46 {offsets = [0, 0, 0], sizes = [2, 8, 8], strides = [1, 1, 1]} : vector<2x8x32xbf16> to vector<2x8x8xbf16>
    %52 = vector.extract_strided_slice %48 {offsets = [0, 0, 0], sizes = [2, 8, 8], strides = [1, 1, 1]} : vector<2x8x32xbf16> to vector<2x8x8xbf16>
    %53 = vector.extract_strided_slice %50 {offsets = [0, 0, 0], sizes = [2, 8, 8], strides = [1, 1, 1]} : vector<2x8x32xbf16> to vector<2x8x8xbf16>
    "tpu.trace_start"() <{level = 10 : i32, message = "bqd,bkd->bqk"}> : () -> ()
    %cst_30 = arith.constant dense<0.000000e+00> : vector<2x8x8xf32>
    %54 = tpu.matmul %51, %52, %cst_30 {dimension_numbers = #tpu.dot_dimension_numbers<[2], [2], [1], [1], [0, 0, 0, 1, 1, 1], [0], [0]>} : vector<2x8x8xbf16>, vector<2x8x8xbf16>, vector<2x8x8xf32> -> vector<2x8x8xf32>
    "tpu.trace_stop"() : () -> ()
    %55 = vector.broadcast %6 : vector<2x1x8xf32> to vector<2x8x8xf32>
    %56 = arith.addf %54, %55 : vector<2x8x8xf32>
    %cst_31 = arith.constant dense<0xFF800000> : vector<2x8xf32>
    %57 = vector.multi_reduction <maximumf>, %56, %cst_31 [2] : vector<2x8x8xf32> to vector<2x8xf32>
    %58 = vector.shape_cast %57 : vector<2x8xf32> to vector<2x8x1xf32>
    %59 = vector.broadcast %58 : vector<2x8x1xf32> to vector<2x8x8xf32>
    %60 = arith.subf %56, %59 : vector<2x8x8xf32>
    %61 = math.exp %60 : vector<2x8x8xf32>
    %cst_32 = arith.constant dense<0.000000e+00> : vector<2x8xf32>
    %62 = vector.multi_reduction <add>, %61, %cst_32 [2] : vector<2x8x8xf32> to vector<2x8xf32>
    %63 = vector.shape_cast %62 : vector<2x8xf32> to vector<2x8x1xf32>
    %64 = tpu.reciprocal %63 {approx = true} : vector<2x8x1xf32> -> vector<2x8x1xf32>
    %65 = vector.broadcast %64 : vector<2x8x1xf32> to vector<2x8x8xf32>
    %66 = arith.mulf %61, %65 : vector<2x8x8xf32>
    %67 = arith.truncf %66 : vector<2x8x8xf32> to vector<2x8x8xbf16>
    "tpu.trace_start"() <{level = 10 : i32, message = "bqk,bkd->bqd"}> : () -> ()
    %cst_33 = arith.constant dense<0.000000e+00> : vector<2x8x8xf32>
    %68 = tpu.matmul %67, %53, %cst_33 {dimension_numbers = #tpu.dot_dimension_numbers<[2], [1], [1], [2], [0, 0, 0, 1, 1, 2], [0], [0]>} : vector<2x8x8xbf16>, vector<2x8x8xbf16>, vector<2x8x8xf32> -> vector<2x8x8xf32>
    "tpu.trace_stop"() : () -> ()
    %69 = arith.truncf %68 : vector<2x8x8xf32> to vector<2x8x8xbf16>
    %70 = vector.extract_strided_slice %46 {offsets = [0, 0, 8], sizes = [2, 8, 8], strides = [1, 1, 1]} : vector<2x8x32xbf16> to vector<2x8x8xbf16>
    %71 = vector.extract_strided_slice %48 {offsets = [0, 0, 8], sizes = [2, 8, 8], strides = [1, 1, 1]} : vector<2x8x32xbf16> to vector<2x8x8xbf16>
    %72 = vector.extract_strided_slice %50 {offsets = [0, 0, 8], sizes = [2, 8, 8], strides = [1, 1, 1]} : vector<2x8x32xbf16> to vector<2x8x8xbf16>
    "tpu.trace_start"() <{level = 10 : i32, message = "bqd,bkd->bqk"}> : () -> ()
    %cst_34 = arith.constant dense<0.000000e+00> : vector<2x8x8xf32>
    %73 = tpu.matmul %70, %71, %cst_34 {dimension_numbers = #tpu.dot_dimension_numbers<[2], [2], [1], [1], [0, 0, 0, 1, 1, 1], [0], [0]>} : vector<2x8x8xbf16>, vector<2x8x8xbf16>, vector<2x8x8xf32> -> vector<2x8x8xf32>
    "tpu.trace_stop"() : () -> ()
    %74 = vector.broadcast %6 : vector<2x1x8xf32> to vector<2x8x8xf32>
    %75 = arith.addf %73, %74 : vector<2x8x8xf32>
    %cst_35 = arith.constant dense<0xFF800000> : vector<2x8xf32>
    %76 = vector.multi_reduction <maximumf>, %75, %cst_35 [2] : vector<2x8x8xf32> to vector<2x8xf32>
    %77 = vector.shape_cast %76 : vector<2x8xf32> to vector<2x8x1xf32>
    %78 = vector.broadcast %77 : vector<2x8x1xf32> to vector<2x8x8xf32>
    %79 = arith.subf %75, %78 : vector<2x8x8xf32>
    %80 = math.exp %79 : vector<2x8x8xf32>
    %cst_36 = arith.constant dense<0.000000e+00> : vector<2x8xf32>
    %81 = vector.multi_reduction <add>, %80, %cst_36 [2] : vector<2x8x8xf32> to vector<2x8xf32>
    %82 = vector.shape_cast %81 : vector<2x8xf32> to vector<2x8x1xf32>
    %83 = tpu.reciprocal %82 {approx = true} : vector<2x8x1xf32> -> vector<2x8x1xf32>
    %84 = vector.broadcast %83 : vector<2x8x1xf32> to vector<2x8x8xf32>
    %85 = arith.mulf %80, %84 : vector<2x8x8xf32>
    %86 = arith.truncf %85 : vector<2x8x8xf32> to vector<2x8x8xbf16>
    "tpu.trace_start"() <{level = 10 : i32, message = "bqk,bkd->bqd"}> : () -> ()
    %cst_37 = arith.constant dense<0.000000e+00> : vector<2x8x8xf32>
    %87 = tpu.matmul %86, %72, %cst_37 {dimension_numbers = #tpu.dot_dimension_numbers<[2], [1], [1], [2], [0, 0, 0, 1, 1, 2], [0], [0]>} : vector<2x8x8xbf16>, vector<2x8x8xbf16>, vector<2x8x8xf32> -> vector<2x8x8xf32>
    "tpu.trace_stop"() : () -> ()
    %88 = arith.truncf %87 : vector<2x8x8xf32> to vector<2x8x8xbf16>
    %89 = vector.extract_strided_slice %46 {offsets = [0, 0, 16], sizes = [2, 8, 8], strides = [1, 1, 1]} : vector<2x8x32xbf16> to vector<2x8x8xbf16>
    %90 = vector.extract_strided_slice %48 {offsets = [0, 0, 16], sizes = [2, 8, 8], strides = [1, 1, 1]} : vector<2x8x32xbf16> to vector<2x8x8xbf16>
    %91 = vector.extract_strided_slice %50 {offsets = [0, 0, 16], sizes = [2, 8, 8], strides = [1, 1, 1]} : vector<2x8x32xbf16> to vector<2x8x8xbf16>
    "tpu.trace_start"() <{level = 10 : i32, message = "bqd,bkd->bqk"}> : () -> ()
    %cst_38 = arith.constant dense<0.000000e+00> : vector<2x8x8xf32>
    %92 = tpu.matmul %89, %90, %cst_38 {dimension_numbers = #tpu.dot_dimension_numbers<[2], [2], [1], [1], [0, 0, 0, 1, 1, 1], [0], [0]>} : vector<2x8x8xbf16>, vector<2x8x8xbf16>, vector<2x8x8xf32> -> vector<2x8x8xf32>
    "tpu.trace_stop"() : () -> ()
    %93 = vector.broadcast %6 : vector<2x1x8xf32> to vector<2x8x8xf32>
    %94 = arith.addf %92, %93 : vector<2x8x8xf32>
    %cst_39 = arith.constant dense<0xFF800000> : vector<2x8xf32>
    %95 = vector.multi_reduction <maximumf>, %94, %cst_39 [2] : vector<2x8x8xf32> to vector<2x8xf32>
    %96 = vector.shape_cast %95 : vector<2x8xf32> to vector<2x8x1xf32>
    %97 = vector.broadcast %96 : vector<2x8x1xf32> to vector<2x8x8xf32>
    %98 = arith.subf %94, %97 : vector<2x8x8xf32>
    %99 = math.exp %98 : vector<2x8x8xf32>
    %cst_40 = arith.constant dense<0.000000e+00> : vector<2x8xf32>
    %100 = vector.multi_reduction <add>, %99, %cst_40 [2] : vector<2x8x8xf32> to vector<2x8xf32>
    %101 = vector.shape_cast %100 : vector<2x8xf32> to vector<2x8x1xf32>
    %102 = tpu.reciprocal %101 {approx = true} : vector<2x8x1xf32> -> vector<2x8x1xf32>
    %103 = vector.broadcast %102 : vector<2x8x1xf32> to vector<2x8x8xf32>
    %104 = arith.mulf %99, %103 : vector<2x8x8xf32>
    %105 = arith.truncf %104 : vector<2x8x8xf32> to vector<2x8x8xbf16>
    "tpu.trace_start"() <{level = 10 : i32, message = "bqk,bkd->bqd"}> : () -> ()
    %cst_41 = arith.constant dense<0.000000e+00> : vector<2x8x8xf32>
    %106 = tpu.matmul %105, %91, %cst_41 {dimension_numbers = #tpu.dot_dimension_numbers<[2], [1], [1], [2], [0, 0, 0, 1, 1, 2], [0], [0]>} : vector<2x8x8xbf16>, vector<2x8x8xbf16>, vector<2x8x8xf32> -> vector<2x8x8xf32>
    "tpu.trace_stop"() : () -> ()
    %107 = arith.truncf %106 : vector<2x8x8xf32> to vector<2x8x8xbf16>
    %108 = vector.extract_strided_slice %46 {offsets = [0, 0, 24], sizes = [2, 8, 8], strides = [1, 1, 1]} : vector<2x8x32xbf16> to vector<2x8x8xbf16>
    %109 = vector.extract_strided_slice %48 {offsets = [0, 0, 24], sizes = [2, 8, 8], strides = [1, 1, 1]} : vector<2x8x32xbf16> to vector<2x8x8xbf16>
    %110 = vector.extract_strided_slice %50 {offsets = [0, 0, 24], sizes = [2, 8, 8], strides = [1, 1, 1]} : vector<2x8x32xbf16> to vector<2x8x8xbf16>
    "tpu.trace_start"() <{level = 10 : i32, message = "bqd,bkd->bqk"}> : () -> ()
    %cst_42 = arith.constant dense<0.000000e+00> : vector<2x8x8xf32>
    %111 = tpu.matmul %108, %109, %cst_42 {dimension_numbers = #tpu.dot_dimension_numbers<[2], [2], [1], [1], [0, 0, 0, 1, 1, 1], [0], [0]>} : vector<2x8x8xbf16>, vector<2x8x8xbf16>, vector<2x8x8xf32> -> vector<2x8x8xf32>
    "tpu.trace_stop"() : () -> ()
    %112 = vector.broadcast %6 : vector<2x1x8xf32> to vector<2x8x8xf32>
    %113 = arith.addf %111, %112 : vector<2x8x8xf32>
    %cst_43 = arith.constant dense<0xFF800000> : vector<2x8xf32>
    %114 = vector.multi_reduction <maximumf>, %113, %cst_43 [2] : vector<2x8x8xf32> to vector<2x8xf32>
    %115 = vector.shape_cast %114 : vector<2x8xf32> to vector<2x8x1xf32>
    %116 = vector.broadcast %115 : vector<2x8x1xf32> to vector<2x8x8xf32>
    %117 = arith.subf %113, %116 : vector<2x8x8xf32>
    %118 = math.exp %117 : vector<2x8x8xf32>
    %cst_44 = arith.constant dense<0.000000e+00> : vector<2x8xf32>
    %119 = vector.multi_reduction <add>, %118, %cst_44 [2] : vector<2x8x8xf32> to vector<2x8xf32>
    %120 = vector.shape_cast %119 : vector<2x8xf32> to vector<2x8x1xf32>
    %121 = tpu.reciprocal %120 {approx = true} : vector<2x8x1xf32> -> vector<2x8x1xf32>
    %122 = vector.broadcast %121 : vector<2x8x1xf32> to vector<2x8x8xf32>
    %123 = arith.mulf %118, %122 : vector<2x8x8xf32>
    %124 = arith.truncf %123 : vector<2x8x8xf32> to vector<2x8x8xbf16>
    "tpu.trace_start"() <{level = 10 : i32, message = "bqk,bkd->bqd"}> : () -> ()
    %cst_45 = arith.constant dense<0.000000e+00> : vector<2x8x8xf32>
    %125 = tpu.matmul %124, %110, %cst_45 {dimension_numbers = #tpu.dot_dimension_numbers<[2], [1], [1], [2], [0, 0, 0, 1, 1, 2], [0], [0]>} : vector<2x8x8xbf16>, vector<2x8x8xbf16>, vector<2x8x8xf32> -> vector<2x8x8xf32>
    "tpu.trace_stop"() : () -> ()
    %126 = arith.truncf %125 : vector<2x8x8xf32> to vector<2x8x8xbf16>
    %127 = tpu.concatenate %69, %88, %107, %126 in 2 : vector<2x8x8xbf16>, vector<2x8x8xbf16>, vector<2x8x8xbf16>, vector<2x8x8xbf16> -> vector<2x8x32xbf16>
    %128 = vector.shape_cast %127 : vector<2x8x32xbf16> to vector<16x32xbf16>
    %c0_46 = arith.constant 0 : index
    %c0_47 = arith.constant 0 : index
    %129 = vector.load %arg11[%c0_46, %c0_47] : memref<32x32xbf16, #tpu.memory_space<vmem>>, vector<32x32xbf16>
    %cst_48 = arith.constant dense<0.000000e+00> : vector<16x32xf32>
    %130 = tpu.matmul %128, %129, %cst_48 {dimension_numbers = #tpu.dot_dimension_numbers<[1], [0], [0], [1], [0, 0, 1, 1], [], []>} : vector<16x32xbf16>, vector<32x32xbf16>, vector<16x32xf32> -> vector<16x32xf32>
    %c0_49 = arith.constant 0 : index
    %c0_50 = arith.constant 0 : index
    %131 = vector.load %arg12[%c0_49, %c0_50] : memref<1x32xf32, #tpu.memory_space<vmem>>, vector<1x32xf32>
    %132 = vector.broadcast %131 : vector<1x32xf32> to vector<16x32xf32>
    %133 = arith.addf %130, %132 : vector<16x32xf32>
    %134 = arith.addf %1, %133 : vector<16x32xf32>
    %c0_51 = arith.constant 0 : index
    %c0_52 = arith.constant 0 : index
    %135 = vector.load %arg13[%c0_51, %c0_52] : memref<1x32xf32, #tpu.memory_space<vmem>>, vector<1x32xf32>
    %c0_53 = arith.constant 0 : index
    %c0_54 = arith.constant 0 : index
    %136 = vector.load %arg14[%c0_53, %c0_54] : memref<1x32xf32, #tpu.memory_space<vmem>>, vector<1x32xf32>
    %cst_55 = arith.constant dense<0.000000e+00> : vector<16xf32>
    %137 = vector.multi_reduction <add>, %134, %cst_55 [1] : vector<16x32xf32> to vector<16xf32>
    %138 = vector.shape_cast %137 : vector<16xf32> to vector<16x1xf32>
    %cst_56 = arith.constant 3.200000e+01 : f32
    %139 = vector.broadcast %cst_56 : f32 to vector<16x1xf32>
    %140 = arith.divf %138, %139 : vector<16x1xf32>
    %141 = vector.broadcast %140 : vector<16x1xf32> to vector<16x32xf32>
    %142 = arith.subf %134, %141 : vector<16x32xf32>
    %143 = arith.mulf %142, %142 : vector<16x32xf32>
    %cst_57 = arith.constant dense<0.000000e+00> : vector<16xf32>
    %144 = vector.multi_reduction <add>, %143, %cst_57 [1] : vector<16x32xf32> to vector<16xf32>
    %145 = vector.shape_cast %144 : vector<16xf32> to vector<16x1xf32>
    %cst_58 = arith.constant 0.0322580636 : f32
    %146 = vector.broadcast %cst_58 : f32 to vector<16x1xf32>
    %147 = arith.mulf %145, %146 : vector<16x1xf32>
    %148 = vector.broadcast %135 : vector<1x32xf32> to vector<16x32xf32>
    %149 = arith.mulf %148, %142 : vector<16x32xf32>
    %150 = math.sqrt %147 : vector<16x1xf32>
    %cst_59 = arith.constant 9.99999997E-7 : f32
    %151 = vector.broadcast %cst_59 : f32 to vector<16x1xf32>
    %152 = arith.addf %150, %151 : vector<16x1xf32>
    %153 = vector.broadcast %152 : vector<16x1xf32> to vector<16x32xf32>
    %154 = arith.divf %149, %153 : vector<16x32xf32>
    %155 = vector.broadcast %136 : vector<1x32xf32> to vector<16x32xf32>
    %156 = arith.addf %154, %155 : vector<16x32xf32>
    %157 = arith.truncf %156 : vector<16x32xf32> to vector<16x32xbf16>
    %c0_60 = arith.constant 0 : index
    %c0_61 = arith.constant 0 : index
    %158 = vector.load %arg15[%c0_60, %c0_61] : memref<32x128xbf16, #tpu.memory_space<vmem>>, vector<32x128xbf16>
    %cst_62 = arith.constant dense<0.000000e+00> : vector<16x128xf32>
    %159 = tpu.matmul %157, %158, %cst_62 {dimension_numbers = #tpu.dot_dimension_numbers<[1], [0], [0], [1], [0, 0, 1, 1], [], []>} : vector<16x32xbf16>, vector<32x128xbf16>, vector<16x128xf32> -> vector<16x128xf32>
    %c0_63 = arith.constant 0 : index
    %c0_64 = arith.constant 0 : index
    %160 = vector.load %arg16[%c0_63, %c0_64] : memref<1x128xf32, #tpu.memory_space<vmem>>, vector<1x128xf32>
    %161 = vector.broadcast %160 : vector<1x128xf32> to vector<16x128xf32>
    %162 = arith.addf %159, %161 : vector<16x128xf32>
    %cst_65 = arith.constant 0.000000e+00 : f32
    %163 = vector.broadcast %cst_65 : f32 to vector<16x128xf32>
    %164 = arith.maximumf %162, %163 : vector<16x128xf32>
    %165 = arith.truncf %164 : vector<16x128xf32> to vector<16x128xbf16>
    %c0_66 = arith.constant 0 : index
    %c0_67 = arith.constant 0 : index
    %166 = vector.load %arg17[%c0_66, %c0_67] : memref<128x32xbf16, #tpu.memory_space<vmem>>, vector<128x32xbf16>
    %cst_68 = arith.constant dense<0.000000e+00> : vector<16x32xf32>
    %167 = tpu.matmul %165, %166, %cst_68 {dimension_numbers = #tpu.dot_dimension_numbers<[1], [0], [0], [1], [0, 0, 1, 1], [], []>} : vector<16x128xbf16>, vector<128x32xbf16>, vector<16x32xf32> -> vector<16x32xf32>
    %c0_69 = arith.constant 0 : index
    %c0_70 = arith.constant 0 : index
    %168 = vector.load %arg18[%c0_69, %c0_70] : memref<1x32xf32, #tpu.memory_space<vmem>>, vector<1x32xf32>
    %169 = vector.broadcast %168 : vector<1x32xf32> to vector<16x32xf32>
    %170 = arith.addf %167, %169 : vector<16x32xf32>
    %171 = arith.addf %134, %170 : vector<16x32xf32>
    %172 = vector.shape_cast %171 : vector<16x32xf32> to vector<2x8x32xf32>
    %c0_71 = arith.constant 0 : index
    %c0_72 = arith.constant 0 : index
    %c0_73 = arith.constant 0 : index
    %173 = vector.load %arg19[%c0_71, %c0_72, %c0_73] : memref<2x8x32xf32, #tpu.memory_space<vmem>>, vector<2x8x32xf32>
    tpu.vector_store %arg19[%c0_71, %c0_72, %c0_73], %172 {strides = array<i32>} : memref<2x8x32xf32, #tpu.memory_space<vmem>>, vector<2x8x32xf32>,
    return
  }
  func.func @transform_0(%arg0: i32) -> (i32, i32, i32) {
    %c0_i32 = arith.constant 0 : i32
    %c0_i32_0 = arith.constant 0 : i32
    %c0_i32_1 = arith.constant 0 : i32
    return %arg0, %c0_i32, %c0_i32_0 : i32, i32, i32
  }
  func.func @transform_1(%arg0: i32) -> (i32, i32, i32) {
    %c0_i32 = arith.constant 0 : i32
    %c0_i32_0 = arith.constant 0 : i32
    %c0_i32_1 = arith.constant 0 : i32
    return %arg0, %c0_i32, %c0_i32_0 : i32, i32, i32
  }
  func.func @transform_2(%arg0: i32) -> (i32, i32) {
    %c0_i32 = arith.constant 0 : i32
    %c0_i32_0 = arith.constant 0 : i32
    %c0_i32_1 = arith.constant 0 : i32
    return %c0_i32, %c0_i32_0 : i32, i32
  }
  func.func @transform_3(%arg0: i32) -> (i32, i32) {
    %c0_i32 = arith.constant 0 : i32
    %c0_i32_0 = arith.constant 0 : i32
    %c0_i32_1 = arith.constant 0 : i32
    return %c0_i32, %c0_i32_0 : i32, i32
  }
  func.func @transform_4(%arg0: i32) -> (i32, i32) {
    %c0_i32 = arith.constant 0 : i32
    %c0_i32_0 = arith.constant 0 : i32
    %c0_i32_1 = arith.constant 0 : i32
    return %c0_i32, %c0_i32_0 : i32, i32
  }
  func.func @transform_5(%arg0: i32) -> (i32, i32) {
    %c0_i32 = arith.constant 0 : i32
    %c0_i32_0 = arith.constant 0 : i32
    %c0_i32_1 = arith.constant 0 : i32
    return %c0_i32, %c0_i32_0 : i32, i32
  }
  func.func @transform_6(%arg0: i32) -> (i32, i32) {
    %c0_i32 = arith.constant 0 : i32
    %c0_i32_0 = arith.constant 0 : i32
    %c0_i32_1 = arith.constant 0 : i32
    return %c0_i32, %c0_i32_0 : i32, i32
  }
  func.func @transform_7(%arg0: i32) -> (i32, i32) {
    %c0_i32 = arith.constant 0 : i32
    %c0_i32_0 = arith.constant 0 : i32
    %c0_i32_1 = arith.constant 0 : i32
    return %c0_i32, %c0_i32_0 : i32, i32
  }
  func.func @transform_8(%arg0: i32) -> (i32, i32) {
    %c0_i32 = arith.constant 0 : i32
    %c0_i32_0 = arith.constant 0 : i32
    %c0_i32_1 = arith.constant 0 : i32
    return %c0_i32, %c0_i32_0 : i32, i32
  }
  func.func @transform_9(%arg0: i32) -> (i32, i32) {
    %c0_i32 = arith.constant 0 : i32
    %c0_i32_0 = arith.constant 0 : i32
    %c0_i32_1 = arith.constant 0 : i32
    return %c0_i32, %c0_i32_0 : i32, i32
  }
  func.func @transform_10(%arg0: i32) -> (i32, i32) {
    %c0_i32 = arith.constant 0 : i32
    %c0_i32_0 = arith.constant 0 : i32
    %c0_i32_1 = arith.constant 0 : i32
    return %c0_i32, %c0_i32_0 : i32, i32
  }
  func.func @transform_11(%arg0: i32) -> (i32, i32) {
    %c0_i32 = arith.constant 0 : i32
    %c0_i32_0 = arith.constant 0 : i32
    %c0_i32_1 = arith.constant 0 : i32
    return %c0_i32, %c0_i32_0 : i32, i32
  }
  func.func @transform_12(%arg0: i32) -> (i32, i32) {
    %c0_i32 = arith.constant 0 : i32
    %c0_i32_0 = arith.constant 0 : i32
    %c0_i32_1 = arith.constant 0 : i32
    return %c0_i32, %c0_i32_0 : i32, i32
  }
  func.func @transform_13(%arg0: i32) -> (i32, i32) {
    %c0_i32 = arith.constant 0 : i32
    %c0_i32_0 = arith.constant 0 : i32
    %c0_i32_1 = arith.constant 0 : i32
    return %c0_i32, %c0_i32_0 : i32, i32
  }
  func.func @transform_14(%arg0: i32) -> (i32, i32) {
    %c0_i32 = arith.constant 0 : i32
    %c0_i32_0 = arith.constant 0 : i32
    %c0_i32_1 = arith.constant 0 : i32
    return %c0_i32, %c0_i32_0 : i32, i32
  }
  func.func @transform_15(%arg0: i32) -> (i32, i32) {
    %c0_i32 = arith.constant 0 : i32
    %c0_i32_0 = arith.constant 0 : i32
    %c0_i32_1 = arith.constant 0 : i32
    return %c0_i32, %c0_i32_0 : i32, i32
  }
  func.func @transform_16(%arg0: i32) -> (i32, i32) {
    %c0_i32 = arith.constant 0 : i32
    %c0_i32_0 = arith.constant 0 : i32
    %c0_i32_1 = arith.constant 0 : i32
    return %c0_i32, %c0_i32_0 : i32, i32
  }
  func.func @transform_17(%arg0: i32) -> (i32, i32) {
    %c0_i32 = arith.constant 0 : i32
    %c0_i32_0 = arith.constant 0 : i32
    %c0_i32_1 = arith.constant 0 : i32
    return %c0_i32, %c0_i32_0 : i32, i32
  }
  func.func @transform_18(%arg0: i32) -> (i32, i32, i32) {
    %c0_i32 = arith.constant 0 : i32
    %c0_i32_0 = arith.constant 0 : i32
    %c0_i32_1 = arith.constant 0 : i32
    return %arg0, %c0_i32, %c0_i32_0 : i32, i32, i32
  }
}

</mosaic_0001>

<llo_original>
// kernel: tpu_custom_call.1
$region0: #{tpu_custom_call.1}
  #allocation0 [shape = 'u32[]', space=smem, size = 0x4, offset = 0x4, fixed_abs, tag = 'smem constant byte address 0x4 - core index']
  #allocation1 [shape = 'u32[144,128]{1,0:T(1,128)}', space=vmem, size = 0x12000, scoped, tag = 'internal scratch']
  %s0 = inlined_call_operand.vmem [shape: f32[2,8,32], index: 0, kind: input, shape index: {}]
  %s1 = inlined_call_operand.hbm [shape: f32[2,1,8], index: 1, kind: input, shape index: {}]
  %s2 = inlined_call_operand.vmem [shape: f32[1,32], index: 2, kind: input, shape index: {}]
  %s3 = inlined_call_operand.vmem [shape: f32[1,32], index: 3, kind: input, shape index: {}]
  %s4 = inlined_call_operand.vmem [shape: bf16[32,32], index: 4, kind: input, shape index: {}]
  %s5 = inlined_call_operand.vmem [shape: f32[1,32], index: 5, kind: input, shape index: {}]
  %s6 = inlined_call_operand.vmem [shape: bf16[32,32], index: 6, kind: input, shape index: {}]
  %s7 = inlined_call_operand.vmem [shape: f32[1,32], index: 7, kind: input, shape index: {}]
  %s8 = inlined_call_operand.vmem [shape: bf16[32,32], index: 8, kind: input, shape index: {}]
  %s9 = inlined_call_operand.vmem [shape: f32[1,32], index: 9, kind: input, shape index: {}]
  %s10 = inlined_call_operand.vmem [shape: bf16[32,32], index: 10, kind: input, shape index: {}]
  %s11 = inlined_call_operand.vmem [shape: f32[1,32], index: 11, kind: input, shape index: {}]
  %s12 = inlined_call_operand.vmem [shape: f32[1,32], index: 12, kind: input, shape index: {}]
  %s13 = inlined_call_operand.vmem [shape: f32[1,32], index: 13, kind: input, shape index: {}]
  %s14 = inlined_call_operand.hbm [shape: bf16[32,128], index: 14, kind: input, shape index: {}]
  %s15 = inlined_call_operand.vmem [shape: f32[1,128], index: 15, kind: input, shape index: {}]
  %s16 = inlined_call_operand.vmem [shape: bf16[128,32], index: 16, kind: input, shape index: {}]
  %s17 = inlined_call_operand.vmem [shape: f32[1,32], index: 17, kind: input, shape index: {}]
  %s18 = inlined_call_operand.hbm [shape: f32[2,8,32], index: 18, kind: output, shape index: {}]
  %s19 = sld [smem:[#allocation0]]
  $region90: #{tpu_custom_call.1} parent=0
    _
  %s21 = ssub.s32 1, %s19
  %s22 = scalar_select 0, %s21, %s19
  $region1: #{tpu_custom_call.1} parent=0
    #allocation2 [shape = 'u8[1024]{0}', space=vmem, size = 0x400, scoped, tag = 'input window, operand 1, single buffered']
    #allocation3 [shape = 's32[1]{0}', space=sflag, size = 0x4, scoped, tag = 'scoped memory for tpu_custom_call.1']
    #allocation4 [shape = 's32[1]{0}', space=sflag, size = 0x4, scoped, tag = 'scoped memory for tpu_custom_call.1']
    #allocation5 [shape = 'u8[8192]{0}', space=vmem, size = 0x2000, scoped, tag = 'input window, operand 14, single buffered']
    #allocation6 [shape = 's32[1]{0}', space=sflag, size = 0x4, scoped, tag = 'scoped memory for tpu_custom_call.1']
    #allocation7 [shape = 'u8[8192]{0}', space=vmem, size = 0x2000, scoped, tag = 'output window, operand 0, single buffered']
    %23 = vsyncpa [#allocation3], 0
    %24 = vsyncpa [#allocation6], 0
    %25 = vsyncpa [#allocation4], 0
    // Predicated region
    $region2: #{tpu_custom_call.1} parent=1 // pred_check
      _
    $region3: #{tpu_custom_call.1} parent=1 // pred_check_branch
      %27 = sbr.rel (0) target = $region5
    $region4: #{tpu_custom_call.1} parent=1 // pred_region
      _
    $region5: #{tpu_custom_call.1} parent=1 // pred_fallthru
      _
    // Predicated region
    $region6: #{tpu_custom_call.1} parent=1 // pred_check
      _
    $region7: #{tpu_custom_call.1} parent=1 // pred_check_branch
      %29 = sbr.rel (0) target = $region9
    $region8: #{tpu_custom_call.1} parent=1 // pred_region
      %s31 = ssub.s32 32, 32
      %32 = vsyncadd [#allocation3], %s31
      %s33 = sshll.u32 [#allocation2], 4
      %s34 = int_to_ptr.vmem [resolvable:$true] %s33
      %39 = dma.hbm_to_vmem [thread:$0]  %s1, 32, %s34, [#allocation3], 16, 16, 1
    $region9: #{tpu_custom_call.1} parent=1 // pred_fallthru
      _
    // Predicated region
    $region10: #{tpu_custom_call.1} parent=1 // pred_check
      _
    $region11: #{tpu_custom_call.1} parent=1 // pred_check_branch
      %41 = sbr.rel (0) target = $region13
    $region12: #{tpu_custom_call.1} parent=1 // pred_region
      _
    $region13: #{tpu_custom_call.1} parent=1 // pred_fallthru
      _
    // Predicated region
    $region14: #{tpu_custom_call.1} parent=1 // pred_check
      _
    $region15: #{tpu_custom_call.1} parent=1 // pred_check_branch
      %43 = sbr.rel (0) target = $region17
    $region16: #{tpu_custom_call.1} parent=1 // pred_region
      _
    $region17: #{tpu_custom_call.1} parent=1 // pred_fallthru
      _
    // Predicated region
    $region18: #{tpu_custom_call.1} parent=1 // pred_check
      _
    $region19: #{tpu_custom_call.1} parent=1 // pred_check_branch
      %45 = sbr.rel (0) target = $region21
    $region20: #{tpu_custom_call.1} parent=1 // pred_region
      _
    $region21: #{tpu_custom_call.1} parent=1 // pred_fallthru
      _
    // Predicated region
    $region22: #{tpu_custom_call.1} parent=1 // pred_check
      _
    $region23: #{tpu_custom_call.1} parent=1 // pred_check_branch
      %47 = sbr.rel (0) target = $region25
    $region24: #{tpu_custom_call.1} parent=1 // pred_region
      _
    $region25: #{tpu_custom_call.1} parent=1 // pred_fallthru
      _
    // Predicated region
    $region26: #{tpu_custom_call.1} parent=1 // pred_check
      _
    $region27: #{tpu_custom_call.1} parent=1 // pred_check_branch
      %49 = sbr.rel (0) target = $region29
    $region28: #{tpu_custom_call.1} parent=1 // pred_region
      _
    $region29: #{tpu_custom_call.1} parent=1 // pred_fallthru
      _
    // Predicated region
    $region30: #{tpu_custom_call.1} parent=1 // pred_check
      _
    $region31: #{tpu_custom_call.1} parent=1 // pred_check_branch
      %51 = sbr.rel (0) target = $region33
    $region32: #{tpu_custom_call.1} parent=1 // pred_region
      _
    $region33: #{tpu_custom_call.1} parent=1 // pred_fallthru
      _
    // Predicated region
    $region34: #{tpu_custom_call.1} parent=1 // pred_check
      _
    $region35: #{tpu_custom_call.1} parent=1 // pred_check_branch
      %53 = sbr.rel (0) target = $region37
    $region36: #{tpu_custom_call.1} parent=1 // pred_region
      _
    $region37: #{tpu_custom_call.1} parent=1 // pred_fallthru
      _
    // Predicated region
    $region38: #{tpu_custom_call.1} parent=1 // pred_check
      _
    $region39: #{tpu_custom_call.1} parent=1 // pred_check_branch
      %55 = sbr.rel (0) target = $region41
    $region40: #{tpu_custom_call.1} parent=1 // pred_region
      _
    $region41: #{tpu_custom_call.1} parent=1 // pred_fallthru
      _
    // Predicated region
    $region42: #{tpu_custom_call.1} parent=1 // pred_check
      _
    $region43: #{tpu_custom_call.1} parent=1 // pred_check_branch
      %57 = sbr.rel (0) target = $region45
    $region44: #{tpu_custom_call.1} parent=1 // pred_region
      _
    $region45: #{tpu_custom_call.1} parent=1 // pred_fallthru
      _
    // Predicated region
    $region46: #{tpu_custom_call.1} parent=1 // pred_check
      _
    $region47: #{tpu_custom_call.1} parent=1 // pred_check_branch
      %59 = sbr.rel (0) target = $region49
    $region48: #{tpu_custom_call.1} parent=1 // pred_region
      _
    $region49: #{tpu_custom_call.1} parent=1 // pred_fallthru
      _
    // Predicated region
    $region50: #{tpu_custom_call.1} parent=1 // pred_check
      _
    $region51: #{tpu_custom_call.1} parent=1 // pred_check_branch
      %61 = sbr.rel (0) target = $region53
    $region52: #{tpu_custom_call.1} parent=1 // pred_region
      _
    $region53: #{tpu_custom_call.1} parent=1 // pred_fallthru
      _
    // Predicated region
    $region54: #{tpu_custom_call.1} parent=1 // pred_check
      _
    $region55: #{tpu_custom_call.1} parent=1 // pred_check_branch
      %63 = sbr.rel (0) target = $region57
    $region56: #{tpu_custom_call.1} parent=1 // pred_region
      _
    $region57: #{tpu_custom_call.1} parent=1 // pred_fallthru
      _
    // Predicated region
    $region58: #{tpu_custom_call.1} parent=1 // pred_check
      _
    $region59: #{tpu_custom_call.1} parent=1 // pred_check_branch
      %65 = sbr.rel (0) target = $region61
    $region60: #{tpu_custom_call.1} parent=1 // pred_region
      %s67 = ssub.s32 256, 256
      %68 = vsyncadd [#allocation6], %s67
      %s69 = sshll.u32 [#allocation5], 4
      %s70 = int_to_ptr.vmem [resolvable:$true] %s69
      %75 = dma.hbm_to_vmem [thread:$0]  %s14, 256, %s70, [#allocation6], 64, 64, 4
    $region61: #{tpu_custom_call.1} parent=1 // pred_fallthru
      _
    // Predicated region
    $region62: #{tpu_custom_call.1} parent=1 // pred_check
      _
    $region63: #{tpu_custom_call.1} parent=1 // pred_check_branch
      %77 = sbr.rel (0) target = $region65
    $region64: #{tpu_custom_call.1} parent=1 // pred_region
      _
    $region65: #{tpu_custom_call.1} parent=1 // pred_fallthru
      _
    // Predicated region
    $region66: #{tpu_custom_call.1} parent=1 // pred_check
      _
    $region67: #{tpu_custom_call.1} parent=1 // pred_check_branch
      %79 = sbr.rel (0) target = $region69
    $region68: #{tpu_custom_call.1} parent=1 // pred_region
      _
    $region69: #{tpu_custom_call.1} parent=1 // pred_fallthru
      _
    // Predicated region
    $region70: #{tpu_custom_call.1} parent=1 // pred_check
      _
    $region71: #{tpu_custom_call.1} parent=1 // pred_check_branch
      %81 = sbr.rel (0) target = $region73
    $region72: #{tpu_custom_call.1} parent=1 // pred_region
      _
    $region73: #{tpu_custom_call.1} parent=1 // pred_fallthru
      _
    // Predicated region
    $region74: #{tpu_custom_call.1} parent=1 // pred_check
      _
    $region75: #{tpu_custom_call.1} parent=1 // pred_check_branch
      %83 = sbr.rel (0) target = $region77
    $region76: #{tpu_custom_call.1} parent=1 // pred_region
      %84 = dma.done [#allocation3], 32
    $region77: #{tpu_custom_call.1} parent=1 // pred_fallthru
      _
    // Predicated region
    $region78: #{tpu_custom_call.1} parent=1 // pred_check
      _
    $region79: #{tpu_custom_call.1} parent=1 // pred_check_branch
      %86 = sbr.rel (0) target = $region81
    $region80: #{tpu_custom_call.1} parent=1 // pred_region
      %87 = dma.done [#allocation6], 256
    $region81: #{tpu_custom_call.1} parent=1 // pred_fallthru
      _
    %v89 = vld [vmem:[%s0] sm:$0xff]
    %v90 = vld [vmem:[%s0 + $0x8] sm:$0xff]
    %v91 = vld [vmem:[#allocation2] sm:$0x1]
    %v92 = vld [vmem:[#allocation2 + $0x1] sm:$0x1]
    %v93 = vsub.f32 %v91, 1.0
    %v94 = vsub.f32 %v92, 1.0
    %v95 = vmul.f32 %v93, 1e+09
    %v96 = vmul.f32 %v94, 1e+09
    %v97 = vld [vmem:[%s2] sm:$0x1]
    %v98 = vld [vmem:[%s3] sm:$0x1]
    %vm99 = vcmask 261120
    %v100 = vsel %vm99, %v89, 0.0
    %101 = vadd.xlane.f32.xlu0 %v100
    %v102 = vpop.xlane.xlu0 %101
    %v103 = vsel %vm99, %v90, 0.0
    %104 = vadd.xlane.f32.xlu0 %v103
    %v105 = vpop.xlane.xlu0 %104
    %v106 = vrcp.pop 32.0
    %v107 = vmul.f32 %v102, %v106
    %v108 = vmul.f32 %v105, %v106
    %v109 = vsub.f32 %v89, %v107
    %v110 = vsub.f32 %v90, %v108
    %v111 = vmul.f32 %v109, %v109
    %v112 = vmul.f32 %v110, %v110
    %v113 = vsel %vm99, %v111, 0.0
    %114 = vadd.xlane.f32.xlu0 %v113
    %v115 = vpop.xlane.xlu0 %114
    %v116 = vsel %vm99, %v112, 0.0
    %117 = vadd.xlane.f32.xlu0 %v116
    %v118 = vpop.xlane.xlu0 %117
    %v119 = vmul.f32 %v115, 0.032258064
    %v120 = vmul.f32 %v118, 0.032258064
    %v122 = vlaneseq
    %v123 = vshrl.u32 %v122, 7
    %v124 = vsub.s32 0, %v123
    %v125 = vrot.slane %v97, %v124
    %v127 = vmul.f32 %v125, %v109
    %v128 = vmul.f32 %v125, %v110
    %v129 = vrsqrt.pop %v119
    %v130 = vmul.f32 %v119, %v129
    %vm131 = vcmp.eq.f32.partialorder %v119, inf
    %v132 = vsel %vm131, %v119, %v130
    %vm133 = vcmp.eq.f32.partialorder %v119, 0.0
    %v134 = vand.u32 %v119, 2147483648
    %v135 = vsel %vm133, %v134, %v132
    %v136 = vrsqrt.pop %v120
    %v137 = vmul.f32 %v120, %v136
    %vm138 = vcmp.eq.f32.partialorder %v120, inf
    %v139 = vsel %vm138, %v120, %v137
    %vm140 = vcmp.eq.f32.partialorder %v120, 0.0
    %v141 = vand.u32 %v120, 2147483648
    %v142 = vsel %vm140, %v141, %v139
    %v143 = vadd.f32 %v135, 1e-06
    %v144 = vadd.f32 %v142, 1e-06
    %v145 = vrcp.pop %v143
    %v146 = vmul.f32 %v127, %v145
    %v147 = vrcp.pop %v144
    %v148 = vmul.f32 %v128, %v147
    %v150 = vlaneseq
    %v151 = vshrl.u32 %v150, 7
    %v152 = vsub.s32 0, %v151
    %v153 = vrot.slane %v98, %v152
    %v155 = vadd.f32 %v146, %v153
    %v156 = vadd.f32 %v148, %v153
    %v157 = vpack.c.bf16 %v156, %v155
    %v158 = vld [vmem:[%s4] sm:$0xf]
    %v159 = vld [vmem:[%s4 + $0x4] sm:$0xf]
    %v160 = vld [vmem:[%s4 + $0x8] sm:$0xf]
    %v161 = vld [vmem:[%s4 + $0xc] sm:$0xf]
    %v162 = vld [vmem:[%s5] sm:$0x1]
    %v164 = vlaneseq
    %v165 = vshrl.u32 %v164, 7
    %v166 = vsub.s32 0, %v165
    %v167 = vrot.slane %v162, %v166
    %v173 = vunpack.c.l.b16 %v158
    %v174 = vunpack.c.l.b16 %v159
    %v175 = vunpack.c.l.b16 %v160
    %v176 = vunpack.c.l.b16 %v161
    %v177 = vpack.c.b16 %v174, %v173
    %v178 = vpack.c.b16 %v176, %v175
    %v182 = vsel %vm99, %v157, 0
    %184 = vmatprep.subr.bf16.mxu0 0
    %185 = vmatpush1.bf16.msra.mxu0 0
    %186 = vmatprep.subr.bf16.mxu0 0
    %187 = vmatpush1.bf16.msra.mxu0 0
    %188 = vmatprep.subr.bf16.mxu0 0
    %189 = vmatpush1.bf16.msra.mxu0 0
    %190 = vmatprep.subr.bf16.mxu0 0
    %191 = vmatpush1.bf16.msra.mxu0 0
    %192 = vmatprep.subr.bf16.mxu0 0
    %193 = vmatpush1.bf16.msra.mxu0 0
    %194 = vmatprep.subr.bf16.mxu0 0
    %195 = vmatpush1.bf16.msra.mxu0 0
    %196 = vmatprep.subr.bf16.mxu0 0
    %197 = vmatpush1.bf16.msra.mxu0 %v178
    %198 = vmatprep.subr.bf16.mxu0 0
    %199 = vmatpush1.bf16.msra.mxu0 %v177
    %200 = vmatprep.subr.bf16.mxu0 0
    %201 = vmatpush2.bf16.msra.mxu0 0
    %202 = vmatprep.subr.bf16.mxu0 0
    %203 = vmatpush2.bf16.msra.mxu0 0
    %204 = vmatprep.subr.bf16.mxu0 0
    %205 = vmatpush2.bf16.msra.mxu0 0
    %206 = vmatprep.subr.bf16.mxu0 0
    %207 = vmatpush2.bf16.msra.mxu0 0
    %208 = vmatprep.subr.bf16.mxu0 0
    %209 = vmatpush2.bf16.msra.mxu0 0
    %210 = vmatprep.subr.bf16.mxu0 0
    %211 = vmatpush2.bf16.msra.mxu0 0
    %212 = vmatprep.subr.bf16.mxu0 0
    %213 = vmatpush2.bf16.msra.mxu0 0
    %214 = vmatprep.subr.bf16.mxu0 0
    %215 = vmatpush2.bf16.msra.mxu0 0
    %216 = vmatprep.mubr.bf16.mxu0 0
    %217 = vmatmul.mubr.bf16.gmra.mxu0 %v182
    %v218 = vpop.f32.mrf.mxu0
    %v219 = vadd.f32 %v167, %v218
    %v220 = vpop.f32.mrf.mxu0
    %v221 = vpop.f32.mrf.mxu0
    %v222 = vadd.f32 %v167, %v221
    %v223 = vpop.f32.mrf.mxu0
    %224 = vdwg.mxu0
    %v225 = vld [vmem:[%s6] sm:$0xf]
    %v226 = vld [vmem:[%s6 + $0x4] sm:$0xf]
    %v227 = vld [vmem:[%s6 + $0x8] sm:$0xf]
    %v228 = vld [vmem:[%s6 + $0xc] sm:$0xf]
    %v229 = vld [vmem:[%s7] sm:$0x1]
    %v231 = vlaneseq
    %v232 = vshrl.u32 %v231, 7
    %v233 = vsub.s32 0, %v232
    %v234 = vrot.slane %v229, %v233
    %v240 = vunpack.c.l.b16 %v225
    %v241 = vunpack.c.l.b16 %v226
    %v242 = vunpack.c.l.b16 %v227
    %v243 = vunpack.c.l.b16 %v228
    %v244 = vpack.c.b16 %v241, %v240
    %v245 = vpack.c.b16 %v243, %v242
    %248 = vmatprep.subr.bf16.mxu0 0
    %249 = vmatpush1.bf16.msra.mxu0 0
    %250 = vmatprep.subr.bf16.mxu0 0
    %251 = vmatpush1.bf16.msra.mxu0 0
    %252 = vmatprep.subr.bf16.mxu0 0
    %253 = vmatpush1.bf16.msra.mxu0 0
    %254 = vmatprep.subr.bf16.mxu0 0
    %255 = vmatpush1.bf16.msra.mxu0 0
    %256 = vmatprep.subr.bf16.mxu0 0
    %257 = vmatpush1.bf16.msra.mxu0 0
    %258 = vmatprep.subr.bf16.mxu0 0
    %259 = vmatpush1.bf16.msra.mxu0 0
    %260 = vmatprep.subr.bf16.mxu0 0
    %261 = vmatpush1.bf16.msra.mxu0 %v245
    %262 = vmatprep.subr.bf16.mxu0 0
    %263 = vmatpush1.bf16.msra.mxu0 %v244
    %264 = vmatprep.subr.bf16.mxu0 0
    %265 = vmatpush2.bf16.msra.mxu0 0
    %266 = vmatprep.subr.bf16.mxu0 0
    %267 = vmatpush2.bf16.msra.mxu0 0
    %268 = vmatprep.subr.bf16.mxu0 0
    %269 = vmatpush2.bf16.msra.mxu0 0
    %270 = vmatprep.subr.bf16.mxu0 0
    %271 = vmatpush2.bf16.msra.mxu0 0
    %272 = vmatprep.subr.bf16.mxu0 0
    %273 = vmatpush2.bf16.msra.mxu0 0
    %274 = vmatprep.subr.bf16.mxu0 0
    %275 = vmatpush2.bf16.msra.mxu0 0
    %276 = vmatprep.subr.bf16.mxu0 0
    %277 = vmatpush2.bf16.msra.mxu0 0
    %278 = vmatprep.subr.bf16.mxu0 0
    %279 = vmatpush2.bf16.msra.mxu0 0
    %280 = vmatprep.mubr.bf16.mxu0 0
    %281 = vmatmul.mubr.bf16.gmra.mxu0 %v182
    %v282 = vpop.f32.mrf.mxu0
    %v283 = vadd.f32 %v234, %v282
    %v284 = vpop.f32.mrf.mxu0
    %v285 = vpop.f32.mrf.mxu0
    %v286 = vadd.f32 %v234, %v285
    %v287 = vpop.f32.mrf.mxu0
    %288 = vdwg.mxu0
    %v289 = vld [vmem:[%s8] sm:$0xf]
    %v290 = vld [vmem:[%s8 + $0x4] sm:$0xf]
    %v291 = vld [vmem:[%s8 + $0x8] sm:$0xf]
    %v292 = vld [vmem:[%s8 + $0xc] sm:$0xf]
    %v293 = vld [vmem:[%s9] sm:$0x1]
    %v295 = vlaneseq
    %v296 = vshrl.u32 %v295, 7
    %v297 = vsub.s32 0, %v296
    %v298 = vrot.slane %v293, %v297
    %v304 = vunpack.c.l.b16 %v289
    %v305 = vunpack.c.l.b16 %v290
    %v306 = vunpack.c.l.b16 %v291
    %v307 = vunpack.c.l.b16 %v292
    %v308 = vpack.c.b16 %v305, %v304
    %v309 = vpack.c.b16 %v307, %v306
    %312 = vmatprep.subr.bf16.mxu0 0
    %313 = vmatpush1.bf16.msra.mxu0 0
    %314 = vmatprep.subr.bf16.mxu0 0
    %315 = vmatpush1.bf16.msra.mxu0 0
    %316 = vmatprep.subr.bf16.mxu0 0
    %317 = vmatpush1.bf16.msra.mxu0 0
    %318 = vmatprep.subr.bf16.mxu0 0
    %319 = vmatpush1.bf16.msra.mxu0 0
    %320 = vmatprep.subr.bf16.mxu0 0
    %321 = vmatpush1.bf16.msra.mxu0 0
    %322 = vmatprep.subr.bf16.mxu0 0
    %323 = vmatpush1.bf16.msra.mxu0 0
    %324 = vmatprep.subr.bf16.mxu0 0
    %325 = vmatpush1.bf16.msra.mxu0 %v309
    %326 = vmatprep.subr.bf16.mxu0 0
    %327 = vmatpush1.bf16.msra.mxu0 %v308
    %328 = vmatprep.subr.bf16.mxu0 0
    %329 = vmatpush2.bf16.msra.mxu0 0
    %330 = vmatprep.subr.bf16.mxu0 0
    %331 = vmatpush2.bf16.msra.mxu0 0
    %332 = vmatprep.subr.bf16.mxu0 0
    %333 = vmatpush2.bf16.msra.mxu0 0
    %334 = vmatprep.subr.bf16.mxu0 0
    %335 = vmatpush2.bf16.msra.mxu0 0
    %336 = vmatprep.subr.bf16.mxu0 0
    %337 = vmatpush2.bf16.msra.mxu0 0
    %338 = vmatprep.subr.bf16.mxu0 0
    %339 = vmatpush2.bf16.msra.mxu0 0
    %340 = vmatprep.subr.bf16.mxu0 0
    %341 = vmatpush2.bf16.msra.mxu0 0
    %342 = vmatprep.subr.bf16.mxu0 0
    %343 = vmatpush2.bf16.msra.mxu0 0
    %344 = vmatprep.mubr.bf16.mxu0 0
    %345 = vmatmul.mubr.bf16.gmra.mxu0 %v182
    %v346 = vpop.f32.mrf.mxu0
    %v347 = vadd.f32 %v298, %v346
    %v348 = vpop.f32.mrf.mxu0
    %v349 = vpop.f32.mrf.mxu0
    %v350 = vadd.f32 %v298, %v349
    %v351 = vpop.f32.mrf.mxu0
    %352 = vdwg.mxu0
    %v353 = vpack.c.bf16 %v222, %v219
    %v355 = vunpack.c.l.b16 %v353
    %v356 = vunpack.c.h.b16 %v353
    %v357 = vpack.c.b16 %v355, %v355
    %v358 = vpack.c.b16 %v356, %v356
    %v359 = vpack.c.bf16 %v286, %v283
    %v361 = vunpack.c.l.b16 %v359
    %v362 = vunpack.c.h.b16 %v359
    %v363 = vpack.c.b16 %v361, %v361
    %v364 = vpack.c.b16 %v362, %v362
    %v365 = vpack.c.bf16 %v350, %v347
    %v367 = vunpack.c.l.b16 %v365
    %v368 = vunpack.c.h.b16 %v365
    %v369 = vpack.c.b16 %v367, %v367
    %v370 = vpack.c.b16 %v368, %v368
    %v373 = vlaneseq
    %v374 = vshrl.u32 %v373, 7
    %v375 = vsub.s32 0, %v374
    %v376 = vrot.slane %v95, %v375
    %v377 = vlaneseq
    %v378 = vshrl.u32 %v377, 7
    %v379 = vsub.s32 0, %v378
    %v380 = vrot.slane %v96, %v379
    %vm383 = vcmask 64512
    %v385 = vsel %vm383, %v357, 0
    %v388 = vsel %vm383, %v363, 0
    %390 = vmatprep.subr.bf16.mxu0 0
    %391 = vmatpush1.bf16.xpose.msra.mxu0 0
    %392 = vmatprep.subr.bf16.mxu0 0
    %393 = vmatpush1.bf16.xpose.msra.mxu0 0
    %394 = vmatprep.subr.bf16.mxu0 0
    %395 = vmatpush1.bf16.xpose.msra.mxu0 0
    %396 = vmatprep.subr.bf16.mxu0 0
    %397 = vmatpush1.bf16.xpose.msra.mxu0 0
    %398 = vmatprep.subr.bf16.mxu0 0
    %399 = vmatpush1.bf16.xpose.msra.mxu0 0
    %400 = vmatprep.subr.bf16.mxu0 0
    %401 = vmatpush1.bf16.xpose.msra.mxu0 0
    %402 = vmatprep.subr.bf16.mxu0 0
    %403 = vmatpush1.bf16.xpose.msra.mxu0 0
    %404 = vmatprep.subr.bf16.mxu0 0
    %405 = vmatpush1.bf16.xpose.msra.mxu0 %v388
    %406 = vmatprep.subr.bf16.mxu0 0
    %407 = vmatpush2.bf16.xpose.msra.mxu0 0
    %408 = vmatprep.subr.bf16.mxu0 0
    %409 = vmatpush2.bf16.xpose.msra.mxu0 0
    %410 = vmatprep.subr.bf16.mxu0 0
    %411 = vmatpush2.bf16.xpose.msra.mxu0 0
    %412 = vmatprep.subr.bf16.mxu0 0
    %413 = vmatpush2.bf16.xpose.msra.mxu0 0
    %414 = vmatprep.subr.bf16.mxu0 0
    %415 = vmatpush2.bf16.xpose.msra.mxu0 0
    %416 = vmatprep.subr.bf16.mxu0 0
    %417 = vmatpush2.bf16.xpose.msra.mxu0 0
    %418 = vmatprep.subr.bf16.mxu0 0
    %419 = vmatpush2.bf16.xpose.msra.mxu0 0
    %420 = vmatprep.subr.bf16.mxu0 0
    %421 = vmatpush2.bf16.xpose.msra.mxu0 0
    %422 = vmatprep.mubr.bf16.mxu0 0
    %423 = vmatmul.mubr.bf16.gmra.mxu0 %v385
    %v424 = vpop.f32.mrf.mxu0
    %v425 = vadd.f32 %v376, %v424
    %v426 = vpop.f32.mrf.mxu0
    %v427 = vpop.f32.mrf.mxu0
    %v428 = vpop.f32.mrf.mxu0
    %429 = vdwg.mxu0
    %v431 = vsel %vm383, %v358, 0
    %v434 = vsel %vm383, %v364, 0
    %436 = vmatprep.subr.bf16.mxu0 0
    %437 = vmatpush1.bf16.xpose.msra.mxu0 0
    %438 = vmatprep.subr.bf16.mxu0 0
    %439 = vmatpush1.bf16.xpose.msra.mxu0 0
    %440 = vmatprep.subr.bf16.mxu0 0
    %441 = vmatpush1.bf16.xpose.msra.mxu0 0
    %442 = vmatprep.subr.bf16.mxu0 0
    %443 = vmatpush1.bf16.xpose.msra.mxu0 0
    %444 = vmatprep.subr.bf16.mxu0 0
    %445 = vmatpush1.bf16.xpose.msra.mxu0 0
    %446 = vmatprep.subr.bf16.mxu0 0
    %447 = vmatpush1.bf16.xpose.msra.mxu0 0
    %448 = vmatprep.subr.bf16.mxu0 0
    %449 = vmatpush1.bf16.xpose.msra.mxu0 0
    %450 = vmatprep.subr.bf16.mxu0 0
    %451 = vmatpush1.bf16.xpose.msra.mxu0 %v434
    %452 = vmatprep.subr.bf16.mxu0 0
    %453 = vmatpush2.bf16.xpose.msra.mxu0 0
    %454 = vmatprep.subr.bf16.mxu0 0
    %455 = vmatpush2.bf16.xpose.msra.mxu0 0
    %456 = vmatprep.subr.bf16.mxu0 0
    %457 = vmatpush2.bf16.xpose.msra.mxu0 0
    %458 = vmatprep.subr.bf16.mxu0 0
    %459 = vmatpush2.bf16.xpose.msra.mxu0 0
    %460 = vmatprep.subr.bf16.mxu0 0
    %461 = vmatpush2.bf16.xpose.msra.mxu0 0
    %462 = vmatprep.subr.bf16.mxu0 0
    %463 = vmatpush2.bf16.xpose.msra.mxu0 0
    %464 = vmatprep.subr.bf16.mxu0 0
    %465 = vmatpush2.bf16.xpose.msra.mxu0 0
    %466 = vmatprep.subr.bf16.mxu0 0
    %467 = vmatpush2.bf16.xpose.msra.mxu0 0
    %468 = vmatprep.mubr.bf16.mxu0 0
    %469 = vmatmul.mubr.bf16.gmra.mxu0 %v431
    %v470 = vpop.f32.mrf.mxu0
    %v471 = vadd.f32 %v380, %v470
    %v472 = vpop.f32.mrf.mxu0
    %v473 = vpop.f32.mrf.mxu0
    %v474 = vpop.f32.mrf.mxu0
    %475 = vdwg.mxu0
    %v476 = vsel %vm383, %v425, -inf
    %477 = vmax.xlane.f32.xlu0 %v476
    %v478 = vpop.xlane.xlu0 %477
    %v479 = vsel %vm383, %v471, -inf
    %480 = vmax.xlane.f32.xlu0 %v479
    %v481 = vpop.xlane.xlu0 %480
    %v482 = vsub.f32 %v425, %v478
    %v483 = vsub.f32 %v471, %v481
    %v484 = vmul.f32 %v482, 1.442695
    %v485 = vpow.pop %v484
    %v486 = vmul.f32 %v483, 1.442695
    %v487 = vpow.pop %v486
    %v488 = vsel %vm383, %v485, 0.0
    %489 = vadd.xlane.f32.xlu0 %v488
    %v490 = vpop.xlane.xlu0 %489
    %v491 = vsel %vm383, %v487, 0.0
    %492 = vadd.xlane.f32.xlu0 %v491
    %v493 = vpop.xlane.xlu0 %492
    %v494 = vrcp.pop %v490
    %v495 = vrcp.pop %v493
    %v496 = vmul.f32 %v485, %v494
    %v497 = vmul.f32 %v487, %v495
    %v498 = vpack.c.bf16 %v496, %v496
    %v499 = vpack.c.bf16 %v497, %v497
    %v501 = vsel %vm383, %v498, 0
    %vm503 = vcmask 1043456
    %v505 = vsel %vm503, %v369, 0
    %507 = vmatprep.subr.bf16.mxu0 0
    %508 = vmatpush1.bf16.msra.mxu0 0
    %509 = vmatprep.subr.bf16.mxu0 0
    %510 = vmatpush1.bf16.msra.mxu0 0
    %511 = vmatprep.subr.bf16.mxu0 0
    %512 = vmatpush1.bf16.msra.mxu0 0
    %513 = vmatprep.subr.bf16.mxu0 0
    %514 = vmatpush1.bf16.msra.mxu0 0
    %515 = vmatprep.subr.bf16.mxu0 0
    %516 = vmatpush1.bf16.msra.mxu0 0
    %517 = vmatprep.subr.bf16.mxu0 0
    %518 = vmatpush1.bf16.msra.mxu0 0
    %519 = vmatprep.subr.bf16.mxu0 0
    %520 = vmatpush1.bf16.msra.mxu0 0
    %521 = vmatprep.subr.bf16.mxu0 0
    %522 = vmatpush1.bf16.msra.mxu0 %v505
    %523 = vmatprep.subr.bf16.mxu0 0
    %524 = vmatpush2.bf16.msra.mxu0 0
    %525 = vmatprep.subr.bf16.mxu0 0
    %526 = vmatpush2.bf16.msra.mxu0 0
    %527 = vmatprep.subr.bf16.mxu0 0
    %528 = vmatpush2.bf16.msra.mxu0 0
    %529 = vmatprep.subr.bf16.mxu0 0
    %530 = vmatpush2.bf16.msra.mxu0 0
    %531 = vmatprep.subr.bf16.mxu0 0
    %532 = vmatpush2.bf16.msra.mxu0 0
    %533 = vmatprep.subr.bf16.mxu0 0
    %534 = vmatpush2.bf16.msra.mxu0 0
    %535 = vmatprep.subr.bf16.mxu0 0
    %536 = vmatpush2.bf16.msra.mxu0 0
    %537 = vmatprep.subr.bf16.mxu0 0
    %538 = vmatpush2.bf16.msra.mxu0 0
    %539 = vmatprep.mubr.bf16.mxu0 0
    %540 = vmatmul.mubr.bf16.gmra.mxu0 %v501
    %v541 = vpop.f32.mrf.mxu0
    %v542 = vadd.f32 0.0, %v541
    %v543 = vpop.f32.mrf.mxu0
    %v544 = vpop.f32.mrf.mxu0
    %v545 = vpop.f32.mrf.mxu0
    %546 = vdwg.mxu0
    %v548 = vsel %vm383, %v499, 0
    %v551 = vsel %vm503, %v370, 0
    %553 = vmatprep.subr.bf16.mxu0 0
    %554 = vmatpush1.bf16.msra.mxu0 0
    %555 = vmatprep.subr.bf16.mxu0 0
    %556 = vmatpush1.bf16.msra.mxu0 0
    %557 = vmatprep.subr.bf16.mxu0 0
    %558 = vmatpush1.bf16.msra.mxu0 0
    %559 = vmatprep.subr.bf16.mxu0 0
    %560 = vmatpush1.bf16.msra.mxu0 0
    %561 = vmatprep.subr.bf16.mxu0 0
    %562 = vmatpush1.bf16.msra.mxu0 0
    %563 = vmatprep.subr.bf16.mxu0 0
    %564 = vmatpush1.bf16.msra.mxu0 0
    %565 = vmatprep.subr.bf16.mxu0 0
    %566 = vmatpush1.bf16.msra.mxu0 0
    %567 = vmatprep.subr.bf16.mxu0 0
    %568 = vmatpush1.bf16.msra.mxu0 %v551
    %569 = vmatprep.subr.bf16.mxu0 0
    %570 = vmatpush2.bf16.msra.mxu0 0
    %571 = vmatprep.subr.bf16.mxu0 0
    %572 = vmatpush2.bf16.msra.mxu0 0
    %573 = vmatprep.subr.bf16.mxu0 0
    %574 = vmatpush2.bf16.msra.mxu0 0
    %575 = vmatprep.subr.bf16.mxu0 0
    %576 = vmatpush2.bf16.msra.mxu0 0
    %577 = vmatprep.subr.bf16.mxu0 0
    %578 = vmatpush2.bf16.msra.mxu0 0
    %579 = vmatprep.subr.bf16.mxu0 0
    %580 = vmatpush2.bf16.msra.mxu0 0
    %581 = vmatprep.subr.bf16.mxu0 0
    %582 = vmatpush2.bf16.msra.mxu0 0
    %583 = vmatprep.subr.bf16.mxu0 0
    %584 = vmatpush2.bf16.msra.mxu0 0
    %585 = vmatprep.mubr.bf16.mxu0 0
    %586 = vmatmul.mubr.bf16.gmra.mxu0 %v548
    %v587 = vpop.f32.mrf.mxu0
    %v588 = vadd.f32 0.0, %v587
    %v589 = vpop.f32.mrf.mxu0
    %v590 = vpop.f32.mrf.mxu0
    %v591 = vpop.f32.mrf.mxu0
    %592 = vdwg.mxu0
    %v593 = vpack.c.bf16 %v542, %v542
    %v594 = vpack.c.bf16 %v588, %v588
    %595 = vrot.lane.b32.xlu0 %v357, 120
    %v596 = vpop.permute.xlu0 %595
    %597 = vrot.lane.b32.xlu0 %v363, 120
    %v598 = vpop.permute.xlu0 %597
    %v600 = vsel %vm383, %v596, 0
    %v603 = vsel %vm383, %v598, 0
    %605 = vmatprep.subr.bf16.mxu0 0
    %606 = vmatpush1.bf16.xpose.msra.mxu0 0
    %607 = vmatprep.subr.bf16.mxu0 0
    %608 = vmatpush1.bf16.xpose.msra.mxu0 0
    %609 = vmatprep.subr.bf16.mxu0 0
    %610 = vmatpush1.bf16.xpose.msra.mxu0 0
    %611 = vmatprep.subr.bf16.mxu0 0
    %612 = vmatpush1.bf16.xpose.msra.mxu0 0
    %613 = vmatprep.subr.bf16.mxu0 0
    %614 = vmatpush1.bf16.xpose.msra.mxu0 0
    %615 = vmatprep.subr.bf16.mxu0 0
    %616 = vmatpush1.bf16.xpose.msra.mxu0 0
    %617 = vmatprep.subr.bf16.mxu0 0
    %618 = vmatpush1.bf16.xpose.msra.mxu0 0
    %619 = vmatprep.subr.bf16.mxu0 0
    %620 = vmatpush1.bf16.xpose.msra.mxu0 %v603
    %621 = vmatprep.subr.bf16.mxu0 0
    %622 = vmatpush2.bf16.xpose.msra.mxu0 0
    %623 = vmatprep.subr.bf16.mxu0 0
    %624 = vmatpush2.bf16.xpose.msra.mxu0 0
    %625 = vmatprep.subr.bf16.mxu0 0
    %626 = vmatpush2.bf16.xpose.msra.mxu0 0
    %627 = vmatprep.subr.bf16.mxu0 0
    %628 = vmatpush2.bf16.xpose.msra.mxu0 0
    %629 = vmatprep.subr.bf16.mxu0 0
    %630 = vmatpush2.bf16.xpose.msra.mxu0 0
    %631 = vmatprep.subr.bf16.mxu0 0
    %632 = vmatpush2.bf16.xpose.msra.mxu0 0
    %633 = vmatprep.subr.bf16.mxu0 0
    %634 = vmatpush2.bf16.xpose.msra.mxu0 0
    %635 = vmatprep.subr.bf16.mxu0 0
    %636 = vmatpush2.bf16.xpose.msra.mxu0 0
    %637 = vmatprep.mubr.bf16.mxu0 0
    %638 = vmatmul.mubr.bf16.gmra.mxu0 %v600
    %v639 = vpop.f32.mrf.mxu0
    %v640 = vadd.f32 %v376, %v639
    %v641 = vpop.f32.mrf.mxu0
    %v642 = vpop.f32.mrf.mxu0
    %v643 = vpop.f32.mrf.mxu0
    %644 = vdwg.mxu0
    %645 = vrot.lane.b32.xlu0 %v358, 120
    %v646 = vpop.permute.xlu0 %645
    %647 = vrot.lane.b32.xlu0 %v364, 120
    %v648 = vpop.permute.xlu0 %647
    %v650 = vsel %vm383, %v646, 0
    %v653 = vsel %vm383, %v648, 0
    %655 = vmatprep.subr.bf16.mxu0 0
    %656 = vmatpush1.bf16.xpose.msra.mxu0 0
    %657 = vmatprep.subr.bf16.mxu0 0
    %658 = vmatpush1.bf16.xpose.msra.mxu0 0
    %659 = vmatprep.subr.bf16.mxu0 0
    %660 = vmatpush1.bf16.xpose.msra.mxu0 0
    %661 = vmatprep.subr.bf16.mxu0 0
    %662 = vmatpush1.bf16.xpose.msra.mxu0 0
    %663 = vmatprep.subr.bf16.mxu0 0
    %664 = vmatpush1.bf16.xpose.msra.mxu0 0
    %665 = vmatprep.subr.bf16.mxu0 0
    %666 = vmatpush1.bf16.xpose.msra.mxu0 0
    %667 = vmatprep.subr.bf16.mxu0 0
    %668 = vmatpush1.bf16.xpose.msra.mxu0 0
    %669 = vmatprep.subr.bf16.mxu0 0
    %670 = vmatpush1.bf16.xpose.msra.mxu0 %v653
    %671 = vmatprep.subr.bf16.mxu0 0
    %672 = vmatpush2.bf16.xpose.msra.mxu0 0
    %673 = vmatprep.subr.bf16.mxu0 0
    %674 = vmatpush2.bf16.xpose.msra.mxu0 0
    %675 = vmatprep.subr.bf16.mxu0 0
    %676 = vmatpush2.bf16.xpose.msra.mxu0 0
    %677 = vmatprep.subr.bf16.mxu0 0
    %678 = vmatpush2.bf16.xpose.msra.mxu0 0
    %679 = vmatprep.subr.bf16.mxu0 0
    %680 = vmatpush2.bf16.xpose.msra.mxu0 0
    %681 = vmatprep.subr.bf16.mxu0 0
    %682 = vmatpush2.bf16.xpose.msra.mxu0 0
    %683 = vmatprep.subr.bf16.mxu0 0
    %684 = vmatpush2.bf16.xpose.msra.mxu0 0
    %685 = vmatprep.subr.bf16.mxu0 0
    %686 = vmatpush2.bf16.xpose.msra.mxu0 0
    %687 = vmatprep.mubr.bf16.mxu0 0
    %688 = vmatmul.mubr.bf16.gmra.mxu0 %v650
    %v689 = vpop.f32.mrf.mxu0
    %v690 = vadd.f32 %v380, %v689
    %v691 = vpop.f32.mrf.mxu0
    %v692 = vpop.f32.mrf.mxu0
    %v693 = vpop.f32.mrf.mxu0
    %694 = vdwg.mxu0
    %v695 = vsel %vm383, %v640, -inf
    %696 = vmax.xlane.f32.xlu0 %v695
    %v697 = vpop.xlane.xlu0 %696
    %v698 = vsel %vm383, %v690, -inf
    %699 = vmax.xlane.f32.xlu0 %v698
    %v700 = vpop.xlane.xlu0 %699
    %v701 = vsub.f32 %v640, %v697
    %v702 = vsub.f32 %v690, %v700
    %v703 = vmul.f32 %v701, 1.442695
    %v704 = vpow.pop %v703
    %v705 = vmul.f32 %v702, 1.442695
    %v706 = vpow.pop %v705
    %v707 = vsel %vm383, %v704, 0.0
    %708 = vadd.xlane.f32.xlu0 %v707
    %v709 = vpop.xlane.xlu0 %708
    %v710 = vsel %vm383, %v706, 0.0
    %711 = vadd.xlane.f32.xlu0 %v710
    %v712 = vpop.xlane.xlu0 %711
    %v713 = vrcp.pop %v709
    %v714 = vrcp.pop %v712
    %v715 = vmul.f32 %v704, %v713
    %v716 = vmul.f32 %v706, %v714
    %v717 = vpack.c.bf16 %v715, %v715
    %v718 = vpack.c.bf16 %v716, %v716
    %719 = vrot.lane.b32.xlu0 %v369, 120
    %v720 = vpop.permute.xlu0 %719
    %v722 = vsel %vm383, %v717, 0
    %v725 = vsel %vm503, %v720, 0
    %727 = vmatprep.subr.bf16.mxu0 0
    %728 = vmatpush1.bf16.msra.mxu0 0
    %729 = vmatprep.subr.bf16.mxu0 0
    %730 = vmatpush1.bf16.msra.mxu0 0
    %731 = vmatprep.subr.bf16.mxu0 0
    %732 = vmatpush1.bf16.msra.mxu0 0
    %733 = vmatprep.subr.bf16.mxu0 0
    %734 = vmatpush1.bf16.msra.mxu0 0
    %735 = vmatprep.subr.bf16.mxu0 0
    %736 = vmatpush1.bf16.msra.mxu0 0
    %737 = vmatprep.subr.bf16.mxu0 0
    %738 = vmatpush1.bf16.msra.mxu0 0
    %739 = vmatprep.subr.bf16.mxu0 0
    %740 = vmatpush1.bf16.msra.mxu0 0
    %741 = vmatprep.subr.bf16.mxu0 0
    %742 = vmatpush1.bf16.msra.mxu0 %v725
    %743 = vmatprep.subr.bf16.mxu0 0
    %744 = vmatpush2.bf16.msra.mxu0 0
    %745 = vmatprep.subr.bf16.mxu0 0
    %746 = vmatpush2.bf16.msra.mxu0 0
    %747 = vmatprep.subr.bf16.mxu0 0
    %748 = vmatpush2.bf16.msra.mxu0 0
    %749 = vmatprep.subr.bf16.mxu0 0
    %750 = vmatpush2.bf16.msra.mxu0 0
    %751 = vmatprep.subr.bf16.mxu0 0
    %752 = vmatpush2.bf16.msra.mxu0 0
    %753 = vmatprep.subr.bf16.mxu0 0
    %754 = vmatpush2.bf16.msra.mxu0 0
    %755 = vmatprep.subr.bf16.mxu0 0
    %756 = vmatpush2.bf16.msra.mxu0 0
    %757 = vmatprep.subr.bf16.mxu0 0
    %758 = vmatpush2.bf16.msra.mxu0 0
    %759 = vmatprep.mubr.bf16.mxu0 0
    %760 = vmatmul.mubr.bf16.gmra.mxu0 %v722
    %v761 = vpop.f32.mrf.mxu0
    %v762 = vadd.f32 0.0, %v761
    %v763 = vpop.f32.mrf.mxu0
    %v764 = vpop.f32.mrf.mxu0
    %v765 = vpop.f32.mrf.mxu0
    %766 = vdwg.mxu0
    %767 = vrot.lane.b32.xlu0 %v370, 120
    %v768 = vpop.permute.xlu0 %767
    %v770 = vsel %vm383, %v718, 0
    %v773 = vsel %vm503, %v768, 0
    %775 = vmatprep.subr.bf16.mxu0 0
    %776 = vmatpush1.bf16.msra.mxu0 0
    %777 = vmatprep.subr.bf16.mxu0 0
    %778 = vmatpush1.bf16.msra.mxu0 0
    %779 = vmatprep.subr.bf16.mxu0 0
    %780 = vmatpush1.bf16.msra.mxu0 0
    %781 = vmatprep.subr.bf16.mxu0 0
    %782 = vmatpush1.bf16.msra.mxu0 0
    %783 = vmatprep.subr.bf16.mxu0 0
    %784 = vmatpush1.bf16.msra.mxu0 0
    %785 = vmatprep.subr.bf16.mxu0 0
    %786 = vmatpush1.bf16.msra.mxu0 0
    %787 = vmatprep.subr.bf16.mxu0 0
    %788 = vmatpush1.bf16.msra.mxu0 0
    %789 = vmatprep.subr.bf16.mxu0 0
    %790 = vmatpush1.bf16.msra.mxu0 %v773
    %791 = vmatprep.subr.bf16.mxu0 0
    %792 = vmatpush2.bf16.msra.mxu0 0
    %793 = vmatprep.subr.bf16.mxu0 0
    %794 = vmatpush2.bf16.msra.mxu0 0
    %795 = vmatprep.subr.bf16.mxu0 0
    %796 = vmatpush2.bf16.msra.mxu0 0
    %797 = vmatprep.subr.bf16.mxu0 0
    %798 = vmatpush2.bf16.msra.mxu0 0
    %799 = vmatprep.subr.bf16.mxu0 0
    %800 = vmatpush2.bf16.msra.mxu0 0
    %801 = vmatprep.subr.bf16.mxu0 0
    %802 = vmatpush2.bf16.msra.mxu0 0
    %803 = vmatprep.subr.bf16.mxu0 0
    %804 = vmatpush2.bf16.msra.mxu0 0
    %805 = vmatprep.subr.bf16.mxu0 0
    %806 = vmatpush2.bf16.msra.mxu0 0
    %807 = vmatprep.mubr.bf16.mxu0 0
    %808 = vmatmul.mubr.bf16.gmra.mxu0 %v770
    %v809 = vpop.f32.mrf.mxu0
    %v810 = vadd.f32 0.0, %v809
    %v811 = vpop.f32.mrf.mxu0
    %v812 = vpop.f32.mrf.mxu0
    %v813 = vpop.f32.mrf.mxu0
    %814 = vdwg.mxu0
    %v815 = vpack.c.bf16 %v762, %v762
    %v816 = vpack.c.bf16 %v810, %v810
    %817 = vrot.lane.b32.xlu0 %v357, 112
    %v818 = vpop.permute.xlu0 %817
    %819 = vrot.lane.b32.xlu0 %v363, 112
    %v820 = vpop.permute.xlu0 %819
    %v822 = vsel %vm383, %v818, 0
    %v825 = vsel %vm383, %v820, 0
    %827 = vmatprep.subr.bf16.mxu0 0
    %828 = vmatpush1.bf16.xpose.msra.mxu0 0
    %829 = vmatprep.subr.bf16.mxu0 0
    %830 = vmatpush1.bf16.xpose.msra.mxu0 0
    %831 = vmatprep.subr.bf16.mxu0 0
    %832 = vmatpush1.bf16.xpose.msra.mxu0 0
    %833 = vmatprep.subr.bf16.mxu0 0
    %834 = vmatpush1.bf16.xpose.msra.mxu0 0
    %835 = vmatprep.subr.bf16.mxu0 0
    %836 = vmatpush1.bf16.xpose.msra.mxu0 0
    %837 = vmatprep.subr.bf16.mxu0 0
    %838 = vmatpush1.bf16.xpose.msra.mxu0 0
    %839 = vmatprep.subr.bf16.mxu0 0
    %840 = vmatpush1.bf16.xpose.msra.mxu0 0
    %841 = vmatprep.subr.bf16.mxu0 0
    %842 = vmatpush1.bf16.xpose.msra.mxu0 %v825
    %843 = vmatprep.subr.bf16.mxu0 0
    %844 = vmatpush2.bf16.xpose.msra.mxu0 0
    %845 = vmatprep.subr.bf16.mxu0 0
    %846 = vmatpush2.bf16.xpose.msra.mxu0 0
    %847 = vmatprep.subr.bf16.mxu0 0
    %848 = vmatpush2.bf16.xpose.msra.mxu0 0
    %849 = vmatprep.subr.bf16.mxu0 0
    %850 = vmatpush2.bf16.xpose.msra.mxu0 0
    %851 = vmatprep.subr.bf16.mxu0 0
    %852 = vmatpush2.bf16.xpose.msra.mxu0 0
    %853 = vmatprep.subr.bf16.mxu0 0
    %854 = vmatpush2.bf16.xpose.msra.mxu0 0
    %855 = vmatprep.subr.bf16.mxu0 0
    %856 = vmatpush2.bf16.xpose.msra.mxu0 0
    %857 = vmatprep.subr.bf16.mxu0 0
    %858 = vmatpush2.bf16.xpose.msra.mxu0 0
    %859 = vmatprep.mubr.bf16.mxu0 0
    %860 = vmatmul.mubr.bf16.gmra.mxu0 %v822
    %v861 = vpop.f32.mrf.mxu0
    %v862 = vadd.f32 %v376, %v861
    %v863 = vpop.f32.mrf.mxu0
    %v864 = vpop.f32.mrf.mxu0
    %v865 = vpop.f32.mrf.mxu0
    %866 = vdwg.mxu0
    %867 = vrot.lane.b32.xlu0 %v358, 112
    %v868 = vpop.permute.xlu0 %867
    %869 = vrot.lane.b32.xlu0 %v364, 112
    %v870 = vpop.permute.xlu0 %869
    %v872 = vsel %vm383, %v868, 0
    %v875 = vsel %vm383, %v870, 0
    %877 = vmatprep.subr.bf16.mxu0 0
    %878 = vmatpush1.bf16.xpose.msra.mxu0 0
    %879 = vmatprep.subr.bf16.mxu0 0
    %880 = vmatpush1.bf16.xpose.msra.mxu0 0
    %881 = vmatprep.subr.bf16.mxu0 0
    %882 = vmatpush1.bf16.xpose.msra.mxu0 0
    %883 = vmatprep.subr.bf16.mxu0 0
    %884 = vmatpush1.bf16.xpose.msra.mxu0 0
    %885 = vmatprep.subr.bf16.mxu0 0
    %886 = vmatpush1.bf16.xpose.msra.mxu0 0
    %887 = vmatprep.subr.bf16.mxu0 0
    %888 = vmatpush1.bf16.xpose.msra.mxu0 0
    %889 = vmatprep.subr.bf16.mxu0 0
    %890 = vmatpush1.bf16.xpose.msra.mxu0 0
    %891 = vmatprep.subr.bf16.mxu0 0
    %892 = vmatpush1.bf16.xpose.msra.mxu0 %v875
    %893 = vmatprep.subr.bf16.mxu0 0
    %894 = vmatpush2.bf16.xpose.msra.mxu0 0
    %895 = vmatprep.subr.bf16.mxu0 0
    %896 = vmatpush2.bf16.xpose.msra.mxu0 0
    %897 = vmatprep.subr.bf16.mxu0 0
    %898 = vmatpush2.bf16.xpose.msra.mxu0 0
    %899 = vmatprep.subr.bf16.mxu0 0
    %900 = vmatpush2.bf16.xpose.msra.mxu0 0
    %901 = vmatprep.subr.bf16.mxu0 0
    %902 = vmatpush2.bf16.xpose.msra.mxu0 0
    %903 = vmatprep.subr.bf16.mxu0 0
    %904 = vmatpush2.bf16.xpose.msra.mxu0 0
    %905 = vmatprep.subr.bf16.mxu0 0
    %906 = vmatpush2.bf16.xpose.msra.mxu0 0
    %907 = vmatprep.subr.bf16.mxu0 0
    %908 = vmatpush2.bf16.xpose.msra.mxu0 0
    %909 = vmatprep.mubr.bf16.mxu0 0
    %910 = vmatmul.mubr.bf16.gmra.mxu0 %v872
    %v911 = vpop.f32.mrf.mxu0
    %v912 = vadd.f32 %v380, %v911
    %v913 = vpop.f32.mrf.mxu0
    %v914 = vpop.f32.mrf.mxu0
    %v915 = vpop.f32.mrf.mxu0
    %916 = vdwg.mxu0
    %v917 = vsel %vm383, %v862, -inf
    %918 = vmax.xlane.f32.xlu0 %v917
    %v919 = vpop.xlane.xlu0 %918
    %v920 = vsel %vm383, %v912, -inf
    %921 = vmax.xlane.f32.xlu0 %v920
    %v922 = vpop.xlane.xlu0 %921
    %v923 = vsub.f32 %v862, %v919
    %v924 = vsub.f32 %v912, %v922
    %v925 = vmul.f32 %v923, 1.442695
    %v926 = vpow.pop %v925
    %v927 = vmul.f32 %v924, 1.442695
    %v928 = vpow.pop %v927
    %v929 = vsel %vm383, %v926, 0.0
    %930 = vadd.xlane.f32.xlu0 %v929
    %v931 = vpop.xlane.xlu0 %930
    %v932 = vsel %vm383, %v928, 0.0
    %933 = vadd.xlane.f32.xlu0 %v932
    %v934 = vpop.xlane.xlu0 %933
    %v935 = vrcp.pop %v931
    %v936 = vrcp.pop %v934
    %v937 = vmul.f32 %v926, %v935
    %v938 = vmul.f32 %v928, %v936
    %v939 = vpack.c.bf16 %v937, %v937
    %v940 = vpack.c.bf16 %v938, %v938
    %941 = vrot.lane.b32.xlu0 %v369, 112
    %v942 = vpop.permute.xlu0 %941
    %v944 = vsel %vm383, %v939, 0
    %v947 = vsel %vm503, %v942, 0
    %949 = vmatprep.subr.bf16.mxu0 0
    %950 = vmatpush1.bf16.msra.mxu0 0
    %951 = vmatprep.subr.bf16.mxu0 0
    %952 = vmatpush1.bf16.msra.mxu0 0
    %953 = vmatprep.subr.bf16.mxu0 0
    %954 = vmatpush1.bf16.msra.mxu0 0
    %955 = vmatprep.subr.bf16.mxu0 0
    %956 = vmatpush1.bf16.msra.mxu0 0
    %957 = vmatprep.subr.bf16.mxu0 0
    %958 = vmatpush1.bf16.msra.mxu0 0
    %959 = vmatprep.subr.bf16.mxu0 0
    %960 = vmatpush1.bf16.msra.mxu0 0
    %961 = vmatprep.subr.bf16.mxu0 0
    %962 = vmatpush1.bf16.msra.mxu0 0
    %963 = vmatprep.subr.bf16.mxu0 0
    %964 = vmatpush1.bf16.msra.mxu0 %v947
    %965 = vmatprep.subr.bf16.mxu0 0
    %966 = vmatpush2.bf16.msra.mxu0 0
    %967 = vmatprep.subr.bf16.mxu0 0
    %968 = vmatpush2.bf16.msra.mxu0 0
    %969 = vmatprep.subr.bf16.mxu0 0
    %970 = vmatpush2.bf16.msra.mxu0 0
    %971 = vmatprep.subr.bf16.mxu0 0
    %972 = vmatpush2.bf16.msra.mxu0 0
    %973 = vmatprep.subr.bf16.mxu0 0
    %974 = vmatpush2.bf16.msra.mxu0 0
    %975 = vmatprep.subr.bf16.mxu0 0
    %976 = vmatpush2.bf16.msra.mxu0 0
    %977 = vmatprep.subr.bf16.mxu0 0
    %978 = vmatpush2.bf16.msra.mxu0 0
    %979 = vmatprep.subr.bf16.mxu0 0
    %980 = vmatpush2.bf16.msra.mxu0 0
    %981 = vmatprep.mubr.bf16.mxu0 0
    %982 = vmatmul.mubr.bf16.gmra.mxu0 %v944
    %v983 = vpop.f32.mrf.mxu0
    %v984 = vadd.f32 0.0, %v983
    %v985 = vpop.f32.mrf.mxu0
    %v986 = vpop.f32.mrf.mxu0
    %v987 = vpop.f32.mrf.mxu0
    %988 = vdwg.mxu0
    %989 = vrot.lane.b32.xlu0 %v370, 112
    %v990 = vpop.permute.xlu0 %989
    %v992 = vsel %vm383, %v940, 0
    %v995 = vsel %vm503, %v990, 0
    %997 = vmatprep.subr.bf16.mxu0 0
    %998 = vmatpush1.bf16.msra.mxu0 0
    %999 = vmatprep.subr.bf16.mxu0 0
    %1000 = vmatpush1.bf16.msra.mxu0 0
    %1001 = vmatprep.subr.bf16.mxu0 0
    %1002 = vmatpush1.bf16.msra.mxu0 0
    %1003 = vmatprep.subr.bf16.mxu0 0
    %1004 = vmatpush1.bf16.msra.mxu0 0
    %1005 = vmatprep.subr.bf16.mxu0 0
    %1006 = vmatpush1.bf16.msra.mxu0 0
    %1007 = vmatprep.subr.bf16.mxu0 0
    %1008 = vmatpush1.bf16.msra.mxu0 0
    %1009 = vmatprep.subr.bf16.mxu0 0
    %1010 = vmatpush1.bf16.msra.mxu0 0
    %1011 = vmatprep.subr.bf16.mxu0 0
    %1012 = vmatpush1.bf16.msra.mxu0 %v995
    %1013 = vmatprep.subr.bf16.mxu0 0
    %1014 = vmatpush2.bf16.msra.mxu0 0
    %1015 = vmatprep.subr.bf16.mxu0 0
    %1016 = vmatpush2.bf16.msra.mxu0 0
    %1017 = vmatprep.subr.bf16.mxu0 0
    %1018 = vmatpush2.bf16.msra.mxu0 0
    %1019 = vmatprep.subr.bf16.mxu0 0
    %1020 = vmatpush2.bf16.msra.mxu0 0
    %1021 = vmatprep.subr.bf16.mxu0 0
    %1022 = vmatpush2.bf16.msra.mxu0 0
    %1023 = vmatprep.subr.bf16.mxu0 0
    %1024 = vmatpush2.bf16.msra.mxu0 0
    %1025 = vmatprep.subr.bf16.mxu0 0
    %1026 = vmatpush2.bf16.msra.mxu0 0
    %1027 = vmatprep.subr.bf16.mxu0 0
    %1028 = vmatpush2.bf16.msra.mxu0 0
    %1029 = vmatprep.mubr.bf16.mxu0 0
    %1030 = vmatmul.mubr.bf16.gmra.mxu0 %v992
    %v1031 = vpop.f32.mrf.mxu0
    %v1032 = vadd.f32 0.0, %v1031
    %v1033 = vpop.f32.mrf.mxu0
    %v1034 = vpop.f32.mrf.mxu0
    %v1035 = vpop.f32.mrf.mxu0
    %1036 = vdwg.mxu0
    %v1037 = vpack.c.bf16 %v984, %v984
    %v1038 = vpack.c.bf16 %v1032, %v1032
    %1039 = vrot.lane.b32.xlu0 %v357, 104
    %v1040 = vpop.permute.xlu0 %1039
    %1041 = vrot.lane.b32.xlu0 %v363, 104
    %v1042 = vpop.permute.xlu0 %1041
    %v1044 = vsel %vm383, %v1040, 0
    %v1047 = vsel %vm383, %v1042, 0
    %1049 = vmatprep.subr.bf16.mxu0 0
    %1050 = vmatpush1.bf16.xpose.msra.mxu0 0
    %1051 = vmatprep.subr.bf16.mxu0 0
    %1052 = vmatpush1.bf16.xpose.msra.mxu0 0
    %1053 = vmatprep.subr.bf16.mxu0 0
    %1054 = vmatpush1.bf16.xpose.msra.mxu0 0
    %1055 = vmatprep.subr.bf16.mxu0 0
    %1056 = vmatpush1.bf16.xpose.msra.mxu0 0
    %1057 = vmatprep.subr.bf16.mxu0 0
    %1058 = vmatpush1.bf16.xpose.msra.mxu0 0
    %1059 = vmatprep.subr.bf16.mxu0 0
    %1060 = vmatpush1.bf16.xpose.msra.mxu0 0
    %1061 = vmatprep.subr.bf16.mxu0 0
    %1062 = vmatpush1.bf16.xpose.msra.mxu0 0
    %1063 = vmatprep.subr.bf16.mxu0 0
    %1064 = vmatpush1.bf16.xpose.msra.mxu0 %v1047
    %1065 = vmatprep.subr.bf16.mxu0 0
    %1066 = vmatpush2.bf16.xpose.msra.mxu0 0
    %1067 = vmatprep.subr.bf16.mxu0 0
    %1068 = vmatpush2.bf16.xpose.msra.mxu0 0
    %1069 = vmatprep.subr.bf16.mxu0 0
    %1070 = vmatpush2.bf16.xpose.msra.mxu0 0
    %1071 = vmatprep.subr.bf16.mxu0 0
    %1072 = vmatpush2.bf16.xpose.msra.mxu0 0
    %1073 = vmatprep.subr.bf16.mxu0 0
    %1074 = vmatpush2.bf16.xpose.msra.mxu0 0
    %1075 = vmatprep.subr.bf16.mxu0 0
    %1076 = vmatpush2.bf16.xpose.msra.mxu0 0
    %1077 = vmatprep.subr.bf16.mxu0 0
    %1078 = vmatpush2.bf16.xpose.msra.mxu0 0
    %1079 = vmatprep.subr.bf16.mxu0 0
    %1080 = vmatpush2.bf16.xpose.msra.mxu0 0
    %1081 = vmatprep.mubr.bf16.mxu0 0
    %1082 = vmatmul.mubr.bf16.gmra.mxu0 %v1044
    %v1083 = vpop.f32.mrf.mxu0
    %v1084 = vadd.f32 %v376, %v1083
    %v1085 = vpop.f32.mrf.mxu0
    %v1086 = vpop.f32.mrf.mxu0
    %v1087 = vpop.f32.mrf.mxu0
    %1088 = vdwg.mxu0
    %1089 = vrot.lane.b32.xlu0 %v358, 104
    %v1090 = vpop.permute.xlu0 %1089
    %1091 = vrot.lane.b32.xlu0 %v364, 104
    %v1092 = vpop.permute.xlu0 %1091
    %v1094 = vsel %vm383, %v1090, 0
    %v1097 = vsel %vm383, %v1092, 0
    %1099 = vmatprep.subr.bf16.mxu0 0
    %1100 = vmatpush1.bf16.xpose.msra.mxu0 0
    %1101 = vmatprep.subr.bf16.mxu0 0
    %1102 = vmatpush1.bf16.xpose.msra.mxu0 0
    %1103 = vmatprep.subr.bf16.mxu0 0
    %1104 = vmatpush1.bf16.xpose.msra.mxu0 0
    %1105 = vmatprep.subr.bf16.mxu0 0
    %1106 = vmatpush1.bf16.xpose.msra.mxu0 0
    %1107 = vmatprep.subr.bf16.mxu0 0
    %1108 = vmatpush1.bf16.xpose.msra.mxu0 0
    %1109 = vmatprep.subr.bf16.mxu0 0
    %1110 = vmatpush1.bf16.xpose.msra.mxu0 0
    %1111 = vmatprep.subr.bf16.mxu0 0
    %1112 = vmatpush1.bf16.xpose.msra.mxu0 0
    %1113 = vmatprep.subr.bf16.mxu0 0
    %1114 = vmatpush1.bf16.xpose.msra.mxu0 %v1097
    %1115 = vmatprep.subr.bf16.mxu0 0
    %1116 = vmatpush2.bf16.xpose.msra.mxu0 0
    %1117 = vmatprep.subr.bf16.mxu0 0
    %1118 = vmatpush2.bf16.xpose.msra.mxu0 0
    %1119 = vmatprep.subr.bf16.mxu0 0
    %1120 = vmatpush2.bf16.xpose.msra.mxu0 0
    %1121 = vmatprep.subr.bf16.mxu0 0
    %1122 = vmatpush2.bf16.xpose.msra.mxu0 0
    %1123 = vmatprep.subr.bf16.mxu0 0
    %1124 = vmatpush2.bf16.xpose.msra.mxu0 0
    %1125 = vmatprep.subr.bf16.mxu0 0
    %1126 = vmatpush2.bf16.xpose.msra.mxu0 0
    %1127 = vmatprep.subr.bf16.mxu0 0
    %1128 = vmatpush2.bf16.xpose.msra.mxu0 0
    %1129 = vmatprep.subr.bf16.mxu0 0
    %1130 = vmatpush2.bf16.xpose.msra.mxu0 0
    %1131 = vmatprep.mubr.bf16.mxu0 0
    %1132 = vmatmul.mubr.bf16.gmra.mxu0 %v1094
    %v1133 = vpop.f32.mrf.mxu0
    %v1134 = vadd.f32 %v380, %v1133
    %v1135 = vpop.f32.mrf.mxu0
    %v1136 = vpop.f32.mrf.mxu0
    %v1137 = vpop.f32.mrf.mxu0
    %1138 = vdwg.mxu0
    %v1139 = vsel %vm383, %v1084, -inf
    %1140 = vmax.xlane.f32.xlu0 %v1139
    %v1141 = vpop.xlane.xlu0 %1140
    %v1142 = vsel %vm383, %v1134, -inf
    %1143 = vmax.xlane.f32.xlu0 %v1142
    %v1144 = vpop.xlane.xlu0 %1143
    %v1145 = vsub.f32 %v1084, %v1141
    %v1146 = vsub.f32 %v1134, %v1144
    %v1147 = vmul.f32 %v1145, 1.442695
    %v1148 = vpow.pop %v1147
    %v1149 = vmul.f32 %v1146, 1.442695
    %v1150 = vpow.pop %v1149
    %v1151 = vsel %vm383, %v1148, 0.0
    %1152 = vadd.xlane.f32.xlu0 %v1151
    %v1153 = vpop.xlane.xlu0 %1152
    %v1154 = vsel %vm383, %v1150, 0.0
    %1155 = vadd.xlane.f32.xlu0 %v1154
    %v1156 = vpop.xlane.xlu0 %1155
    %v1157 = vrcp.pop %v1153
    %v1158 = vrcp.pop %v1156
    %v1159 = vmul.f32 %v1148, %v1157
    %v1160 = vmul.f32 %v1150, %v1158
    %v1161 = vpack.c.bf16 %v1159, %v1159
    %v1162 = vpack.c.bf16 %v1160, %v1160
    %1163 = vrot.lane.b32.xlu0 %v369, 104
    %v1164 = vpop.permute.xlu0 %1163
    %v1166 = vsel %vm383, %v1161, 0
    %v1169 = vsel %vm503, %v1164, 0
    %1171 = vmatprep.subr.bf16.mxu0 0
    %1172 = vmatpush1.bf16.msra.mxu0 0
    %1173 = vmatprep.subr.bf16.mxu0 0
    %1174 = vmatpush1.bf16.msra.mxu0 0
    %1175 = vmatprep.subr.bf16.mxu0 0
    %1176 = vmatpush1.bf16.msra.mxu0 0
    %1177 = vmatprep.subr.bf16.mxu0 0
    %1178 = vmatpush1.bf16.msra.mxu0 0
    %1179 = vmatprep.subr.bf16.mxu0 0
    %1180 = vmatpush1.bf16.msra.mxu0 0
    %1181 = vmatprep.subr.bf16.mxu0 0
    %1182 = vmatpush1.bf16.msra.mxu0 0
    %1183 = vmatprep.subr.bf16.mxu0 0
    %1184 = vmatpush1.bf16.msra.mxu0 0
    %1185 = vmatprep.subr.bf16.mxu0 0
    %1186 = vmatpush1.bf16.msra.mxu0 %v1169
    %1187 = vmatprep.subr.bf16.mxu0 0
    %1188 = vmatpush2.bf16.msra.mxu0 0
    %1189 = vmatprep.subr.bf16.mxu0 0
    %1190 = vmatpush2.bf16.msra.mxu0 0
    %1191 = vmatprep.subr.bf16.mxu0 0
    %1192 = vmatpush2.bf16.msra.mxu0 0
    %1193 = vmatprep.subr.bf16.mxu0 0
    %1194 = vmatpush2.bf16.msra.mxu0 0
    %1195 = vmatprep.subr.bf16.mxu0 0
    %1196 = vmatpush2.bf16.msra.mxu0 0
    %1197 = vmatprep.subr.bf16.mxu0 0
    %1198 = vmatpush2.bf16.msra.mxu0 0
    %1199 = vmatprep.subr.bf16.mxu0 0
    %1200 = vmatpush2.bf16.msra.mxu0 0
    %1201 = vmatprep.subr.bf16.mxu0 0
    %1202 = vmatpush2.bf16.msra.mxu0 0
    %1203 = vmatprep.mubr.bf16.mxu0 0
    %1204 = vmatmul.mubr.bf16.gmra.mxu0 %v1166
    %v1205 = vpop.f32.mrf.mxu0
    %v1206 = vadd.f32 0.0, %v1205
    %v1207 = vpop.f32.mrf.mxu0
    %v1208 = vpop.f32.mrf.mxu0
    %v1209 = vpop.f32.mrf.mxu0
    %1210 = vdwg.mxu0
    %1211 = vrot.lane.b32.xlu0 %v370, 104
    %v1212 = vpop.permute.xlu0 %1211
    %v1214 = vsel %vm383, %v1162, 0
    %v1217 = vsel %vm503, %v1212, 0
    %1219 = vmatprep.subr.bf16.mxu0 0
    %1220 = vmatpush1.bf16.msra.mxu0 0
    %1221 = vmatprep.subr.bf16.mxu0 0
    %1222 = vmatpush1.bf16.msra.mxu0 0
    %1223 = vmatprep.subr.bf16.mxu0 0
    %1224 = vmatpush1.bf16.msra.mxu0 0
    %1225 = vmatprep.subr.bf16.mxu0 0
    %1226 = vmatpush1.bf16.msra.mxu0 0
    %1227 = vmatprep.subr.bf16.mxu0 0
    %1228 = vmatpush1.bf16.msra.mxu0 0
    %1229 = vmatprep.subr.bf16.mxu0 0
    %1230 = vmatpush1.bf16.msra.mxu0 0
    %1231 = vmatprep.subr.bf16.mxu0 0
    %1232 = vmatpush1.bf16.msra.mxu0 0
    %1233 = vmatprep.subr.bf16.mxu0 0
    %1234 = vmatpush1.bf16.msra.mxu0 %v1217
    %1235 = vmatprep.subr.bf16.mxu0 0
    %1236 = vmatpush2.bf16.msra.mxu0 0
    %1237 = vmatprep.subr.bf16.mxu0 0
    %1238 = vmatpush2.bf16.msra.mxu0 0
    %1239 = vmatprep.subr.bf16.mxu0 0
    %1240 = vmatpush2.bf16.msra.mxu0 0
    %1241 = vmatprep.subr.bf16.mxu0 0
    %1242 = vmatpush2.bf16.msra.mxu0 0
    %1243 = vmatprep.subr.bf16.mxu0 0
    %1244 = vmatpush2.bf16.msra.mxu0 0
    %1245 = vmatprep.subr.bf16.mxu0 0
    %1246 = vmatpush2.bf16.msra.mxu0 0
    %1247 = vmatprep.subr.bf16.mxu0 0
    %1248 = vmatpush2.bf16.msra.mxu0 0
    %1249 = vmatprep.subr.bf16.mxu0 0
    %1250 = vmatpush2.bf16.msra.mxu0 0
    %1251 = vmatprep.mubr.bf16.mxu0 0
    %1252 = vmatmul.mubr.bf16.gmra.mxu0 %v1214
    %v1253 = vpop.f32.mrf.mxu0
    %v1254 = vadd.f32 0.0, %v1253
    %v1255 = vpop.f32.mrf.mxu0
    %v1256 = vpop.f32.mrf.mxu0
    %v1257 = vpop.f32.mrf.mxu0
    %1258 = vdwg.mxu0
    %v1259 = vpack.c.bf16 %v1206, %v1206
    %v1260 = vpack.c.bf16 %v1254, %v1254
    %1263 = vrot.lane.b32.xlu0 %v815, 8
    %v1264 = vpop.permute.xlu0 %1263
    %1265 = vrot.lane.b32.xlu0 %v816, 8
    %v1266 = vpop.permute.xlu0 %1265
    %1269 = vrot.lane.b32.xlu0 %v1037, 16
    %v1270 = vpop.permute.xlu0 %1269
    %1271 = vrot.lane.b32.xlu0 %v1038, 16
    %v1272 = vpop.permute.xlu0 %1271
    %1275 = vrot.lane.b32.xlu0 %v1259, 24
    %v1276 = vpop.permute.xlu0 %1275
    %1277 = vrot.lane.b32.xlu0 %v1260, 24
    %v1278 = vpop.permute.xlu0 %1277
    %v1281 = vsel %vm383, %v593, %v1264
    %v1284 = vsel %vm383, %v594, %v1266
    %vm1285 = vcmask 130048
    %v1287 = vsel %vm1285, %v1281, %v1270
    %v1289 = vsel %vm1285, %v1284, %v1272
    %vm1290 = vcmask 195584
    %v1292 = vsel %vm1290, %v1287, %v1276
    %v1294 = vsel %vm1290, %v1289, %v1278
    %v1295 = vld [vmem:[%s10] sm:$0xf]
    %v1296 = vld [vmem:[%s10 + $0x4] sm:$0xf]
    %v1297 = vld [vmem:[%s10 + $0x8] sm:$0xf]
    %v1298 = vld [vmem:[%s10 + $0xc] sm:$0xf]
    %v1299 = vld [vmem:[%s11] sm:$0x1]
    %v1301 = vlaneseq
    %v1302 = vshrl.u32 %v1301, 7
    %v1303 = vsub.s32 0, %v1302
    %v1304 = vrot.slane %v1299, %v1303
    %v1308 = vunpack.c.l.b16 %v1292
    %v1309 = vunpack.c.l.b16 %v1294
    %v1310 = vpack.c.b16 %v1309, %v1308
    %v1315 = vunpack.c.l.b16 %v1295
    %v1316 = vunpack.c.l.b16 %v1296
    %v1317 = vunpack.c.l.b16 %v1297
    %v1318 = vunpack.c.l.b16 %v1298
    %v1319 = vpack.c.b16 %v1316, %v1315
    %v1320 = vpack.c.b16 %v1318, %v1317
    %v1324 = vsel %vm99, %v1310, 0
    %1326 = vmatprep.subr.bf16.mxu0 0
    %1327 = vmatpush1.bf16.msra.mxu0 0
    %1328 = vmatprep.subr.bf16.mxu0 0
    %1329 = vmatpush1.bf16.msra.mxu0 0
    %1330 = vmatprep.subr.bf16.mxu0 0
    %1331 = vmatpush1.bf16.msra.mxu0 0
    %1332 = vmatprep.subr.bf16.mxu0 0
    %1333 = vmatpush1.bf16.msra.mxu0 0
    %1334 = vmatprep.subr.bf16.mxu0 0
    %1335 = vmatpush1.bf16.msra.mxu0 0
    %1336 = vmatprep.subr.bf16.mxu0 0
    %1337 = vmatpush1.bf16.msra.mxu0 0
    %1338 = vmatprep.subr.bf16.mxu0 0
    %1339 = vmatpush1.bf16.msra.mxu0 %v1320
    %1340 = vmatprep.subr.bf16.mxu0 0
    %1341 = vmatpush1.bf16.msra.mxu0 %v1319
    %1342 = vmatprep.subr.bf16.mxu0 0
    %1343 = vmatpush2.bf16.msra.mxu0 0
    %1344 = vmatprep.subr.bf16.mxu0 0
    %1345 = vmatpush2.bf16.msra.mxu0 0
    %1346 = vmatprep.subr.bf16.mxu0 0
    %1347 = vmatpush2.bf16.msra.mxu0 0
    %1348 = vmatprep.subr.bf16.mxu0 0
    %1349 = vmatpush2.bf16.msra.mxu0 0
    %1350 = vmatprep.subr.bf16.mxu0 0
    %1351 = vmatpush2.bf16.msra.mxu0 0
    %1352 = vmatprep.subr.bf16.mxu0 0
    %1353 = vmatpush2.bf16.msra.mxu0 0
    %1354 = vmatprep.subr.bf16.mxu0 0
    %1355 = vmatpush2.bf16.msra.mxu0 0
    %1356 = vmatprep.subr.bf16.mxu0 0
    %1357 = vmatpush2.bf16.msra.mxu0 0
    %1358 = vmatprep.mubr.bf16.mxu0 0
    %1359 = vmatmul.mubr.bf16.gmra.mxu0 %v1324
    %v1360 = vpop.f32.mrf.mxu0
    %v1361 = vadd.f32 %v1304, %v1360
    %v1362 = vpop.f32.mrf.mxu0
    %v1363 = vpop.f32.mrf.mxu0
    %v1364 = vadd.f32 %v1304, %v1363
    %v1365 = vpop.f32.mrf.mxu0
    %1366 = vdwg.mxu0
    %v1367 = vadd.f32 %v89, %v1361
    %v1368 = vadd.f32 %v90, %v1364
    %v1369 = vld [vmem:[%s12] sm:$0x1]
    %v1370 = vld [vmem:[%s13] sm:$0x1]
    %v1371 = vsel %vm99, %v1367, 0.0
    %1372 = vadd.xlane.f32.xlu0 %v1371
    %v1373 = vpop.xlane.xlu0 %1372
    %v1374 = vsel %vm99, %v1368, 0.0
    %1375 = vadd.xlane.f32.xlu0 %v1374
    %v1376 = vpop.xlane.xlu0 %1375
    %v1377 = vmul.f32 %v1373, %v106
    %v1378 = vmul.f32 %v1376, %v106
    %v1379 = vsub.f32 %v1367, %v1377
    %v1380 = vsub.f32 %v1368, %v1378
    %v1381 = vmul.f32 %v1379, %v1379
    %v1382 = vmul.f32 %v1380, %v1380
    %v1383 = vsel %vm99, %v1381, 0.0
    %1384 = vadd.xlane.f32.xlu0 %v1383
    %v1385 = vpop.xlane.xlu0 %1384
    %v1386 = vsel %vm99, %v1382, 0.0
    %1387 = vadd.xlane.f32.xlu0 %v1386
    %v1388 = vpop.xlane.xlu0 %1387
    %v1389 = vmul.f32 %v1385, 0.032258064
    %v1390 = vmul.f32 %v1388, 0.032258064
    %v1392 = vlaneseq
    %v1393 = vshrl.u32 %v1392, 7
    %v1394 = vsub.s32 0, %v1393
    %v1395 = vrot.slane %v1369, %v1394
    %v1397 = vmul.f32 %v1395, %v1379
    %v1398 = vmul.f32 %v1395, %v1380
    %v1399 = vrsqrt.pop %v1389
    %v1400 = vmul.f32 %v1389, %v1399
    %vm1401 = vcmp.eq.f32.partialorder %v1389, inf
    %v1402 = vsel %vm1401, %v1389, %v1400
    %vm1403 = vcmp.eq.f32.partialorder %v1389, 0.0
    %v1404 = vand.u32 %v1389, 2147483648
    %v1405 = vsel %vm1403, %v1404, %v1402
    %v1406 = vrsqrt.pop %v1390
    %v1407 = vmul.f32 %v1390, %v1406
    %vm1408 = vcmp.eq.f32.partialorder %v1390, inf
    %v1409 = vsel %vm1408, %v1390, %v1407
    %vm1410 = vcmp.eq.f32.partialorder %v1390, 0.0
    %v1411 = vand.u32 %v1390, 2147483648
    %v1412 = vsel %vm1410, %v1411, %v1409
    %v1413 = vadd.f32 %v1405, 1e-06
    %v1414 = vadd.f32 %v1412, 1e-06
    %v1415 = vrcp.pop %v1413
    %v1416 = vmul.f32 %v1397, %v1415
    %v1417 = vrcp.pop %v1414
    %v1418 = vmul.f32 %v1398, %v1417
    %v1420 = vlaneseq
    %v1421 = vshrl.u32 %v1420, 7
    %v1422 = vsub.s32 0, %v1421
    %v1423 = vrot.slane %v1370, %v1422
    %v1425 = vadd.f32 %v1416, %v1423
    %v1426 = vadd.f32 %v1418, %v1423
    %v1427 = vpack.c.bf16 %v1426, %v1425
    %v1428 = vld [vmem:[#allocation5] sm:$0xf]
    %v1429 = vld [vmem:[#allocation5 + $0x4] sm:$0xf]
    %v1430 = vld [vmem:[#allocation5 + $0x8] sm:$0xf]
    %v1431 = vld [vmem:[#allocation5 + $0xc] sm:$0xf]
    %v1432 = vld [vmem:[%s15] sm:$0x1]
    %v1434 = vlaneseq
    %v1435 = vshrl.u32 %v1434, 7
    %v1436 = vsub.s32 0, %v1435
    %v1437 = vrot.slane %v1432, %v1436
    %v1443 = vunpack.c.l.b16 %v1428
    %v1444 = vunpack.c.l.b16 %v1429
    %v1445 = vunpack.c.l.b16 %v1430
    %v1446 = vunpack.c.l.b16 %v1431
    %v1447 = vpack.c.b16 %v1444, %v1443
    %v1448 = vpack.c.b16 %v1446, %v1445
    %v1452 = vsel %vm99, %v1427, 0
    %1454 = vmatprep.subr.bf16.mxu0 0
    %1455 = vmatpush1.bf16.msra.mxu0 0
    %1456 = vmatprep.subr.bf16.mxu0 0
    %1457 = vmatpush1.bf16.msra.mxu0 0
    %1458 = vmatprep.subr.bf16.mxu0 0
    %1459 = vmatpush1.bf16.msra.mxu0 0
    %1460 = vmatprep.subr.bf16.mxu0 0
    %1461 = vmatpush1.bf16.msra.mxu0 0
    %1462 = vmatprep.subr.bf16.mxu0 0
    %1463 = vmatpush1.bf16.msra.mxu0 0
    %1464 = vmatprep.subr.bf16.mxu0 0
    %1465 = vmatpush1.bf16.msra.mxu0 0
    %1466 = vmatprep.subr.bf16.mxu0 0
    %1467 = vmatpush1.bf16.msra.mxu0 %v1448
    %1468 = vmatprep.subr.bf16.mxu0 0
    %1469 = vmatpush1.bf16.msra.mxu0 %v1447
    %1470 = vmatprep.subr.bf16.mxu0 0
    %1471 = vmatpush2.bf16.msra.mxu0 0
    %1472 = vmatprep.subr.bf16.mxu0 0
    %1473 = vmatpush2.bf16.msra.mxu0 0
    %1474 = vmatprep.subr.bf16.mxu0 0
    %1475 = vmatpush2.bf16.msra.mxu0 0
    %1476 = vmatprep.subr.bf16.mxu0 0
    %1477 = vmatpush2.bf16.msra.mxu0 0
    %1478 = vmatprep.subr.bf16.mxu0 0
    %1479 = vmatpush2.bf16.msra.mxu0 0
    %1480 = vmatprep.subr.bf16.mxu0 0
    %1481 = vmatpush2.bf16.msra.mxu0 0
    %1482 = vmatprep.subr.bf16.mxu0 0
    %1483 = vmatpush2.bf16.msra.mxu0 0
    %1484 = vmatprep.subr.bf16.mxu0 0
    %1485 = vmatpush2.bf16.msra.mxu0 0
    %1486 = vmatprep.mubr.bf16.mxu0 0
    %1487 = vmatmul.mubr.bf16.gmra.mxu0 %v1452
    %v1488 = vpop.f32.mrf.mxu0
    %v1489 = vadd.f32 %v1437, %v1488
    %v1490 = vpop.f32.mrf.mxu0
    %v1491 = vpop.f32.mrf.mxu0
    %v1492 = vadd.f32 %v1437, %v1491
    %v1493 = vpop.f32.mrf.mxu0
    %1494 = vdwg.mxu0
    %v1495 = vmax.f32 %v1489, 0.0
    %v1496 = vmax.f32 %v1492, 0.0
    %v1497 = vpack.c.bf16 %v1496, %v1495
    %v1498 = vld [vmem:[%s16] sm:$0xf]
    %v1499 = vld [vmem:[%s16 + $0x4] sm:$0xf]
    %v1500 = vld [vmem:[%s16 + $0x8] sm:$0xf]
    %v1501 = vld [vmem:[%s16 + $0xc] sm:$0xf]
    %v1502 = vld [vmem:[%s16 + $0x10] sm:$0xf]
    %v1503 = vld [vmem:[%s16 + $0x14] sm:$0xf]
    %v1504 = vld [vmem:[%s16 + $0x18] sm:$0xf]
    %v1505 = vld [vmem:[%s16 + $0x1c] sm:$0xf]
    %v1506 = vld [vmem:[%s16 + $0x20] sm:$0xf]
    %v1507 = vld [vmem:[%s16 + $0x24] sm:$0xf]
    %v1508 = vld [vmem:[%s16 + $0x28] sm:$0xf]
    %v1509 = vld [vmem:[%s16 + $0x2c] sm:$0xf]
    %v1510 = vld [vmem:[%s16 + $0x30] sm:$0xf]
    %v1511 = vld [vmem:[%s16 + $0x34] sm:$0xf]
    %v1512 = vld [vmem:[%s16 + $0x38] sm:$0xf]
    %v1513 = vld [vmem:[%s16 + $0x3c] sm:$0xf]
    %v1514 = vld [vmem:[%s17] sm:$0x1]
    %v1516 = vlaneseq
    %v1517 = vshrl.u32 %v1516, 7
    %v1518 = vsub.s32 0, %v1517
    %v1519 = vrot.slane %v1514, %v1518
    %v1537 = vunpack.c.l.b16 %v1498
    %v1538 = vunpack.c.l.b16 %v1499
    %v1539 = vunpack.c.l.b16 %v1500
    %v1540 = vunpack.c.l.b16 %v1501
    %v1541 = vunpack.c.l.b16 %v1502
    %v1542 = vunpack.c.l.b16 %v1503
    %v1543 = vunpack.c.l.b16 %v1504
    %v1544 = vunpack.c.l.b16 %v1505
    %v1545 = vunpack.c.l.b16 %v1506
    %v1546 = vunpack.c.l.b16 %v1507
    %v1547 = vunpack.c.l.b16 %v1508
    %v1548 = vunpack.c.l.b16 %v1509
    %v1549 = vunpack.c.l.b16 %v1510
    %v1550 = vunpack.c.l.b16 %v1511
    %v1551 = vunpack.c.l.b16 %v1512
    %v1552 = vunpack.c.l.b16 %v1513
    %v1553 = vpack.c.b16 %v1538, %v1537
    %v1554 = vpack.c.b16 %v1540, %v1539
    %v1555 = vpack.c.b16 %v1542, %v1541
    %v1556 = vpack.c.b16 %v1544, %v1543
    %v1557 = vpack.c.b16 %v1546, %v1545
    %v1558 = vpack.c.b16 %v1548, %v1547
    %v1559 = vpack.c.b16 %v1550, %v1549
    %v1560 = vpack.c.b16 %v1552, %v1551
    %1569 = vmatprep.subr.bf16.mxu0 0
    %1570 = vmatpush1.bf16.msra.mxu0 %v1560
    %1571 = vmatprep.subr.bf16.mxu0 0
    %1572 = vmatpush1.bf16.msra.mxu0 %v1559
    %1573 = vmatprep.subr.bf16.mxu0 0
    %1574 = vmatpush1.bf16.msra.mxu0 %v1558
    %1575 = vmatprep.subr.bf16.mxu0 0
    %1576 = vmatpush1.bf16.msra.mxu0 %v1557
    %1577 = vmatprep.subr.bf16.mxu0 0
    %1578 = vmatpush1.bf16.msra.mxu0 %v1556
    %1579 = vmatprep.subr.bf16.mxu0 0
    %1580 = vmatpush1.bf16.msra.mxu0 %v1555
    %1581 = vmatprep.subr.bf16.mxu0 0
    %1582 = vmatpush1.bf16.msra.mxu0 %v1554
    %1583 = vmatprep.subr.bf16.mxu0 0
    %1584 = vmatpush1.bf16.msra.mxu0 %v1553
    %1585 = vmatprep.subr.bf16.mxu0 0
    %1586 = vmatpush2.bf16.msra.mxu0 0
    %1587 = vmatprep.subr.bf16.mxu0 0
    %1588 = vmatpush2.bf16.msra.mxu0 0
    %1589 = vmatprep.subr.bf16.mxu0 0
    %1590 = vmatpush2.bf16.msra.mxu0 0
    %1591 = vmatprep.subr.bf16.mxu0 0
    %1592 = vmatpush2.bf16.msra.mxu0 0
    %1593 = vmatprep.subr.bf16.mxu0 0
    %1594 = vmatpush2.bf16.msra.mxu0 0
    %1595 = vmatprep.subr.bf16.mxu0 0
    %1596 = vmatpush2.bf16.msra.mxu0 0
    %1597 = vmatprep.subr.bf16.mxu0 0
    %1598 = vmatpush2.bf16.msra.mxu0 0
    %1599 = vmatprep.subr.bf16.mxu0 0
    %1600 = vmatpush2.bf16.msra.mxu0 0
    %1601 = vmatprep.mubr.bf16.mxu0 0
    %1602 = vmatmul.mubr.bf16.gmra.mxu0 %v1497
    %v1603 = vpop.f32.mrf.mxu0
    %v1604 = vadd.f32 %v1519, %v1603
    %v1605 = vpop.f32.mrf.mxu0
    %v1606 = vpop.f32.mrf.mxu0
    %v1607 = vadd.f32 %v1519, %v1606
    %v1608 = vpop.f32.mrf.mxu0
    %1609 = vdwg.mxu0
    %v1610 = vadd.f32 %v1367, %v1604
    %v1611 = vadd.f32 %v1368, %v1607
    %1612 = vst.msk [vmem:[#allocation7] sm:$0xff] %vm99, %v1610
    %1613 = vst.msk [vmem:[#allocation7 + $0x8] sm:$0xff] %vm99, %v1611
    // Predicated region
    $region82: #{tpu_custom_call.1} parent=1 // pred_check
      _
    $region83: #{tpu_custom_call.1} parent=1 // pred_check_branch
      %1615 = sbr.rel (0) target = $region85
    $region84: #{tpu_custom_call.1} parent=1 // pred_region
      %s1617 = ssub.s32 256, 256
      %1618 = vsyncadd [#allocation4], %s1617
      %s1619 = sshll.u32 [#allocation7], 4
      %s1620 = int_to_ptr.vmem [resolvable:$true] %s1619
      %1625 = dma.vmem_to_hbm [thread:$0]  %s1620, 256, %s18, [#allocation4], 128, 128, 8
    $region85: #{tpu_custom_call.1} parent=1 // pred_fallthru
      _
    // Predicated region
    $region86: #{tpu_custom_call.1} parent=1 // pred_check
      _
    $region87: #{tpu_custom_call.1} parent=1 // pred_check_branch
      %1627 = sbr.rel (0) target = $region89
    $region88: #{tpu_custom_call.1} parent=1 // pred_region
      %1628 = dma.done [#allocation4], 256
    $region89: #{tpu_custom_call.1} parent=1 // pred_fallthru
      _
    %1629 = vsyncpa [#allocation3], 1
    %1630 = vsyncpa [#allocation6], 1
    %1631 = vsyncpa [#allocation4], 1

// kernel: tpu_custom_call.1
$region0: #{tpu_custom_call.1}
  #allocation0 [shape = 'u32[]', space=smem, size = 0x4, offset = 0x4, fixed_abs, tag = 'smem constant byte address 0x4 - core index']
  #allocation1 [shape = 'u32[144,128]{1,0:T(1,128)}', space=vmem, size = 0x12000, scoped, tag = 'internal scratch']
  %s0 = inlined_call_operand.vmem [shape: f32[2,8,32], index: 0, kind: input, shape index: {}]
  %s1 = inlined_call_operand.hbm [shape: f32[2,1,8], index: 1, kind: input, shape index: {}]
  %s2 = inlined_call_operand.vmem [shape: f32[1,32], index: 2, kind: input, shape index: {}]
  %s3 = inlined_call_operand.vmem [shape: f32[1,32], index: 3, kind: input, shape index: {}]
  %s4 = inlined_call_operand.vmem [shape: bf16[32,32], index: 4, kind: input, shape index: {}]
  %s5 = inlined_call_operand.vmem [shape: f32[1,32], index: 5, kind: input, shape index: {}]
  %s6 = inlined_call_operand.vmem [shape: bf16[32,32], index: 6, kind: input, shape index: {}]
  %s7 = inlined_call_operand.vmem [shape: f32[1,32], index: 7, kind: input, shape index: {}]
  %s8 = inlined_call_operand.vmem [shape: bf16[32,32], index: 8, kind: input, shape index: {}]
  %s9 = inlined_call_operand.vmem [shape: f32[1,32], index: 9, kind: input, shape index: {}]
  %s10 = inlined_call_operand.vmem [shape: bf16[32,32], index: 10, kind: input, shape index: {}]
  %s11 = inlined_call_operand.vmem [shape: f32[1,32], index: 11, kind: input, shape index: {}]
  %s12 = inlined_call_operand.vmem [shape: f32[1,32], index: 12, kind: input, shape index: {}]
  %s13 = inlined_call_operand.vmem [shape: f32[1,32], index: 13, kind: input, shape index: {}]
  %s14 = inlined_call_operand.hbm [shape: bf16[32,128], index: 14, kind: input, shape index: {}]
  %s15 = inlined_call_operand.vmem [shape: f32[1,128], index: 15, kind: input, shape index: {}]
  %s16 = inlined_call_operand.vmem [shape: bf16[128,32], index: 16, kind: input, shape index: {}]
  %s17 = inlined_call_operand.vmem [shape: f32[1,32], index: 17, kind: input, shape index: {}]
  %s18 = inlined_call_operand.hbm [shape: f32[2,8,32], index: 18, kind: output, shape index: {}]
  %s19 = sld [smem:[#allocation0]]
  $region90: #{tpu_custom_call.1} parent=0
    _
  %s21 = ssub.s32 1, %s19
  %s22 = scalar_select 0, %s21, %s19
  $region1: #{tpu_custom_call.1} parent=0
    #allocation2 [shape = 'u8[1024]{0}', space=vmem, size = 0x400, scoped, tag = 'input window, operand 1, single buffered']
    #allocation3 [shape = 's32[1]{0}', space=sflag, size = 0x4, scoped, tag = 'scoped memory for tpu_custom_call.1']
    #allocation4 [shape = 's32[1]{0}', space=sflag, size = 0x4, scoped, tag = 'scoped memory for tpu_custom_call.1']
    #allocation5 [shape = 'u8[8192]{0}', space=vmem, size = 0x2000, scoped, tag = 'input window, operand 14, single buffered']
    #allocation6 [shape = 's32[1]{0}', space=sflag, size = 0x4, scoped, tag = 'scoped memory for tpu_custom_call.1']
    #allocation7 [shape = 'u8[8192]{0}', space=vmem, size = 0x2000, scoped, tag = 'output window, operand 0, single buffered']
    %23 = vsyncpa [#allocation3], 0
    %24 = vsyncpa [#allocation6], 0
    %25 = vsyncpa [#allocation4], 0
    // Predicated region
    $region2: #{tpu_custom_call.1} parent=1 // pred_check
      _
    $region3: #{tpu_custom_call.1} parent=1 // pred_check_branch
      %27 = sbr.rel (0) target = $region5
    $region4: #{tpu_custom_call.1} parent=1 // pred_region
      _
    $region5: #{tpu_custom_call.1} parent=1 // pred_fallthru
      _
    // Predicated region
    $region6: #{tpu_custom_call.1} parent=1 // pred_check
      _
    $region7: #{tpu_custom_call.1} parent=1 // pred_check_branch
      %29 = sbr.rel (0) target = $region9
    $region8: #{tpu_custom_call.1} parent=1 // pred_region
      %s31 = ssub.s32 32, 32
      %32 = vsyncadd [#allocation3], %s31
      %s33 = sshll.u32 [#allocation2], 4
      %s34 = int_to_ptr.vmem [resolvable:$true] %s33
      %39 = dma.hbm_to_vmem [thread:$0]  %s1, 32, %s34, [#allocation3], 16, 16, 1
    $region9: #{tpu_custom_call.1} parent=1 // pred_fallthru
      _
    // Predicated region
    $region10: #{tpu_custom_call.1} parent=1 // pred_check
      _
    $region11: #{tpu_custom_call.1} parent=1 // pred_check_branch
      %41 = sbr.rel (0) target = $region13
    $region12: #{tpu_custom_call.1} parent=1 // pred_region
      _
    $region13: #{tpu_custom_call.1} parent=1 // pred_fallthru
      _
    // Predicated region
    $region14: #{tpu_custom_call.1} parent=1 // pred_check
      _
    $region15: #{tpu_custom_call.1} parent=1 // pred_check_branch
      %43 = sbr.rel (0) target = $region17
    $region16: #{tpu_custom_call.1} parent=1 // pred_region
      _
    $region17: #{tpu_custom_call.1} parent=1 // pred_fallthru
      _
    // Predicated region
    $region18: #{tpu_custom_call.1} parent=1 // pred_check
      _
    $region19: #{tpu_custom_call.1} parent=1 // pred_check_branch
      %45 = sbr.rel (0) target = $region21
    $region20: #{tpu_custom_call.1} parent=1 // pred_region
      _
    $region21: #{tpu_custom_call.1} parent=1 // pred_fallthru
      _
    // Predicated region
    $region22: #{tpu_custom_call.1} parent=1 // pred_check
      _
    $region23: #{tpu_custom_call.1} parent=1 // pred_check_branch
      %47 = sbr.rel (0) target = $region25
    $region24: #{tpu_custom_call.1} parent=1 // pred_region
      _
    $region25: #{tpu_custom_call.1} parent=1 // pred_fallthru
      _
    // Predicated region
    $region26: #{tpu_custom_call.1} parent=1 // pred_check
      _
    $region27: #{tpu_custom_call.1} parent=1 // pred_check_branch
      %49 = sbr.rel (0) target = $region29
    $region28: #{tpu_custom_call.1} parent=1 // pred_region
      _
    $region29: #{tpu_custom_call.1} parent=1 // pred_fallthru
      _
    // Predicated region
    $region30: #{tpu_custom_call.1} parent=1 // pred_check
      _
    $region31: #{tpu_custom_call.1} parent=1 // pred_check_branch
      %51 = sbr.rel (0) target = $region33
    $region32: #{tpu_custom_call.1} parent=1 // pred_region
      _
    $region33: #{tpu_custom_call.1} parent=1 // pred_fallthru
      _
    // Predicated region
    $region34: #{tpu_custom_call.1} parent=1 // pred_check
      _
    $region35: #{tpu_custom_call.1} parent=1 // pred_check_branch
      %53 = sbr.rel (0) target = $region37
    $region36: #{tpu_custom_call.1} parent=1 // pred_region
      _
    $region37: #{tpu_custom_call.1} parent=1 // pred_fallthru
      _
    // Predicated region
    $region38: #{tpu_custom_call.1} parent=1 // pred_check
      _
    $region39: #{tpu_custom_call.1} parent=1 // pred_check_branch
      %55 = sbr.rel (0) target = $region41
    $region40: #{tpu_custom_call.1} parent=1 // pred_region
      _
    $region41: #{tpu_custom_call.1} parent=1 // pred_fallthru
      _
    // Predicated region
    $region42: #{tpu_custom_call.1} parent=1 // pred_check
      _
    $region43: #{tpu_custom_call.1} parent=1 // pred_check_branch
      %57 = sbr.rel (0) target = $region45
    $region44: #{tpu_custom_call.1} parent=1 // pred_region
      _
    $region45: #{tpu_custom_call.1} parent=1 // pred_fallthru
      _
    // Predicated region
    $region46: #{tpu_custom_call.1} parent=1 // pred_check
      _
    $region47: #{tpu_custom_call.1} parent=1 // pred_check_branch
      %59 = sbr.rel (0) target = $region49
    $region48: #{tpu_custom_call.1} parent=1 // pred_region
      _
    $region49: #{tpu_custom_call.1} parent=1 // pred_fallthru
      _
    // Predicated region
    $region50: #{tpu_custom_call.1} parent=1 // pred_check
      _
    $region51: #{tpu_custom_call.1} parent=1 // pred_check_branch
      %61 = sbr.rel (0) target = $region53
    $region52: #{tpu_custom_call.1} parent=1 // pred_region
      _
    $region53: #{tpu_custom_call.1} parent=1 // pred_fallthru
      _
    // Predicated region
    $region54: #{tpu_custom_call.1} parent=1 // pred_check
      _
    $region55: #{tpu_custom_call.1} parent=1 // pred_check_branch
      %63 = sbr.rel (0) target = $region57
    $region56: #{tpu_custom_call.1} parent=1 // pred_region
      _
    $region57: #{tpu_custom_call.1} parent=1 // pred_fallthru
      _
    // Predicated region
    $region58: #{tpu_custom_call.1} parent=1 // pred_check
      _
    $region59: #{tpu_custom_call.1} parent=1 // pred_check_branch
      %65 = sbr.rel (0) target = $region61
    $region60: #{tpu_custom_call.1} parent=1 // pred_region
      %s67 = ssub.s32 256, 256
      %68 = vsyncadd [#allocation6], %s67
      %s69 = sshll.u32 [#allocation5], 4
      %s70 = int_to_ptr.vmem [resolvable:$true] %s69
      %75 = dma.hbm_to_vmem [thread:$0]  %s14, 256, %s70, [#allocation6], 64, 64, 4
    $region61: #{tpu_custom_call.1} parent=1 // pred_fallthru
      _
    // Predicated region
    $region62: #{tpu_custom_call.1} parent=1 // pred_check
      _
    $region63: #{tpu_custom_call.1} parent=1 // pred_check_branch
      %77 = sbr.rel (0) target = $region65
    $region64: #{tpu_custom_call.1} parent=1 // pred_region
      _
    $region65: #{tpu_custom_call.1} parent=1 // pred_fallthru
      _
    // Predicated region
    $region66: #{tpu_custom_call.1} parent=1 // pred_check
      _
    $region67: #{tpu_custom_call.1} parent=1 // pred_check_branch
      %79 = sbr.rel (0) target = $region69
    $region68: #{tpu_custom_call.1} parent=1 // pred_region
      _
    $region69: #{tpu_custom_call.1} parent=1 // pred_fallthru
      _
    // Predicated region
    $region70: #{tpu_custom_call.1} parent=1 // pred_check
      _
    $region71: #{tpu_custom_call.1} parent=1 // pred_check_branch
      %81 = sbr.rel (0) target = $region73
    $region72: #{tpu_custom_call.1} parent=1 // pred_region
      _
    $region73: #{tpu_custom_call.1} parent=1 // pred_fallthru
      _
    // Predicated region
    $region74: #{tpu_custom_call.1} parent=1 // pred_check
      _
    $region75: #{tpu_custom_call.1} parent=1 // pred_check_branch
      %83 = sbr.rel (0) target = $region77
    $region76: #{tpu_custom_call.1} parent=1 // pred_region
      %84 = dma.done [#allocation3], 32
    $region77: #{tpu_custom_call.1} parent=1 // pred_fallthru
      _
    // Predicated region
    $region78: #{tpu_custom_call.1} parent=1 // pred_check
      _
    $region79: #{tpu_custom_call.1} parent=1 // pred_check_branch
      %86 = sbr.rel (0) target = $region81
    $region80: #{tpu_custom_call.1} parent=1 // pred_region
      %87 = dma.done [#allocation6], 256
    $region81: #{tpu_custom_call.1} parent=1 // pred_fallthru
      _
    %v89 = vld [vmem:[%s0] sm:$0xff]
    %v90 = vld [vmem:[%s0 + $0x8] sm:$0xff]
    %v91 = vld [vmem:[#allocation2] sm:$0x1]
    %v92 = vld [vmem:[#allocation2 + $0x1] sm:$0x1]
    %v93 = vsub.f32 %v91, 1.0
    %v94 = vsub.f32 %v92, 1.0
    %v95 = vmul.f32 %v93, 1e+09
    %v96 = vmul.f32 %v94, 1e+09
    %v97 = vld [vmem:[%s2] sm:$0x1]
    %v98 = vld [vmem:[%s3] sm:$0x1]
    %vm99 = vcmask 261120
    %v100 = vsel %vm99, %v89, 0.0
    %101 = vadd.xlane.f32.xlu0 %v100
    %v102 = vpop.xlane.xlu0 %101
    %v103 = vsel %vm99, %v90, 0.0
    %104 = vadd.xlane.f32.xlu0 %v103
    %v105 = vpop.xlane.xlu0 %104
    %v106 = vrcp.pop 32.0
    %v107 = vmul.f32 %v102, %v106
    %v108 = vmul.f32 %v105, %v106
    %v109 = vsub.f32 %v89, %v107
    %v110 = vsub.f32 %v90, %v108
    %v111 = vmul.f32 %v109, %v109
    %v112 = vmul.f32 %v110, %v110
    %v113 = vsel %vm99, %v111, 0.0
    %114 = vadd.xlane.f32.xlu0 %v113
    %v115 = vpop.xlane.xlu0 %114
    %v116 = vsel %vm99, %v112, 0.0
    %117 = vadd.xlane.f32.xlu0 %v116
    %v118 = vpop.xlane.xlu0 %117
    %v119 = vmul.f32 %v115, 0.032258064
    %v120 = vmul.f32 %v118, 0.032258064
    %v122 = vlaneseq
    %v123 = vshrl.u32 %v122, 7
    %v124 = vsub.s32 0, %v123
    %v125 = vrot.slane %v97, %v124
    %v127 = vmul.f32 %v125, %v109
    %v128 = vmul.f32 %v125, %v110
    %v129 = vrsqrt.pop %v119
    %v130 = vmul.f32 %v119, %v129
    %vm131 = vcmp.eq.f32.partialorder %v119, inf
    %v132 = vsel %vm131, %v119, %v130
    %vm133 = vcmp.eq.f32.partialorder %v119, 0.0
    %v134 = vand.u32 %v119, 2147483648
    %v135 = vsel %vm133, %v134, %v132
    %v136 = vrsqrt.pop %v120
    %v137 = vmul.f32 %v120, %v136
    %vm138 = vcmp.eq.f32.partialorder %v120, inf
    %v139 = vsel %vm138, %v120, %v137
    %vm140 = vcmp.eq.f32.partialorder %v120, 0.0
    %v141 = vand.u32 %v120, 2147483648
    %v142 = vsel %vm140, %v141, %v139
    %v143 = vadd.f32 %v135, 1e-06
    %v144 = vadd.f32 %v142, 1e-06
    %v145 = vrcp.pop %v143
    %v146 = vmul.f32 %v127, %v145
    %v147 = vrcp.pop %v144
    %v148 = vmul.f32 %v128, %v147
    %v150 = vlaneseq
    %v151 = vshrl.u32 %v150, 7
    %v152 = vsub.s32 0, %v151
    %v153 = vrot.slane %v98, %v152
    %v155 = vadd.f32 %v146, %v153
    %v156 = vadd.f32 %v148, %v153
    %v157 = vpack.c.bf16 %v156, %v155
    %v158 = vld [vmem:[%s4] sm:$0xf]
    %v159 = vld [vmem:[%s4 + $0x4] sm:$0xf]
    %v160 = vld [vmem:[%s4 + $0x8] sm:$0xf]
    %v161 = vld [vmem:[%s4 + $0xc] sm:$0xf]
    %v162 = vld [vmem:[%s5] sm:$0x1]
    %v164 = vlaneseq
    %v165 = vshrl.u32 %v164, 7
    %v166 = vsub.s32 0, %v165
    %v167 = vrot.slane %v162, %v166
    %v173 = vunpack.c.l.b16 %v158
    %v174 = vunpack.c.l.b16 %v159
    %v175 = vunpack.c.l.b16 %v160
    %v176 = vunpack.c.l.b16 %v161
    %v177 = vpack.c.b16 %v174, %v173
    %v178 = vpack.c.b16 %v176, %v175
    %v182 = vsel %vm99, %v157, 0
    %184 = vmatprep.subr.bf16.mxu0 0
    %185 = vmatpush1.bf16.msra.mxu0 0
    %186 = vmatprep.subr.bf16.mxu0 0
    %187 = vmatpush1.bf16.msra.mxu0 0
    %188 = vmatprep.subr.bf16.mxu0 0
    %189 = vmatpush1.bf16.msra.mxu0 0
    %190 = vmatprep.subr.bf16.mxu0 0
    %191 = vmatpush1.bf16.msra.mxu0 0
    %192 = vmatprep.subr.bf16.mxu0 0
    %193 = vmatpush1.bf16.msra.mxu0 0
    %194 = vmatprep.subr.bf16.mxu0 0
    %195 = vmatpush1.bf16.msra.mxu0 0
    %196 = vmatprep.subr.bf16.mxu0 0
    %197 = vmatpush1.bf16.msra.mxu0 %v178
    %198 = vmatprep.subr.bf16.mxu0 0
    %199 = vmatpush1.bf16.msra.mxu0 %v177
    %200 = vmatprep.subr.bf16.mxu0 0
    %201 = vmatpush2.bf16.msra.mxu0 0
    %202 = vmatprep.subr.bf16.mxu0 0
    %203 = vmatpush2.bf16.msra.mxu0 0
    %204 = vmatprep.subr.bf16.mxu0 0
    %205 = vmatpush2.bf16.msra.mxu0 0
    %206 = vmatprep.subr.bf16.mxu0 0
    %207 = vmatpush2.bf16.msra.mxu0 0
    %208 = vmatprep.subr.bf16.mxu0 0
    %209 = vmatpush2.bf16.msra.mxu0 0
    %210 = vmatprep.subr.bf16.mxu0 0
    %211 = vmatpush2.bf16.msra.mxu0 0
    %212 = vmatprep.subr.bf16.mxu0 0
    %213 = vmatpush2.bf16.msra.mxu0 0
    %214 = vmatprep.subr.bf16.mxu0 0
    %215 = vmatpush2.bf16.msra.mxu0 0
    %216 = vmatprep.mubr.bf16.mxu0 0
    %217 = vmatmul.mubr.bf16.gmra.mxu0 %v182
    %v218 = vpop.f32.mrf.mxu0
    %v219 = vadd.f32 %v167, %v218
    %v220 = vpop.f32.mrf.mxu0
    %v221 = vpop.f32.mrf.mxu0
    %v222 = vadd.f32 %v167, %v221
    %v223 = vpop.f32.mrf.mxu0
    %224 = vdwg.mxu0
    %v225 = vld [vmem:[%s6] sm:$0xf]
    %v226 = vld [vmem:[%s6 + $0x4] sm:$0xf]
    %v227 = vld [vmem:[%s6 + $0x8] sm:$0xf]
    %v228 = vld [vmem:[%s6 + $0xc] sm:$0xf]
    %v229 = vld [vmem:[%s7] sm:$0x1]
    %v231 = vlaneseq
    %v232 = vshrl.u32 %v231, 7
    %v233 = vsub.s32 0, %v232
    %v234 = vrot.slane %v229, %v233
    %v240 = vunpack.c.l.b16 %v225
    %v241 = vunpack.c.l.b16 %v226
    %v242 = vunpack.c.l.b16 %v227
    %v243 = vunpack.c.l.b16 %v228
    %v244 = vpack.c.b16 %v241, %v240
    %v245 = vpack.c.b16 %v243, %v242
    %248 = vmatprep.subr.bf16.mxu0 0
    %249 = vmatpush1.bf16.msra.mxu0 0
    %250 = vmatprep.subr.bf16.mxu0 0
    %251 = vmatpush1.bf16.msra.mxu0 0
    %252 = vmatprep.subr.bf16.mxu0 0
    %253 = vmatpush1.bf16.msra.mxu0 0
    %254 = vmatprep.subr.bf16.mxu0 0
    %255 = vmatpush1.bf16.msra.mxu0 0
    %256 = vmatprep.subr.bf16.mxu0 0
    %257 = vmatpush1.bf16.msra.mxu0 0
    %258 = vmatprep.subr.bf16.mxu0 0
    %259 = vmatpush1.bf16.msra.mxu0 0
    %260 = vmatprep.subr.bf16.mxu0 0
    %261 = vmatpush1.bf16.msra.mxu0 %v245
    %262 = vmatprep.subr.bf16.mxu0 0
    %263 = vmatpush1.bf16.msra.mxu0 %v244
    %264 = vmatprep.subr.bf16.mxu0 0
    %265 = vmatpush2.bf16.msra.mxu0 0
    %266 = vmatprep.subr.bf16.mxu0 0
    %267 = vmatpush2.bf16.msra.mxu0 0
    %268 = vmatprep.subr.bf16.mxu0 0
    %269 = vmatpush2.bf16.msra.mxu0 0
    %270 = vmatprep.subr.bf16.mxu0 0
    %271 = vmatpush2.bf16.msra.mxu0 0
    %272 = vmatprep.subr.bf16.mxu0 0
    %273 = vmatpush2.bf16.msra.mxu0 0
    %274 = vmatprep.subr.bf16.mxu0 0
    %275 = vmatpush2.bf16.msra.mxu0 0
    %276 = vmatprep.subr.bf16.mxu0 0
    %277 = vmatpush2.bf16.msra.mxu0 0
    %278 = vmatprep.subr.bf16.mxu0 0
    %279 = vmatpush2.bf16.msra.mxu0 0
    %280 = vmatprep.mubr.bf16.mxu0 0
    %281 = vmatmul.mubr.bf16.gmra.mxu0 %v182
    %v282 = vpop.f32.mrf.mxu0
    %v283 = vadd.f32 %v234, %v282
    %v284 = vpop.f32.mrf.mxu0
    %v285 = vpop.f32.mrf.mxu0
    %v286 = vadd.f32 %v234, %v285
    %v287 = vpop.f32.mrf.mxu0
    %288 = vdwg.mxu0
    %v289 = vld [vmem:[%s8] sm:$0xf]
    %v290 = vld [vmem:[%s8 + $0x4] sm:$0xf]
    %v291 = vld [vmem:[%s8 + $0x8] sm:$0xf]
    %v292 = vld [vmem:[%s8 + $0xc] sm:$0xf]
    %v293 = vld [vmem:[%s9] sm:$0x1]
    %v295 = vlaneseq
    %v296 = vshrl.u32 %v295, 7
    %v297 = vsub.s32 0, %v296
    %v298 = vrot.slane %v293, %v297
    %v304 = vunpack.c.l.b16 %v289
    %v305 = vunpack.c.l.b16 %v290
    %v306 = vunpack.c.l.b16 %v291
    %v307 = vunpack.c.l.b16 %v292
    %v308 = vpack.c.b16 %v305, %v304
    %v309 = vpack.c.b16 %v307, %v306
    %312 = vmatprep.subr.bf16.mxu0 0
    %313 = vmatpush1.bf16.msra.mxu0 0
    %314 = vmatprep.subr.bf16.mxu0 0
    %315 = vmatpush1.bf16.msra.mxu0 0
    %316 = vmatprep.subr.bf16.mxu0 0
    %317 = vmatpush1.bf16.msra.mxu0 0
    %318 = vmatprep.subr.bf16.mxu0 0
    %319 = vmatpush1.bf16.msra.mxu0 0
    %320 = vmatprep.subr.bf16.mxu0 0
    %321 = vmatpush1.bf16.msra.mxu0 0
    %322 = vmatprep.subr.bf16.mxu0 0
    %323 = vmatpush1.bf16.msra.mxu0 0
    %324 = vmatprep.subr.bf16.mxu0 0
    %325 = vmatpush1.bf16.msra.mxu0 %v309
    %326 = vmatprep.subr.bf16.mxu0 0
    %327 = vmatpush1.bf16.msra.mxu0 %v308
    %328 = vmatprep.subr.bf16.mxu0 0
    %329 = vmatpush2.bf16.msra.mxu0 0
    %330 = vmatprep.subr.bf16.mxu0 0
    %331 = vmatpush2.bf16.msra.mxu0 0
    %332 = vmatprep.subr.bf16.mxu0 0
    %333 = vmatpush2.bf16.msra.mxu0 0
    %334 = vmatprep.subr.bf16.mxu0 0
    %335 = vmatpush2.bf16.msra.mxu0 0
    %336 = vmatprep.subr.bf16.mxu0 0
    %337 = vmatpush2.bf16.msra.mxu0 0
    %338 = vmatprep.subr.bf16.mxu0 0
    %339 = vmatpush2.bf16.msra.mxu0 0
    %340 = vmatprep.subr.bf16.mxu0 0
    %341 = vmatpush2.bf16.msra.mxu0 0
    %342 = vmatprep.subr.bf16.mxu0 0
    %343 = vmatpush2.bf16.msra.mxu0 0
    %344 = vmatprep.mubr.bf16.mxu0 0
    %345 = vmatmul.mubr.bf16.gmra.mxu0 %v182
    %v346 = vpop.f32.mrf.mxu0
    %v347 = vadd.f32 %v298, %v346
    %v348 = vpop.f32.mrf.mxu0
    %v349 = vpop.f32.mrf.mxu0
    %v350 = vadd.f32 %v298, %v349
    %v351 = vpop.f32.mrf.mxu0
    %352 = vdwg.mxu0
    %v353 = vpack.c.bf16 %v222, %v219
    %v355 = vunpack.c.l.b16 %v353
    %v356 = vunpack.c.h.b16 %v353
    %v357 = vpack.c.b16 %v355, %v355
    %v358 = vpack.c.b16 %v356, %v356
    %v359 = vpack.c.bf16 %v286, %v283
    %v361 = vunpack.c.l.b16 %v359
    %v362 = vunpack.c.h.b16 %v359
    %v363 = vpack.c.b16 %v361, %v361
    %v364 = vpack.c.b16 %v362, %v362
    %v365 = vpack.c.bf16 %v350, %v347
    %v367 = vunpack.c.l.b16 %v365
    %v368 = vunpack.c.h.b16 %v365
    %v369 = vpack.c.b16 %v367, %v367
    %v370 = vpack.c.b16 %v368, %v368
    %v373 = vlaneseq
    %v374 = vshrl.u32 %v373, 7
    %v375 = vsub.s32 0, %v374
    %v376 = vrot.slane %v95, %v375
    %v377 = vlaneseq
    %v378 = vshrl.u32 %v377, 7
    %v379 = vsub.s32 0, %v378
    %v380 = vrot.slane %v96, %v379
    %vm383 = vcmask 64512
    %v385 = vsel %vm383, %v357, 0
    %v388 = vsel %vm383, %v363, 0
    %390 = vmatprep.subr.bf16.mxu0 0
    %391 = vmatpush1.bf16.xpose.msra.mxu0 0
    %392 = vmatprep.subr.bf16.mxu0 0
    %393 = vmatpush1.bf16.xpose.msra.mxu0 0
    %394 = vmatprep.subr.bf16.mxu0 0
    %395 = vmatpush1.bf16.xpose.msra.mxu0 0
    %396 = vmatprep.subr.bf16.mxu0 0
    %397 = vmatpush1.bf16.xpose.msra.mxu0 0
    %398 = vmatprep.subr.bf16.mxu0 0
    %399 = vmatpush1.bf16.xpose.msra.mxu0 0
    %400 = vmatprep.subr.bf16.mxu0 0
    %401 = vmatpush1.bf16.xpose.msra.mxu0 0
    %402 = vmatprep.subr.bf16.mxu0 0
    %403 = vmatpush1.bf16.xpose.msra.mxu0 0
    %404 = vmatprep.subr.bf16.mxu0 0
    %405 = vmatpush1.bf16.xpose.msra.mxu0 %v388
    %406 = vmatprep.subr.bf16.mxu0 0
    %407 = vmatpush2.bf16.xpose.msra.mxu0 0
    %408 = vmatprep.subr.bf16.mxu0 0
    %409 = vmatpush2.bf16.xpose.msra.mxu0 0
    %410 = vmatprep.subr.bf16.mxu0 0
    %411 = vmatpush2.bf16.xpose.msra.mxu0 0
    %412 = vmatprep.subr.bf16.mxu0 0
    %413 = vmatpush2.bf16.xpose.msra.mxu0 0
    %414 = vmatprep.subr.bf16.mxu0 0
    %415 = vmatpush2.bf16.xpose.msra.mxu0 0
    %416 = vmatprep.subr.bf16.mxu0 0
    %417 = vmatpush2.bf16.xpose.msra.mxu0 0
    %418 = vmatprep.subr.bf16.mxu0 0
    %419 = vmatpush2.bf16.xpose.msra.mxu0 0
    %420 = vmatprep.subr.bf16.mxu0 0
    %421 = vmatpush2.bf16.xpose.msra.mxu0 0
    %422 = vmatprep.mubr.bf16.mxu0 0
    %423 = vmatmul.mubr.bf16.gmra.mxu0 %v385
    %v424 = vpop.f32.mrf.mxu0
    %v425 = vadd.f32 %v376, %v424
    %v426 = vpop.f32.mrf.mxu0
    %v427 = vpop.f32.mrf.mxu0
    %v428 = vpop.f32.mrf.mxu0
    %429 = vdwg.mxu0
    %v431 = vsel %vm383, %v358, 0
    %v434 = vsel %vm383, %v364, 0
    %436 = vmatprep.subr.bf16.mxu0 0
    %437 = vmatpush1.bf16.xpose.msra.mxu0 0
    %438 = vmatprep.subr.bf16.mxu0 0
    %439 = vmatpush1.bf16.xpose.msra.mxu0 0
    %440 = vmatprep.subr.bf16.mxu0 0
    %441 = vmatpush1.bf16.xpose.msra.mxu0 0
    %442 = vmatprep.subr.bf16.mxu0 0
    %443 = vmatpush1.bf16.xpose.msra.mxu0 0
    %444 = vmatprep.subr.bf16.mxu0 0
    %445 = vmatpush1.bf16.xpose.msra.mxu0 0
    %446 = vmatprep.subr.bf16.mxu0 0
    %447 = vmatpush1.bf16.xpose.msra.mxu0 0
    %448 = vmatprep.subr.bf16.mxu0 0
    %449 = vmatpush1.bf16.xpose.msra.mxu0 0
    %450 = vmatprep.subr.bf16.mxu0 0
    %451 = vmatpush1.bf16.xpose.msra.mxu0 %v434
    %452 = vmatprep.subr.bf16.mxu0 0
    %453 = vmatpush2.bf16.xpose.msra.mxu0 0
    %454 = vmatprep.subr.bf16.mxu0 0
    %455 = vmatpush2.bf16.xpose.msra.mxu0 0
    %456 = vmatprep.subr.bf16.mxu0 0
    %457 = vmatpush2.bf16.xpose.msra.mxu0 0
    %458 = vmatprep.subr.bf16.mxu0 0
    %459 = vmatpush2.bf16.xpose.msra.mxu0 0
    %460 = vmatprep.subr.bf16.mxu0 0
    %461 = vmatpush2.bf16.xpose.msra.mxu0 0
    %462 = vmatprep.subr.bf16.mxu0 0
    %463 = vmatpush2.bf16.xpose.msra.mxu0 0
    %464 = vmatprep.subr.bf16.mxu0 0
    %465 = vmatpush2.bf16.xpose.msra.mxu0 0
    %466 = vmatprep.subr.bf16.mxu0 0
    %467 = vmatpush2.bf16.xpose.msra.mxu0 0
    %468 = vmatprep.mubr.bf16.mxu0 0
    %469 = vmatmul.mubr.bf16.gmra.mxu0 %v431
    %v470 = vpop.f32.mrf.mxu0
    %v471 = vadd.f32 %v380, %v470
    %v472 = vpop.f32.mrf.mxu0
    %v473 = vpop.f32.mrf.mxu0
    %v474 = vpop.f32.mrf.mxu0
    %475 = vdwg.mxu0
    %v476 = vsel %vm383, %v425, -inf
    %477 = vmax.xlane.f32.xlu0 %v476
    %v478 = vpop.xlane.xlu0 %477
    %v479 = vsel %vm383, %v471, -inf
    %480 = vmax.xlane.f32.xlu0 %v479
    %v481 = vpop.xlane.xlu0 %480
    %v482 = vsub.f32 %v425, %v478
    %v483 = vsub.f32 %v471, %v481
    %v484 = vmul.f32 %v482, 1.442695
    %v485 = vpow.pop %v484
    %v486 = vmul.f32 %v483, 1.442695
    %v487 = vpow.pop %v486
    %v488 = vsel %vm383, %v485, 0.0
    %489 = vadd.xlane.f32.xlu0 %v488
    %v490 = vpop.xlane.xlu0 %489
    %v491 = vsel %vm383, %v487, 0.0
    %492 = vadd.xlane.f32.xlu0 %v491
    %v493 = vpop.xlane.xlu0 %492
    %v494 = vrcp.pop %v490
    %v495 = vrcp.pop %v493
    %v496 = vmul.f32 %v485, %v494
    %v497 = vmul.f32 %v487, %v495
    %v498 = vpack.c.bf16 %v496, %v496
    %v499 = vpack.c.bf16 %v497, %v497
    %v501 = vsel %vm383, %v498, 0
    %vm503 = vcmask 1043456
    %v505 = vsel %vm503, %v369, 0
    %507 = vmatprep.subr.bf16.mxu0 0
    %508 = vmatpush1.bf16.msra.mxu0 0
    %509 = vmatprep.subr.bf16.mxu0 0
    %510 = vmatpush1.bf16.msra.mxu0 0
    %511 = vmatprep.subr.bf16.mxu0 0
    %512 = vmatpush1.bf16.msra.mxu0 0
    %513 = vmatprep.subr.bf16.mxu0 0
    %514 = vmatpush1.bf16.msra.mxu0 0
    %515 = vmatprep.subr.bf16.mxu0 0
    %516 = vmatpush1.bf16.msra.mxu0 0
    %517 = vmatprep.subr.bf16.mxu0 0
    %518 = vmatpush1.bf16.msra.mxu0 0
    %519 = vmatprep.subr.bf16.mxu0 0
    %520 = vmatpush1.bf16.msra.mxu0 0
    %521 = vmatprep.subr.bf16.mxu0 0
    %522 = vmatpush1.bf16.msra.mxu0 %v505
    %523 = vmatprep.subr.bf16.mxu0 0
    %524 = vmatpush2.bf16.msra.mxu0 0
    %525 = vmatprep.subr.bf16.mxu0 0
    %526 = vmatpush2.bf16.msra.mxu0 0
    %527 = vmatprep.subr.bf16.mxu0 0
    %528 = vmatpush2.bf16.msra.mxu0 0
    %529 = vmatprep.subr.bf16.mxu0 0
    %530 = vmatpush2.bf16.msra.mxu0 0
    %531 = vmatprep.subr.bf16.mxu0 0
    %532 = vmatpush2.bf16.msra.mxu0 0
    %533 = vmatprep.subr.bf16.mxu0 0
    %534 = vmatpush2.bf16.msra.mxu0 0
    %535 = vmatprep.subr.bf16.mxu0 0
    %536 = vmatpush2.bf16.msra.mxu0 0
    %537 = vmatprep.subr.bf16.mxu0 0
    %538 = vmatpush2.bf16.msra.mxu0 0
    %539 = vmatprep.mubr.bf16.mxu0 0
    %540 = vmatmul.mubr.bf16.gmra.mxu0 %v501
    %v541 = vpop.f32.mrf.mxu0
    %v542 = vadd.f32 0.0, %v541
    %v543 = vpop.f32.mrf.mxu0
    %v544 = vpop.f32.mrf.mxu0
    %v545 = vpop.f32.mrf.mxu0
    %546 = vdwg.mxu0
    %v548 = vsel %vm383, %v499, 0
    %v551 = vsel %vm503, %v370, 0
    %553 = vmatprep.subr.bf16.mxu0 0
    %554 = vmatpush1.bf16.msra.mxu0 0
    %555 = vmatprep.subr.bf16.mxu0 0
    %556 = vmatpush1.bf16.msra.mxu0 0
    %557 = vmatprep.subr.bf16.mxu0 0
    %558 = vmatpush1.bf16.msra.mxu0 0
    %559 = vmatprep.subr.bf16.mxu0 0
    %560 = vmatpush1.bf16.msra.mxu0 0
    %561 = vmatprep.subr.bf16.mxu0 0
    %562 = vmatpush1.bf16.msra.mxu0 0
    %563 = vmatprep.subr.bf16.mxu0 0
    %564 = vmatpush1.bf16.msra.mxu0 0
    %565 = vmatprep.subr.bf16.mxu0 0
    %566 = vmatpush1.bf16.msra.mxu0 0
    %567 = vmatprep.subr.bf16.mxu0 0
    %568 = vmatpush1.bf16.msra.mxu0 %v551
    %569 = vmatprep.subr.bf16.mxu0 0
    %570 = vmatpush2.bf16.msra.mxu0 0
    %571 = vmatprep.subr.bf16.mxu0 0
    %572 = vmatpush2.bf16.msra.mxu0 0
    %573 = vmatprep.subr.bf16.mxu0 0
    %574 = vmatpush2.bf16.msra.mxu0 0
    %575 = vmatprep.subr.bf16.mxu0 0
    %576 = vmatpush2.bf16.msra.mxu0 0
    %577 = vmatprep.subr.bf16.mxu0 0
    %578 = vmatpush2.bf16.msra.mxu0 0
    %579 = vmatprep.subr.bf16.mxu0 0
    %580 = vmatpush2.bf16.msra.mxu0 0
    %581 = vmatprep.subr.bf16.mxu0 0
    %582 = vmatpush2.bf16.msra.mxu0 0
    %583 = vmatprep.subr.bf16.mxu0 0
    %584 = vmatpush2.bf16.msra.mxu0 0
    %585 = vmatprep.mubr.bf16.mxu0 0
    %586 = vmatmul.mubr.bf16.gmra.mxu0 %v548
    %v587 = vpop.f32.mrf.mxu0
    %v588 = vadd.f32 0.0, %v587
    %v589 = vpop.f32.mrf.mxu0
    %v590 = vpop.f32.mrf.mxu0
    %v591 = vpop.f32.mrf.mxu0
    %592 = vdwg.mxu0
    %v593 = vpack.c.bf16 %v542, %v542
    %v594 = vpack.c.bf16 %v588, %v588
    %595 = vrot.lane.b32.xlu0 %v357, 120
    %v596 = vpop.permute.xlu0 %595
    %597 = vrot.lane.b32.xlu0 %v363, 120
    %v598 = vpop.permute.xlu0 %597
    %v600 = vsel %vm383, %v596, 0
    %v603 = vsel %vm383, %v598, 0
    %605 = vmatprep.subr.bf16.mxu0 0
    %606 = vmatpush1.bf16.xpose.msra.mxu0 0
    %607 = vmatprep.subr.bf16.mxu0 0
    %608 = vmatpush1.bf16.xpose.msra.mxu0 0
    %609 = vmatprep.subr.bf16.mxu0 0
    %610 = vmatpush1.bf16.xpose.msra.mxu0 0
    %611 = vmatprep.subr.bf16.mxu0 0
    %612 = vmatpush1.bf16.xpose.msra.mxu0 0
    %613 = vmatprep.subr.bf16.mxu0 0
    %614 = vmatpush1.bf16.xpose.msra.mxu0 0
    %615 = vmatprep.subr.bf16.mxu0 0
    %616 = vmatpush1.bf16.xpose.msra.mxu0 0
    %617 = vmatprep.subr.bf16.mxu0 0
    %618 = vmatpush1.bf16.xpose.msra.mxu0 0
    %619 = vmatprep.subr.bf16.mxu0 0
    %620 = vmatpush1.bf16.xpose.msra.mxu0 %v603
    %621 = vmatprep.subr.bf16.mxu0 0
    %622 = vmatpush2.bf16.xpose.msra.mxu0 0
    %623 = vmatprep.subr.bf16.mxu0 0
    %624 = vmatpush2.bf16.xpose.msra.mxu0 0
    %625 = vmatprep.subr.bf16.mxu0 0
    %626 = vmatpush2.bf16.xpose.msra.mxu0 0
    %627 = vmatprep.subr.bf16.mxu0 0
    %628 = vmatpush2.bf16.xpose.msra.mxu0 0
    %629 = vmatprep.subr.bf16.mxu0 0
    %630 = vmatpush2.bf16.xpose.msra.mxu0 0
    %631 = vmatprep.subr.bf16.mxu0 0
    %632 = vmatpush2.bf16.xpose.msra.mxu0 0
    %633 = vmatprep.subr.bf16.mxu0 0
    %634 = vmatpush2.bf16.xpose.msra.mxu0 0
    %635 = vmatprep.subr.bf16.mxu0 0
    %636 = vmatpush2.bf16.xpose.msra.mxu0 0
    %637 = vmatprep.mubr.bf16.mxu0 0
    %638 = vmatmul.mubr.bf16.gmra.mxu0 %v600
    %v639 = vpop.f32.mrf.mxu0
    %v640 = vadd.f32 %v376, %v639
    %v641 = vpop.f32.mrf.mxu0
    %v642 = vpop.f32.mrf.mxu0
    %v643 = vpop.f32.mrf.mxu0
    %644 = vdwg.mxu0
    %645 = vrot.lane.b32.xlu0 %v358, 120
    %v646 = vpop.permute.xlu0 %645
    %647 = vrot.lane.b32.xlu0 %v364, 120
    %v648 = vpop.permute.xlu0 %647
    %v650 = vsel %vm383, %v646, 0
    %v653 = vsel %vm383, %v648, 0
    %655 = vmatprep.subr.bf16.mxu0 0
    %656 = vmatpush1.bf16.xpose.msra.mxu0 0
    %657 = vmatprep.subr.bf16.mxu0 0
    %658 = vmatpush1.bf16.xpose.msra.mxu0 0
    %659 = vmatprep.subr.bf16.mxu0 0
    %660 = vmatpush1.bf16.xpose.msra.mxu0 0
    %661 = vmatprep.subr.bf16.mxu0 0
    %662 = vmatpush1.bf16.xpose.msra.mxu0 0
    %663 = vmatprep.subr.bf16.mxu0 0
    %664 = vmatpush1.bf16.xpose.msra.mxu0 0
    %665 = vmatprep.subr.bf16.mxu0 0
    %666 = vmatpush1.bf16.xpose.msra.mxu0 0
    %667 = vmatprep.subr.bf16.mxu0 0
    %668 = vmatpush1.bf16.xpose.msra.mxu0 0
    %669 = vmatprep.subr.bf16.mxu0 0
    %670 = vmatpush1.bf16.xpose.msra.mxu0 %v653
    %671 = vmatprep.subr.bf16.mxu0 0
    %672 = vmatpush2.bf16.xpose.msra.mxu0 0
    %673 = vmatprep.subr.bf16.mxu0 0
    %674 = vmatpush2.bf16.xpose.msra.mxu0 0
    %675 = vmatprep.subr.bf16.mxu0 0
    %676 = vmatpush2.bf16.xpose.msra.mxu0 0
    %677 = vmatprep.subr.bf16.mxu0 0
    %678 = vmatpush2.bf16.xpose.msra.mxu0 0
    %679 = vmatprep.subr.bf16.mxu0 0
    %680 = vmatpush2.bf16.xpose.msra.mxu0 0
    %681 = vmatprep.subr.bf16.mxu0 0
    %682 = vmatpush2.bf16.xpose.msra.mxu0 0
    %683 = vmatprep.subr.bf16.mxu0 0
    %684 = vmatpush2.bf16.xpose.msra.mxu0 0
    %685 = vmatprep.subr.bf16.mxu0 0
    %686 = vmatpush2.bf16.xpose.msra.mxu0 0
    %687 = vmatprep.mubr.bf16.mxu0 0
    %688 = vmatmul.mubr.bf16.gmra.mxu0 %v650
    %v689 = vpop.f32.mrf.mxu0
    %v690 = vadd.f32 %v380, %v689
    %v691 = vpop.f32.mrf.mxu0
    %v692 = vpop.f32.mrf.mxu0
    %v693 = vpop.f32.mrf.mxu0
    %694 = vdwg.mxu0
    %v695 = vsel %vm383, %v640, -inf
    %696 = vmax.xlane.f32.xlu0 %v695
    %v697 = vpop.xlane.xlu0 %696
    %v698 = vsel %vm383, %v690, -inf
    %699 = vmax.xlane.f32.xlu0 %v698
    %v700 = vpop.xlane.xlu0 %699
    %v701 = vsub.f32 %v640, %v697
    %v702 = vsub.f32 %v690, %v700
    %v703 = vmul.f32 %v701, 1.442695
    %v704 = vpow.pop %v703
    %v705 = vmul.f32 %v702, 1.442695
    %v706 = vpow.pop %v705
    %v707 = vsel %vm383, %v704, 0.0
    %708 = vadd.xlane.f32.xlu0 %v707
    %v709 = vpop.xlane.xlu0 %708
    %v710 = vsel %vm383, %v706, 0.0
    %711 = vadd.xlane.f32.xlu0 %v710
    %v712 = vpop.xlane.xlu0 %711
    %v713 = vrcp.pop %v709
    %v714 = vrcp.pop %v712
    %v715 = vmul.f32 %v704, %v713
    %v716 = vmul.f32 %v706, %v714
    %v717 = vpack.c.bf16 %v715, %v715
    %v718 = vpack.c.bf16 %v716, %v716
    %719 = vrot.lane.b32.xlu0 %v369, 120
    %v720 = vpop.permute.xlu0 %719
    %v722 = vsel %vm383, %v717, 0
    %v725 = vsel %vm503, %v720, 0
    %727 = vmatprep.subr.bf16.mxu0 0
    %728 = vmatpush1.bf16.msra.mxu0 0
    %729 = vmatprep.subr.bf16.mxu0 0
    %730 = vmatpush1.bf16.msra.mxu0 0
    %731 = vmatprep.subr.bf16.mxu0 0
    %732 = vmatpush1.bf16.msra.mxu0 0
    %733 = vmatprep.subr.bf16.mxu0 0
    %734 = vmatpush1.bf16.msra.mxu0 0
    %735 = vmatprep.subr.bf16.mxu0 0
    %736 = vmatpush1.bf16.msra.mxu0 0
    %737 = vmatprep.subr.bf16.mxu0 0
    %738 = vmatpush1.bf16.msra.mxu0 0
    %739 = vmatprep.subr.bf16.mxu0 0
    %740 = vmatpush1.bf16.msra.mxu0 0
    %741 = vmatprep.subr.bf16.mxu0 0
    %742 = vmatpush1.bf16.msra.mxu0 %v725
    %743 = vmatprep.subr.bf16.mxu0 0
    %744 = vmatpush2.bf16.msra.mxu0 0
    %745 = vmatprep.subr.bf16.mxu0 0
    %746 = vmatpush2.bf16.msra.mxu0 0
    %747 = vmatprep.subr.bf16.mxu0 0
    %748 = vmatpush2.bf16.msra.mxu0 0
    %749 = vmatprep.subr.bf16.mxu0 0
    %750 = vmatpush2.bf16.msra.mxu0 0
    %751 = vmatprep.subr.bf16.mxu0 0
    %752 = vmatpush2.bf16.msra.mxu0 0
    %753 = vmatprep.subr.bf16.mxu0 0
    %754 = vmatpush2.bf16.msra.mxu0 0
    %755 = vmatprep.subr.bf16.mxu0 0
    %756 = vmatpush2.bf16.msra.mxu0 0
    %757 = vmatprep.subr.bf16.mxu0 0
    %758 = vmatpush2.bf16.msra.mxu0 0
    %759 = vmatprep.mubr.bf16.mxu0 0
    %760 = vmatmul.mubr.bf16.gmra.mxu0 %v722
    %v761 = vpop.f32.mrf.mxu0
    %v762 = vadd.f32 0.0, %v761
    %v763 = vpop.f32.mrf.mxu0
    %v764 = vpop.f32.mrf.mxu0
    %v765 = vpop.f32.mrf.mxu0
    %766 = vdwg.mxu0
    %767 = vrot.lane.b32.xlu0 %v370, 120
    %v768 = vpop.permute.xlu0 %767
    %v770 = vsel %vm383, %v718, 0
    %v773 = vsel %vm503, %v768, 0
    %775 = vmatprep.subr.bf16.mxu0 0
    %776 = vmatpush1.bf16.msra.mxu0 0
    %777 = vmatprep.subr.bf16.mxu0 0
    %778 = vmatpush1.bf16.msra.mxu0 0
    %779 = vmatprep.subr.bf16.mxu0 0
    %780 = vmatpush1.bf16.msra.mxu0 0
    %781 = vmatprep.subr.bf16.mxu0 0
    %782 = vmatpush1.bf16.msra.mxu0 0
    %783 = vmatprep.subr.bf16.mxu0 0
    %784 = vmatpush1.bf16.msra.mxu0 0
    %785 = vmatprep.subr.bf16.mxu0 0
    %786 = vmatpush1.bf16.msra.mxu0 0
    %787 = vmatprep.subr.bf16.mxu0 0
    %788 = vmatpush1.bf16.msra.mxu0 0
    %789 = vmatprep.subr.bf16.mxu0 0
    %790 = vmatpush1.bf16.msra.mxu0 %v773
    %791 = vmatprep.subr.bf16.mxu0 0
    %792 = vmatpush2.bf16.msra.mxu0 0
    %793 = vmatprep.subr.bf16.mxu0 0
    %794 = vmatpush2.bf16.msra.mxu0 0
    %795 = vmatprep.subr.bf16.mxu0 0
    %796 = vmatpush2.bf16.msra.mxu0 0
    %797 = vmatprep.subr.bf16.mxu0 0
    %798 = vmatpush2.bf16.msra.mxu0 0
    %799 = vmatprep.subr.bf16.mxu0 0
    %800 = vmatpush2.bf16.msra.mxu0 0
    %801 = vmatprep.subr.bf16.mxu0 0
    %802 = vmatpush2.bf16.msra.mxu0 0
    %803 = vmatprep.subr.bf16.mxu0 0
    %804 = vmatpush2.bf16.msra.mxu0 0
    %805 = vmatprep.subr.bf16.mxu0 0
    %806 = vmatpush2.bf16.msra.mxu0 0
    %807 = vmatprep.mubr.bf16.mxu0 0
    %808 = vmatmul.mubr.bf16.gmra.mxu0 %v770
    %v809 = vpop.f32.mrf.mxu0
    %v810 = vadd.f32 0.0, %v809
    %v811 = vpop.f32.mrf.mxu0
    %v812 = vpop.f32.mrf.mxu0
    %v813 = vpop.f32.mrf.mxu0
    %814 = vdwg.mxu0
    %v815 = vpack.c.bf16 %v762, %v762
    %v816 = vpack.c.bf16 %v810, %v810
    %817 = vrot.lane.b32.xlu0 %v357, 112
    %v818 = vpop.permute.xlu0 %817
    %819 = vrot.lane.b32.xlu0 %v363, 112
    %v820 = vpop.permute.xlu0 %819
    %v822 = vsel %vm383, %v818, 0
    %v825 = vsel %vm383, %v820, 0
    %827 = vmatprep.subr.bf16.mxu0 0
    %828 = vmatpush1.bf16.xpose.msra.mxu0 0
    %829 = vmatprep.subr.bf16.mxu0 0
    %830 = vmatpush1.bf16.xpose.msra.mxu0 0
    %831 = vmatprep.subr.bf16.mxu0 0
    %832 = vmatpush1.bf16.xpose.msra.mxu0 0
    %833 = vmatprep.subr.bf16.mxu0 0
    %834 = vmatpush1.bf16.xpose.msra.mxu0 0
    %835 = vmatprep.subr.bf16.mxu0 0
    %836 = vmatpush1.bf16.xpose.msra.mxu0 0
    %837 = vmatprep.subr.bf16.mxu0 0
    %838 = vmatpush1.bf16.xpose.msra.mxu0 0
    %839 = vmatprep.subr.bf16.mxu0 0
    %840 = vmatpush1.bf16.xpose.msra.mxu0 0
    %841 = vmatprep.subr.bf16.mxu0 0
    %842 = vmatpush1.bf16.xpose.msra.mxu0 %v825
    %843 = vmatprep.subr.bf16.mxu0 0
    %844 = vmatpush2.bf16.xpose.msra.mxu0 0
    %845 = vmatprep.subr.bf16.mxu0 0
    %846 = vmatpush2.bf16.xpose.msra.mxu0 0
    %847 = vmatprep.subr.bf16.mxu0 0
    %848 = vmatpush2.bf16.xpose.msra.mxu0 0
    %849 = vmatprep.subr.bf16.mxu0 0
    %850 = vmatpush2.bf16.xpose.msra.mxu0 0
    %851 = vmatprep.subr.bf16.mxu0 0
    %852 = vmatpush2.bf16.xpose.msra.mxu0 0
    %853 = vmatprep.subr.bf16.mxu0 0
    %854 = vmatpush2.bf16.xpose.msra.mxu0 0
    %855 = vmatprep.subr.bf16.mxu0 0
    %856 = vmatpush2.bf16.xpose.msra.mxu0 0
    %857 = vmatprep.subr.bf16.mxu0 0
    %858 = vmatpush2.bf16.xpose.msra.mxu0 0
    %859 = vmatprep.mubr.bf16.mxu0 0
    %860 = vmatmul.mubr.bf16.gmra.mxu0 %v822
    %v861 = vpop.f32.mrf.mxu0
    %v862 = vadd.f32 %v376, %v861
    %v863 = vpop.f32.mrf.mxu0
    %v864 = vpop.f32.mrf.mxu0
    %v865 = vpop.f32.mrf.mxu0
    %866 = vdwg.mxu0
    %867 = vrot.lane.b32.xlu0 %v358, 112
    %v868 = vpop.permute.xlu0 %867
    %869 = vrot.lane.b32.xlu0 %v364, 112
    %v870 = vpop.permute.xlu0 %869
    %v872 = vsel %vm383, %v868, 0
    %v875 = vsel %vm383, %v870, 0
    %877 = vmatprep.subr.bf16.mxu0 0
    %878 = vmatpush1.bf16.xpose.msra.mxu0 0
    %879 = vmatprep.subr.bf16.mxu0 0
    %880 = vmatpush1.bf16.xpose.msra.mxu0 0
    %881 = vmatprep.subr.bf16.mxu0 0
    %882 = vmatpush1.bf16.xpose.msra.mxu0 0
    %883 = vmatprep.subr.bf16.mxu0 0
    %884 = vmatpush1.bf16.xpose.msra.mxu0 0
    %885 = vmatprep.subr.bf16.mxu0 0
    %886 = vmatpush1.bf16.xpose.msra.mxu0 0
    %887 = vmatprep.subr.bf16.mxu0 0
    %888 = vmatpush1.bf16.xpose.msra.mxu0 0
    %889 = vmatprep.subr.bf16.mxu0 0
    %890 = vmatpush1.bf16.xpose.msra.mxu0 0
    %891 = vmatprep.subr.bf16.mxu0 0
    %892 = vmatpush1.bf16.xpose.msra.mxu0 %v875
    %893 = vmatprep.subr.bf16.mxu0 0
    %894 = vmatpush2.bf16.xpose.msra.mxu0 0
    %895 = vmatprep.subr.bf16.mxu0 0
    %896 = vmatpush2.bf16.xpose.msra.mxu0 0
    %897 = vmatprep.subr.bf16.mxu0 0
    %898 = vmatpush2.bf16.xpose.msra.mxu0 0
    %899 = vmatprep.subr.bf16.mxu0 0
    %900 = vmatpush2.bf16.xpose.msra.mxu0 0
    %901 = vmatprep.subr.bf16.mxu0 0
    %902 = vmatpush2.bf16.xpose.msra.mxu0 0
    %903 = vmatprep.subr.bf16.mxu0 0
    %904 = vmatpush2.bf16.xpose.msra.mxu0 0
    %905 = vmatprep.subr.bf16.mxu0 0
    %906 = vmatpush2.bf16.xpose.msra.mxu0 0
    %907 = vmatprep.subr.bf16.mxu0 0
    %908 = vmatpush2.bf16.xpose.msra.mxu0 0
    %909 = vmatprep.mubr.bf16.mxu0 0
    %910 = vmatmul.mubr.bf16.gmra.mxu0 %v872
    %v911 = vpop.f32.mrf.mxu0
    %v912 = vadd.f32 %v380, %v911
    %v913 = vpop.f32.mrf.mxu0
    %v914 = vpop.f32.mrf.mxu0
    %v915 = vpop.f32.mrf.mxu0
    %916 = vdwg.mxu0
    %v917 = vsel %vm383, %v862, -inf
    %918 = vmax.xlane.f32.xlu0 %v917
    %v919 = vpop.xlane.xlu0 %918
    %v920 = vsel %vm383, %v912, -inf
    %921 = vmax.xlane.f32.xlu0 %v920
    %v922 = vpop.xlane.xlu0 %921
    %v923 = vsub.f32 %v862, %v919
    %v924 = vsub.f32 %v912, %v922
    %v925 = vmul.f32 %v923, 1.442695
    %v926 = vpow.pop %v925
    %v927 = vmul.f32 %v924, 1.442695
    %v928 = vpow.pop %v927
    %v929 = vsel %vm383, %v926, 0.0
    %930 = vadd.xlane.f32.xlu0 %v929
    %v931 = vpop.xlane.xlu0 %930
    %v932 = vsel %vm383, %v928, 0.0
    %933 = vadd.xlane.f32.xlu0 %v932
    %v934 = vpop.xlane.xlu0 %933
    %v935 = vrcp.pop %v931
    %v936 = vrcp.pop %v934
    %v937 = vmul.f32 %v926, %v935
    %v938 = vmul.f32 %v928, %v936
    %v939 = vpack.c.bf16 %v937, %v937
    %v940 = vpack.c.bf16 %v938, %v938
    %941 = vrot.lane.b32.xlu0 %v369, 112
    %v942 = vpop.permute.xlu0 %941
    %v944 = vsel %vm383, %v939, 0
    %v947 = vsel %vm503, %v942, 0
    %949 = vmatprep.subr.bf16.mxu0 0
    %950 = vmatpush1.bf16.msra.mxu0 0
    %951 = vmatprep.subr.bf16.mxu0 0
    %952 = vmatpush1.bf16.msra.mxu0 0
    %953 = vmatprep.subr.bf16.mxu0 0
    %954 = vmatpush1.bf16.msra.mxu0 0
    %955 = vmatprep.subr.bf16.mxu0 0
    %956 = vmatpush1.bf16.msra.mxu0 0
    %957 = vmatprep.subr.bf16.mxu0 0
    %958 = vmatpush1.bf16.msra.mxu0 0
    %959 = vmatprep.subr.bf16.mxu0 0
    %960 = vmatpush1.bf16.msra.mxu0 0
    %961 = vmatprep.subr.bf16.mxu0 0
    %962 = vmatpush1.bf16.msra.mxu0 0
    %963 = vmatprep.subr.bf16.mxu0 0
    %964 = vmatpush1.bf16.msra.mxu0 %v947
    %965 = vmatprep.subr.bf16.mxu0 0
    %966 = vmatpush2.bf16.msra.mxu0 0
    %967 = vmatprep.subr.bf16.mxu0 0
    %968 = vmatpush2.bf16.msra.mxu0 0
    %969 = vmatprep.subr.bf16.mxu0 0
    %970 = vmatpush2.bf16.msra.mxu0 0
    %971 = vmatprep.subr.bf16.mxu0 0
    %972 = vmatpush2.bf16.msra.mxu0 0
    %973 = vmatprep.subr.bf16.mxu0 0
    %974 = vmatpush2.bf16.msra.mxu0 0
    %975 = vmatprep.subr.bf16.mxu0 0
    %976 = vmatpush2.bf16.msra.mxu0 0
    %977 = vmatprep.subr.bf16.mxu0 0
    %978 = vmatpush2.bf16.msra.mxu0 0
    %979 = vmatprep.subr.bf16.mxu0 0
    %980 = vmatpush2.bf16.msra.mxu0 0
    %981 = vmatprep.mubr.bf16.mxu0 0
    %982 = vmatmul.mubr.bf16.gmra.mxu0 %v944
    %v983 = vpop.f32.mrf.mxu0
    %v984 = vadd.f32 0.0, %v983
    %v985 = vpop.f32.mrf.mxu0
    %v986 = vpop.f32.mrf.mxu0
    %v987 = vpop.f32.mrf.mxu0
    %988 = vdwg.mxu0
    %989 = vrot.lane.b32.xlu0 %v370, 112
    %v990 = vpop.permute.xlu0 %989
    %v992 = vsel %vm383, %v940, 0
    %v995 = vsel %vm503, %v990, 0
    %997 = vmatprep.subr.bf16.mxu0 0
    %998 = vmatpush1.bf16.msra.mxu0 0
    %999 = vmatprep.subr.bf16.mxu0 0
    %1000 = vmatpush1.bf16.msra.mxu0 0
    %1001 = vmatprep.subr.bf16.mxu0 0
    %1002 = vmatpush1.bf16.msra.mxu0 0
    %1003 = vmatprep.subr.bf16.mxu0 0
    %1004 = vmatpush1.bf16.msra.mxu0 0
    %1005 = vmatprep.subr.bf16.mxu0 0
    %1006 = vmatpush1.bf16.msra.mxu0 0
    %1007 = vmatprep.subr.bf16.mxu0 0
    %1008 = vmatpush1.bf16.msra.mxu0 0
    %1009 = vmatprep.subr.bf16.mxu0 0
    %1010 = vmatpush1.bf16.msra.mxu0 0
    %1011 = vmatprep.subr.bf16.mxu0 0
    %1012 = vmatpush1.bf16.msra.mxu0 %v995
    %1013 = vmatprep.subr.bf16.mxu0 0
    %1014 = vmatpush2.bf16.msra.mxu0 0
    %1015 = vmatprep.subr.bf16.mxu0 0
    %1016 = vmatpush2.bf16.msra.mxu0 0
    %1017 = vmatprep.subr.bf16.mxu0 0
    %1018 = vmatpush2.bf16.msra.mxu0 0
    %1019 = vmatprep.subr.bf16.mxu0 0
    %1020 = vmatpush2.bf16.msra.mxu0 0
    %1021 = vmatprep.subr.bf16.mxu0 0
    %1022 = vmatpush2.bf16.msra.mxu0 0
    %1023 = vmatprep.subr.bf16.mxu0 0
    %1024 = vmatpush2.bf16.msra.mxu0 0
    %1025 = vmatprep.subr.bf16.mxu0 0
    %1026 = vmatpush2.bf16.msra.mxu0 0
    %1027 = vmatprep.subr.bf16.mxu0 0
    %1028 = vmatpush2.bf16.msra.mxu0 0
    %1029 = vmatprep.mubr.bf16.mxu0 0
    %1030 = vmatmul.mubr.bf16.gmra.mxu0 %v992
    %v1031 = vpop.f32.mrf.mxu0
    %v1032 = vadd.f32 0.0, %v1031
    %v1033 = vpop.f32.mrf.mxu0
    %v1034 = vpop.f32.mrf.mxu0
    %v1035 = vpop.f32.mrf.mxu0
    %1036 = vdwg.mxu0
    %v1037 = vpack.c.bf16 %v984, %v984
    %v1038 = vpack.c.bf16 %v1032, %v1032
    %1039 = vrot.lane.b32.xlu0 %v357, 104
    %v1040 = vpop.permute.xlu0 %1039
    %1041 = vrot.lane.b32.xlu0 %v363, 104
    %v1042 = vpop.permute.xlu0 %1041
    %v1044 = vsel %vm383, %v1040, 0
    %v1047 = vsel %vm383, %v1042, 0
    %1049 = vmatprep.subr.bf16.mxu0 0
    %1050 = vmatpush1.bf16.xpose.msra.mxu0 0
    %1051 = vmatprep.subr.bf16.mxu0 0
    %1052 = vmatpush1.bf16.xpose.msra.mxu0 0
    %1053 = vmatprep.subr.bf16.mxu0 0
    %1054 = vmatpush1.bf16.xpose.msra.mxu0 0
    %1055 = vmatprep.subr.bf16.mxu0 0
    %1056 = vmatpush1.bf16.xpose.msra.mxu0 0
    %1057 = vmatprep.subr.bf16.mxu0 0
    %1058 = vmatpush1.bf16.xpose.msra.mxu0 0
    %1059 = vmatprep.subr.bf16.mxu0 0
    %1060 = vmatpush1.bf16.xpose.msra.mxu0 0
    %1061 = vmatprep.subr.bf16.mxu0 0
    %1062 = vmatpush1.bf16.xpose.msra.mxu0 0
    %1063 = vmatprep.subr.bf16.mxu0 0
    %1064 = vmatpush1.bf16.xpose.msra.mxu0 %v1047
    %1065 = vmatprep.subr.bf16.mxu0 0
    %1066 = vmatpush2.bf16.xpose.msra.mxu0 0
    %1067 = vmatprep.subr.bf16.mxu0 0
    %1068 = vmatpush2.bf16.xpose.msra.mxu0 0
    %1069 = vmatprep.subr.bf16.mxu0 0
    %1070 = vmatpush2.bf16.xpose.msra.mxu0 0
    %1071 = vmatprep.subr.bf16.mxu0 0
    %1072 = vmatpush2.bf16.xpose.msra.mxu0 0
    %1073 = vmatprep.subr.bf16.mxu0 0
    %1074 = vmatpush2.bf16.xpose.msra.mxu0 0
    %1075 = vmatprep.subr.bf16.mxu0 0
    %1076 = vmatpush2.bf16.xpose.msra.mxu0 0
    %1077 = vmatprep.subr.bf16.mxu0 0
    %1078 = vmatpush2.bf16.xpose.msra.mxu0 0
    %1079 = vmatprep.subr.bf16.mxu0 0
    %1080 = vmatpush2.bf16.xpose.msra.mxu0 0
    %1081 = vmatprep.mubr.bf16.mxu0 0
    %1082 = vmatmul.mubr.bf16.gmra.mxu0 %v1044
    %v1083 = vpop.f32.mrf.mxu0
    %v1084 = vadd.f32 %v376, %v1083
    %v1085 = vpop.f32.mrf.mxu0
    %v1086 = vpop.f32.mrf.mxu0
    %v1087 = vpop.f32.mrf.mxu0
    %1088 = vdwg.mxu0
    %1089 = vrot.lane.b32.xlu0 %v358, 104
    %v1090 = vpop.permute.xlu0 %1089
    %1091 = vrot.lane.b32.xlu0 %v364, 104
    %v1092 = vpop.permute.xlu0 %1091
    %v1094 = vsel %vm383, %v1090, 0
    %v1097 = vsel %vm383, %v1092, 0
    %1099 = vmatprep.subr.bf16.mxu0 0
    %1100 = vmatpush1.bf16.xpose.msra.mxu0 0
    %1101 = vmatprep.subr.bf16.mxu0 0
    %1102 = vmatpush1.bf16.xpose.msra.mxu0 0
    %1103 = vmatprep.subr.bf16.mxu0 0
    %1104 = vmatpush1.bf16.xpose.msra.mxu0 0
    %1105 = vmatprep.subr.bf16.mxu0 0
    %1106 = vmatpush1.bf16.xpose.msra.mxu0 0
    %1107 = vmatprep.subr.bf16.mxu0 0
    %1108 = vmatpush1.bf16.xpose.msra.mxu0 0
    %1109 = vmatprep.subr.bf16.mxu0 0
    %1110 = vmatpush1.bf16.xpose.msra.mxu0 0
    %1111 = vmatprep.subr.bf16.mxu0 0
    %1112 = vmatpush1.bf16.xpose.msra.mxu0 0
    %1113 = vmatprep.subr.bf16.mxu0 0
    %1114 = vmatpush1.bf16.xpose.msra.mxu0 %v1097
    %1115 = vmatprep.subr.bf16.mxu0 0
    %1116 = vmatpush2.bf16.xpose.msra.mxu0 0
    %1117 = vmatprep.subr.bf16.mxu0 0
    %1118 = vmatpush2.bf16.xpose.msra.mxu0 0
    %1119 = vmatprep.subr.bf16.mxu0 0
    %1120 = vmatpush2.bf16.xpose.msra.mxu0 0
    %1121 = vmatprep.subr.bf16.mxu0 0
    %1122 = vmatpush2.bf16.xpose.msra.mxu0 0
    %1123 = vmatprep.subr.bf16.mxu0 0
    %1124 = vmatpush2.bf16.xpose.msra.mxu0 0
    %1125 = vmatprep.subr.bf16.mxu0 0
    %1126 = vmatpush2.bf16.xpose.msra.mxu0 0
    %1127 = vmatprep.subr.bf16.mxu0 0
    %1128 = vmatpush2.bf16.xpose.msra.mxu0 0
    %1129 = vmatprep.subr.bf16.mxu0 0
    %1130 = vmatpush2.bf16.xpose.msra.mxu0 0
    %1131 = vmatprep.mubr.bf16.mxu0 0
    %1132 = vmatmul.mubr.bf16.gmra.mxu0 %v1094
    %v1133 = vpop.f32.mrf.mxu0
    %v1134 = vadd.f32 %v380, %v1133
    %v1135 = vpop.f32.mrf.mxu0
    %v1136 = vpop.f32.mrf.mxu0
    %v1137 = vpop.f32.mrf.mxu0
    %1138 = vdwg.mxu0
    %v1139 = vsel %vm383, %v1084, -inf
    %1140 = vmax.xlane.f32.xlu0 %v1139
    %v1141 = vpop.xlane.xlu0 %1140
    %v1142 = vsel %vm383, %v1134, -inf
    %1143 = vmax.xlane.f32.xlu0 %v1142
    %v1144 = vpop.xlane.xlu0 %1143
    %v1145 = vsub.f32 %v1084, %v1141
    %v1146 = vsub.f32 %v1134, %v1144
    %v1147 = vmul.f32 %v1145, 1.442695
    %v1148 = vpow.pop %v1147
    %v1149 = vmul.f32 %v1146, 1.442695
    %v1150 = vpow.pop %v1149
    %v1151 = vsel %vm383, %v1148, 0.0
    %1152 = vadd.xlane.f32.xlu0 %v1151
    %v1153 = vpop.xlane.xlu0 %1152
    %v1154 = vsel %vm383, %v1150, 0.0
    %1155 = vadd.xlane.f32.xlu0 %v1154
    %v1156 = vpop.xlane.xlu0 %1155
    %v1157 = vrcp.pop %v1153
    %v1158 = vrcp.pop %v1156
    %v1159 = vmul.f32 %v1148, %v1157
    %v1160 = vmul.f32 %v1150, %v1158
    %v1161 = vpack.c.bf16 %v1159, %v1159
    %v1162 = vpack.c.bf16 %v1160, %v1160
    %1163 = vrot.lane.b32.xlu0 %v369, 104
    %v1164 = vpop.permute.xlu0 %1163
    %v1166 = vsel %vm383, %v1161, 0
    %v1169 = vsel %vm503, %v1164, 0
    %1171 = vmatprep.subr.bf16.mxu0 0
    %1172 = vmatpush1.bf16.msra.mxu0 0
    %1173 = vmatprep.subr.bf16.mxu0 0
    %1174 = vmatpush1.bf16.msra.mxu0 0
    %1175 = vmatprep.subr.bf16.mxu0 0
    %1176 = vmatpush1.bf16.msra.mxu0 0
    %1177 = vmatprep.subr.bf16.mxu0 0
    %1178 = vmatpush1.bf16.msra.mxu0 0
    %1179 = vmatprep.subr.bf16.mxu0 0
    %1180 = vmatpush1.bf16.msra.mxu0 0
    %1181 = vmatprep.subr.bf16.mxu0 0
    %1182 = vmatpush1.bf16.msra.mxu0 0
    %1183 = vmatprep.subr.bf16.mxu0 0
    %1184 = vmatpush1.bf16.msra.mxu0 0
    %1185 = vmatprep.subr.bf16.mxu0 0
    %1186 = vmatpush1.bf16.msra.mxu0 %v1169
    %1187 = vmatprep.subr.bf16.mxu0 0
    %1188 = vmatpush2.bf16.msra.mxu0 0
    %1189 = vmatprep.subr.bf16.mxu0 0
    %1190 = vmatpush2.bf16.msra.mxu0 0
    %1191 = vmatprep.subr.bf16.mxu0 0
    %1192 = vmatpush2.bf16.msra.mxu0 0
    %1193 = vmatprep.subr.bf16.mxu0 0
    %1194 = vmatpush2.bf16.msra.mxu0 0
    %1195 = vmatprep.subr.bf16.mxu0 0
    %1196 = vmatpush2.bf16.msra.mxu0 0
    %1197 = vmatprep.subr.bf16.mxu0 0
    %1198 = vmatpush2.bf16.msra.mxu0 0
    %1199 = vmatprep.subr.bf16.mxu0 0
    %1200 = vmatpush2.bf16.msra.mxu0 0
    %1201 = vmatprep.subr.bf16.mxu0 0
    %1202 = vmatpush2.bf16.msra.mxu0 0
    %1203 = vmatprep.mubr.bf16.mxu0 0
    %1204 = vmatmul.mubr.bf16.gmra.mxu0 %v1166
    %v1205 = vpop.f32.mrf.mxu0
    %v1206 = vadd.f32 0.0, %v1205
    %v1207 = vpop.f32.mrf.mxu0
    %v1208 = vpop.f32.mrf.mxu0
    %v1209 = vpop.f32.mrf.mxu0
    %1210 = vdwg.mxu0
    %1211 = vrot.lane.b32.xlu0 %v370, 104
    %v1212 = vpop.permute.xlu0 %1211
    %v1214 = vsel %vm383, %v1162, 0
    %v1217 = vsel %vm503, %v1212, 0
    %1219 = vmatprep.subr.bf16.mxu0 0
    %1220 = vmatpush1.bf16.msra.mxu0 0
    %1221 = vmatprep.subr.bf16.mxu0 0
    %1222 = vmatpush1.bf16.msra.mxu0 0
    %1223 = vmatprep.subr.bf16.mxu0 0
    %1224 = vmatpush1.bf16.msra.mxu0 0
    %1225 = vmatprep.subr.bf16.mxu0 0
    %1226 = vmatpush1.bf16.msra.mxu0 0
    %1227 = vmatprep.subr.bf16.mxu0 0
    %1228 = vmatpush1.bf16.msra.mxu0 0
    %1229 = vmatprep.subr.bf16.mxu0 0
    %1230 = vmatpush1.bf16.msra.mxu0 0
    %1231 = vmatprep.subr.bf16.mxu0 0
    %1232 = vmatpush1.bf16.msra.mxu0 0
    %1233 = vmatprep.subr.bf16.mxu0 0
    %1234 = vmatpush1.bf16.msra.mxu0 %v1217
    %1235 = vmatprep.subr.bf16.mxu0 0
    %1236 = vmatpush2.bf16.msra.mxu0 0
    %1237 = vmatprep.subr.bf16.mxu0 0
    %1238 = vmatpush2.bf16.msra.mxu0 0
    %1239 = vmatprep.subr.bf16.mxu0 0
    %1240 = vmatpush2.bf16.msra.mxu0 0
    %1241 = vmatprep.subr.bf16.mxu0 0
    %1242 = vmatpush2.bf16.msra.mxu0 0
    %1243 = vmatprep.subr.bf16.mxu0 0
    %1244 = vmatpush2.bf16.msra.mxu0 0
    %1245 = vmatprep.subr.bf16.mxu0 0
    %1246 = vmatpush2.bf16.msra.mxu0 0
    %1247 = vmatprep.subr.bf16.mxu0 0
    %1248 = vmatpush2.bf16.msra.mxu0 0
    %1249 = vmatprep.subr.bf16.mxu0 0
    %1250 = vmatpush2.bf16.msra.mxu0 0
    %1251 = vmatprep.mubr.bf16.mxu0 0
    %1252 = vmatmul.mubr.bf16.gmra.mxu0 %v1214
    %v1253 = vpop.f32.mrf.mxu0
    %v1254 = vadd.f32 0.0, %v1253
    %v1255 = vpop.f32.mrf.mxu0
    %v1256 = vpop.f32.mrf.mxu0
    %v1257 = vpop.f32.mrf.mxu0
    %1258 = vdwg.mxu0
    %v1259 = vpack.c.bf16 %v1206, %v1206
    %v1260 = vpack.c.bf16 %v1254, %v1254
    %1263 = vrot.lane.b32.xlu0 %v815, 8
    %v1264 = vpop.permute.xlu0 %1263
    %1265 = vrot.lane.b32.xlu0 %v816, 8
    %v1266 = vpop.permute.xlu0 %1265
    %1269 = vrot.lane.b32.xlu0 %v1037, 16
    %v1270 = vpop.permute.xlu0 %1269
    %1271 = vrot.lane.b32.xlu0 %v1038, 16
    %v1272 = vpop.permute.xlu0 %1271
    %1275 = vrot.lane.b32.xlu0 %v1259, 24
    %v1276 = vpop.permute.xlu0 %1275
    %1277 = vrot.lane.b32.xlu0 %v1260, 24
    %v1278 = vpop.permute.xlu0 %1277
    %v1281 = vsel %vm383, %v593, %v1264
    %v1284 = vsel %vm383, %v594, %v1266
    %vm1285 = vcmask 130048
    %v1287 = vsel %vm1285, %v1281, %v1270
    %v1289 = vsel %vm1285, %v1284, %v1272
    %vm1290 = vcmask 195584
    %v1292 = vsel %vm1290, %v1287, %v1276
    %v1294 = vsel %vm1290, %v1289, %v1278
    %v1295 = vld [vmem:[%s10] sm:$0xf]
    %v1296 = vld [vmem:[%s10 + $0x4] sm:$0xf]
    %v1297 = vld [vmem:[%s10 + $0x8] sm:$0xf]
    %v1298 = vld [vmem:[%s10 + $0xc] sm:$0xf]
    %v1299 = vld [vmem:[%s11] sm:$0x1]
    %v1301 = vlaneseq
    %v1302 = vshrl.u32 %v1301, 7
    %v1303 = vsub.s32 0, %v1302
    %v1304 = vrot.slane %v1299, %v1303
    %v1308 = vunpack.c.l.b16 %v1292
    %v1309 = vunpack.c.l.b16 %v1294
    %v1310 = vpack.c.b16 %v1309, %v1308
    %v1315 = vunpack.c.l.b16 %v1295
    %v1316 = vunpack.c.l.b16 %v1296
    %v1317 = vunpack.c.l.b16 %v1297
    %v1318 = vunpack.c.l.b16 %v1298
    %v1319 = vpack.c.b16 %v1316, %v1315
    %v1320 = vpack.c.b16 %v1318, %v1317
    %v1324 = vsel %vm99, %v1310, 0
    %1326 = vmatprep.subr.bf16.mxu0 0
    %1327 = vmatpush1.bf16.msra.mxu0 0
    %1328 = vmatprep.subr.bf16.mxu0 0
    %1329 = vmatpush1.bf16.msra.mxu0 0
    %1330 = vmatprep.subr.bf16.mxu0 0
    %1331 = vmatpush1.bf16.msra.mxu0 0
    %1332 = vmatprep.subr.bf16.mxu0 0
    %1333 = vmatpush1.bf16.msra.mxu0 0
    %1334 = vmatprep.subr.bf16.mxu0 0
    %1335 = vmatpush1.bf16.msra.mxu0 0
    %1336 = vmatprep.subr.bf16.mxu0 0
    %1337 = vmatpush1.bf16.msra.mxu0 0
    %1338 = vmatprep.subr.bf16.mxu0 0
    %1339 = vmatpush1.bf16.msra.mxu0 %v1320
    %1340 = vmatprep.subr.bf16.mxu0 0
    %1341 = vmatpush1.bf16.msra.mxu0 %v1319
    %1342 = vmatprep.subr.bf16.mxu0 0
    %1343 = vmatpush2.bf16.msra.mxu0 0
    %1344 = vmatprep.subr.bf16.mxu0 0
    %1345 = vmatpush2.bf16.msra.mxu0 0
    %1346 = vmatprep.subr.bf16.mxu0 0
    %1347 = vmatpush2.bf16.msra.mxu0 0
    %1348 = vmatprep.subr.bf16.mxu0 0
    %1349 = vmatpush2.bf16.msra.mxu0 0
    %1350 = vmatprep.subr.bf16.mxu0 0
    %1351 = vmatpush2.bf16.msra.mxu0 0
    %1352 = vmatprep.subr.bf16.mxu0 0
    %1353 = vmatpush2.bf16.msra.mxu0 0
    %1354 = vmatprep.subr.bf16.mxu0 0
    %1355 = vmatpush2.bf16.msra.mxu0 0
    %1356 = vmatprep.subr.bf16.mxu0 0
    %1357 = vmatpush2.bf16.msra.mxu0 0
    %1358 = vmatprep.mubr.bf16.mxu0 0
    %1359 = vmatmul.mubr.bf16.gmra.mxu0 %v1324
    %v1360 = vpop.f32.mrf.mxu0
    %v1361 = vadd.f32 %v1304, %v1360
    %v1362 = vpop.f32.mrf.mxu0
    %v1363 = vpop.f32.mrf.mxu0
    %v1364 = vadd.f32 %v1304, %v1363
    %v1365 = vpop.f32.mrf.mxu0
    %1366 = vdwg.mxu0
    %v1367 = vadd.f32 %v89, %v1361
    %v1368 = vadd.f32 %v90, %v1364
    %v1369 = vld [vmem:[%s12] sm:$0x1]
    %v1370 = vld [vmem:[%s13] sm:$0x1]
    %v1371 = vsel %vm99, %v1367, 0.0
    %1372 = vadd.xlane.f32.xlu0 %v1371
    %v1373 = vpop.xlane.xlu0 %1372
    %v1374 = vsel %vm99, %v1368, 0.0
    %1375 = vadd.xlane.f32.xlu0 %v1374
    %v1376 = vpop.xlane.xlu0 %1375
    %v1377 = vmul.f32 %v1373, %v106
    %v1378 = vmul.f32 %v1376, %v106
    %v1379 = vsub.f32 %v1367, %v1377
    %v1380 = vsub.f32 %v1368, %v1378
    %v1381 = vmul.f32 %v1379, %v1379
    %v1382 = vmul.f32 %v1380, %v1380
    %v1383 = vsel %vm99, %v1381, 0.0
    %1384 = vadd.xlane.f32.xlu0 %v1383
    %v1385 = vpop.xlane.xlu0 %1384
    %v1386 = vsel %vm99, %v1382, 0.0
    %1387 = vadd.xlane.f32.xlu0 %v1386
    %v1388 = vpop.xlane.xlu0 %1387
    %v1389 = vmul.f32 %v1385, 0.032258064
    %v1390 = vmul.f32 %v1388, 0.032258064
    %v1392 = vlaneseq
    %v1393 = vshrl.u32 %v1392, 7
    %v1394 = vsub.s32 0, %v1393
    %v1395 = vrot.slane %v1369, %v1394
    %v1397 = vmul.f32 %v1395, %v1379
    %v1398 = vmul.f32 %v1395, %v1380
    %v1399 = vrsqrt.pop %v1389
    %v1400 = vmul.f32 %v1389, %v1399
    %vm1401 = vcmp.eq.f32.partialorder %v1389, inf
    %v1402 = vsel %vm1401, %v1389, %v1400
    %vm1403 = vcmp.eq.f32.partialorder %v1389, 0.0
    %v1404 = vand.u32 %v1389, 2147483648
    %v1405 = vsel %vm1403, %v1404, %v1402
    %v1406 = vrsqrt.pop %v1390
    %v1407 = vmul.f32 %v1390, %v1406
    %vm1408 = vcmp.eq.f32.partialorder %v1390, inf
    %v1409 = vsel %vm1408, %v1390, %v1407
    %vm1410 = vcmp.eq.f32.partialorder %v1390, 0.0
    %v1411 = vand.u32 %v1390, 2147483648
    %v1412 = vsel %vm1410, %v1411, %v1409
    %v1413 = vadd.f32 %v1405, 1e-06
    %v1414 = vadd.f32 %v1412, 1e-06
    %v1415 = vrcp.pop %v1413
    %v1416 = vmul.f32 %v1397, %v1415
    %v1417 = vrcp.pop %v1414
    %v1418 = vmul.f32 %v1398, %v1417
    %v1420 = vlaneseq
    %v1421 = vshrl.u32 %v1420, 7
    %v1422 = vsub.s32 0, %v1421
    %v1423 = vrot.slane %v1370, %v1422
    %v1425 = vadd.f32 %v1416, %v1423
    %v1426 = vadd.f32 %v1418, %v1423
    %v1427 = vpack.c.bf16 %v1426, %v1425
    %v1428 = vld [vmem:[#allocation5] sm:$0xf]
    %v1429 = vld [vmem:[#allocation5 + $0x4] sm:$0xf]
    %v1430 = vld [vmem:[#allocation5 + $0x8] sm:$0xf]
    %v1431 = vld [vmem:[#allocation5 + $0xc] sm:$0xf]
    %v1432 = vld [vmem:[%s15] sm:$0x1]
    %v1434 = vlaneseq
    %v1435 = vshrl.u32 %v1434, 7
    %v1436 = vsub.s32 0, %v1435
    %v1437 = vrot.slane %v1432, %v1436
    %v1443 = vunpack.c.l.b16 %v1428
    %v1444 = vunpack.c.l.b16 %v1429
    %v1445 = vunpack.c.l.b16 %v1430
    %v1446 = vunpack.c.l.b16 %v1431
    %v1447 = vpack.c.b16 %v1444, %v1443
    %v1448 = vpack.c.b16 %v1446, %v1445
    %v1452 = vsel %vm99, %v1427, 0
    %1454 = vmatprep.subr.bf16.mxu0 0
    %1455 = vmatpush1.bf16.msra.mxu0 0
    %1456 = vmatprep.subr.bf16.mxu0 0
    %1457 = vmatpush1.bf16.msra.mxu0 0
    %1458 = vmatprep.subr.bf16.mxu0 0
    %1459 = vmatpush1.bf16.msra.mxu0 0
    %1460 = vmatprep.subr.bf16.mxu0 0
    %1461 = vmatpush1.bf16.msra.mxu0 0
    %1462 = vmatprep.subr.bf16.mxu0 0
    %1463 = vmatpush1.bf16.msra.mxu0 0
    %1464 = vmatprep.subr.bf16.mxu0 0
    %1465 = vmatpush1.bf16.msra.mxu0 0
    %1466 = vmatprep.subr.bf16.mxu0 0
    %1467 = vmatpush1.bf16.msra.mxu0 %v1448
    %1468 = vmatprep.subr.bf16.mxu0 0
    %1469 = vmatpush1.bf16.msra.mxu0 %v1447
    %1470 = vmatprep.subr.bf16.mxu0 0
    %1471 = vmatpush2.bf16.msra.mxu0 0
    %1472 = vmatprep.subr.bf16.mxu0 0
    %1473 = vmatpush2.bf16.msra.mxu0 0
    %1474 = vmatprep.subr.bf16.mxu0 0
    %1475 = vmatpush2.bf16.msra.mxu0 0
    %1476 = vmatprep.subr.bf16.mxu0 0
    %1477 = vmatpush2.bf16.msra.mxu0 0
    %1478 = vmatprep.subr.bf16.mxu0 0
    %1479 = vmatpush2.bf16.msra.mxu0 0
    %1480 = vmatprep.subr.bf16.mxu0 0
    %1481 = vmatpush2.bf16.msra.mxu0 0
    %1482 = vmatprep.subr.bf16.mxu0 0
    %1483 = vmatpush2.bf16.msra.mxu0 0
    %1484 = vmatprep.subr.bf16.mxu0 0
    %1485 = vmatpush2.bf16.msra.mxu0 0
    %1486 = vmatprep.mubr.bf16.mxu0 0
    %1487 = vmatmul.mubr.bf16.gmra.mxu0 %v1452
    %v1488 = vpop.f32.mrf.mxu0
    %v1489 = vadd.f32 %v1437, %v1488
    %v1490 = vpop.f32.mrf.mxu0
    %v1491 = vpop.f32.mrf.mxu0
    %v1492 = vadd.f32 %v1437, %v1491
    %v1493 = vpop.f32.mrf.mxu0
    %1494 = vdwg.mxu0
    %v1495 = vmax.f32 %v1489, 0.0
    %v1496 = vmax.f32 %v1492, 0.0
    %v1497 = vpack.c.bf16 %v1496, %v1495
    %v1498 = vld [vmem:[%s16] sm:$0xf]
    %v1499 = vld [vmem:[%s16 + $0x4] sm:$0xf]
    %v1500 = vld [vmem:[%s16 + $0x8] sm:$0xf]
    %v1501 = vld [vmem:[%s16 + $0xc] sm:$0xf]
    %v1502 = vld [vmem:[%s16 + $0x10] sm:$0xf]
    %v1503 = vld [vmem:[%s16 + $0x14] sm:$0xf]
    %v1504 = vld [vmem:[%s16 + $0x18] sm:$0xf]
    %v1505 = vld [vmem:[%s16 + $0x1c] sm:$0xf]
    %v1506 = vld [vmem:[%s16 + $0x20] sm:$0xf]
    %v1507 = vld [vmem:[%s16 + $0x24] sm:$0xf]
    %v1508 = vld [vmem:[%s16 + $0x28] sm:$0xf]
    %v1509 = vld [vmem:[%s16 + $0x2c] sm:$0xf]
    %v1510 = vld [vmem:[%s16 + $0x30] sm:$0xf]
    %v1511 = vld [vmem:[%s16 + $0x34] sm:$0xf]
    %v1512 = vld [vmem:[%s16 + $0x38] sm:$0xf]
    %v1513 = vld [vmem:[%s16 + $0x3c] sm:$0xf]
    %v1514 = vld [vmem:[%s17] sm:$0x1]
    %v1516 = vlaneseq
    %v1517 = vshrl.u32 %v1516, 7
    %v1518 = vsub.s32 0, %v1517
    %v1519 = vrot.slane %v1514, %v1518
    %v1537 = vunpack.c.l.b16 %v1498
    %v1538 = vunpack.c.l.b16 %v1499
    %v1539 = vunpack.c.l.b16 %v1500
    %v1540 = vunpack.c.l.b16 %v1501
    %v1541 = vunpack.c.l.b16 %v1502
    %v1542 = vunpack.c.l.b16 %v1503
    %v1543 = vunpack.c.l.b16 %v1504
    %v1544 = vunpack.c.l.b16 %v1505
    %v1545 = vunpack.c.l.b16 %v1506
    %v1546 = vunpack.c.l.b16 %v1507
    %v1547 = vunpack.c.l.b16 %v1508
    %v1548 = vunpack.c.l.b16 %v1509
    %v1549 = vunpack.c.l.b16 %v1510
    %v1550 = vunpack.c.l.b16 %v1511
    %v1551 = vunpack.c.l.b16 %v1512
    %v1552 = vunpack.c.l.b16 %v1513
    %v1553 = vpack.c.b16 %v1538, %v1537
    %v1554 = vpack.c.b16 %v1540, %v1539
    %v1555 = vpack.c.b16 %v1542, %v1541
    %v1556 = vpack.c.b16 %v1544, %v1543
    %v1557 = vpack.c.b16 %v1546, %v1545
    %v1558 = vpack.c.b16 %v1548, %v1547
    %v1559 = vpack.c.b16 %v1550, %v1549
    %v1560 = vpack.c.b16 %v1552, %v1551
    %1569 = vmatprep.subr.bf16.mxu0 0
    %1570 = vmatpush1.bf16.msra.mxu0 %v1560
    %1571 = vmatprep.subr.bf16.mxu0 0
    %1572 = vmatpush1.bf16.msra.mxu0 %v1559
    %1573 = vmatprep.subr.bf16.mxu0 0
    %1574 = vmatpush1.bf16.msra.mxu0 %v1558
    %1575 = vmatprep.subr.bf16.mxu0 0
    %1576 = vmatpush1.bf16.msra.mxu0 %v1557
    %1577 = vmatprep.subr.bf16.mxu0 0
    %1578 = vmatpush1.bf16.msra.mxu0 %v1556
    %1579 = vmatprep.subr.bf16.mxu0 0
    %1580 = vmatpush1.bf16.msra.mxu0 %v1555
    %1581 = vmatprep.subr.bf16.mxu0 0
    %1582 = vmatpush1.bf16.msra.mxu0 %v1554
    %1583 = vmatprep.subr.bf16.mxu0 0
    %1584 = vmatpush1.bf16.msra.mxu0 %v1553
    %1585 = vmatprep.subr.bf16.mxu0 0
    %1586 = vmatpush2.bf16.msra.mxu0 0
    %1587 = vmatprep.subr.bf16.mxu0 0
    %1588 = vmatpush2.bf16.msra.mxu0 0
    %1589 = vmatprep.subr.bf16.mxu0 0
    %1590 = vmatpush2.bf16.msra.mxu0 0
    %1591 = vmatprep.subr.bf16.mxu0 0
    %1592 = vmatpush2.bf16.msra.mxu0 0
    %1593 = vmatprep.subr.bf16.mxu0 0
    %1594 = vmatpush2.bf16.msra.mxu0 0
    %1595 = vmatprep.subr.bf16.mxu0 0
    %1596 = vmatpush2.bf16.msra.mxu0 0
    %1597 = vmatprep.subr.bf16.mxu0 0
    %1598 = vmatpush2.bf16.msra.mxu0 0
    %1599 = vmatprep.subr.bf16.mxu0 0
    %1600 = vmatpush2.bf16.msra.mxu0 0
    %1601 = vmatprep.mubr.bf16.mxu0 0
    %1602 = vmatmul.mubr.bf16.gmra.mxu0 %v1497
    %v1603 = vpop.f32.mrf.mxu0
    %v1604 = vadd.f32 %v1519, %v1603
    %v1605 = vpop.f32.mrf.mxu0
    %v1606 = vpop.f32.mrf.mxu0
    %v1607 = vadd.f32 %v1519, %v1606
    %v1608 = vpop.f32.mrf.mxu0
    %1609 = vdwg.mxu0
    %v1610 = vadd.f32 %v1367, %v1604
    %v1611 = vadd.f32 %v1368, %v1607
    %1612 = vst.msk [vmem:[#allocation7] sm:$0xff] %vm99, %v1610
    %1613 = vst.msk [vmem:[#allocation7 + $0x8] sm:$0xff] %vm99, %v1611
    // Predicated region
    $region82: #{tpu_custom_call.1} parent=1 // pred_check
      _
    $region83: #{tpu_custom_call.1} parent=1 // pred_check_branch
      %1615 = sbr.rel (0) target = $region85
    $region84: #{tpu_custom_call.1} parent=1 // pred_region
      %s1617 = ssub.s32 256, 256
      %1618 = vsyncadd [#allocation4], %s1617
      %s1619 = sshll.u32 [#allocation7], 4
      %s1620 = int_to_ptr.vmem [resolvable:$true] %s1619
      %1625 = dma.vmem_to_hbm [thread:$0]  %s1620, 256, %s18, [#allocation4], 128, 128, 8
    $region85: #{tpu_custom_call.1} parent=1 // pred_fallthru
      _
    // Predicated region
    $region86: #{tpu_custom_call.1} parent=1 // pred_check
      _
    $region87: #{tpu_custom_call.1} parent=1 // pred_check_branch
      %1627 = sbr.rel (0) target = $region89
    $region88: #{tpu_custom_call.1} parent=1 // pred_region
      %1628 = dma.done [#allocation4], 256
    $region89: #{tpu_custom_call.1} parent=1 // pred_fallthru
      _
    %1629 = vsyncpa [#allocation3], 1
    %1630 = vsyncpa [#allocation6], 1
    %1631 = vsyncpa [#allocation4], 1

</llo_original>
